<compile_context>
chip_gen: v7x
topology: tpu7x:2x2x1
jax: 0.10.0
libtpu: 0.0.40
codegen_flags: <defaults>
</compile_context>

<pallas_src>
import functools

import jax
import jax.numpy as jnp
from jax.experimental import pallas as pl
from jax.experimental.pallas import tpu as pltpu

_NEG_BIG = -1e30   # "no relu" floor value


# ----------------------------- Pallas kernels ------------------------------

def _mm_kernel(a_ref, w_ref, bias_ref, floor_ref, o_ref):
    """o = max(A @ W + bias, floor).  floor==0 -> relu column, -1e30 -> identity."""
    acc = jnp.dot(a_ref[...], w_ref[...], preferred_element_type=jnp.float32)
    o_ref[...] = jnp.maximum(acc + bias_ref[...], floor_ref[...]).astype(o_ref.dtype)


def _mm_res_kernel(a_ref, w_ref, bias_ref, floor_ref, res_ref, o_ref):
    """Same as _mm_kernel with a fused residual add (identity-shortcut path)."""
    acc = jnp.dot(a_ref[...], w_ref[...], preferred_element_type=jnp.float32)
    acc = acc + bias_ref[...] + res_ref[...]
    o_ref[...] = jnp.maximum(acc, floor_ref[...]).astype(o_ref.dtype)


def _pick_tm(m, target=256):
    """M tile: multiple of 8 and >= 2 grid steps when possible (v7x has 2 TCs)."""
    if m <= 8:
        return m
    tm = min(target, m)
    if m % tm != 0 or m // tm < 2:
        tm = max(8, (((m + 1) // 2 + 7) // 8) * 8)
    return tm


def fused_matmul(a, w, bias, floor, residual=None, tm=None):
    """(M, K) @ (K, N) + bias, then max(., floor) [+ residual].  bf16 MXU, f32 acc."""
    m, k = a.shape
    n = w.shape[1]
    tm = _pick_tm(m) if tm is None else tm
    grid_m = pl.cdiv(m, tm)
    mp = grid_m * tm
    if mp != m:                              # only when M is not a tm multiple
        a = jnp.pad(a, ((0, mp - m), (0, 0)))
        if residual is not None:
            residual = jnp.pad(residual, ((0, mp - m), (0, 0)))

    a = a.astype(jnp.bfloat16)
    w = w.astype(jnp.bfloat16)
    bias = bias.reshape(1, n).astype(jnp.float32)
    floor = floor.reshape(1, n).astype(jnp.float32)

    in_specs = [
        pl.BlockSpec((tm, k), lambda i: (i, 0)),
        pl.BlockSpec((k, n), lambda i: (0, 0)),     # weights stay VMEM-resident
        pl.BlockSpec((1, n), lambda i: (0, 0)),
        pl.BlockSpec((1, n), lambda i: (0, 0)),
    ]
    operands = [a, w, bias, floor]
    kernel = _mm_kernel
    if residual is not None:
        in_specs.append(pl.BlockSpec((tm, n), lambda i: (i, 0)))
        operands.append(residual.astype(jnp.float32))
        kernel = _mm_res_kernel

    out = pl.pallas_call(
        kernel,
        out_shape=jax.ShapeDtypeStruct((mp, n), jnp.float32),
        grid=(grid_m,),
        in_specs=in_specs,
        out_specs=pl.BlockSpec((tm, n), lambda i: (i, 0)),
        compiler_params=pltpu.CompilerParams(dimension_semantics=("parallel",)),
    )(*operands)
    return out[:m] if mp != m else out


def _make_attention_kernel(n_heads):
    def kernel(q_ref, kt_ref, v_ref, gw_ref, gh_ref, ew_ref, eh_ref,
               wp_ref, pb_ref, o_ref):
        q_all = q_ref[0]        # (Nh, HW, dkh)  bf16, q pre-scaled by dkh**-0.5
        kt_all = kt_ref[0]      # (Nh, dkh, HW)  bf16
        v_all = v_ref[0]        # (Nh, HW, dvh)  bf16
        gw_all = gw_ref[0]      # (Nh, HW, W)    f32  gathered rel-width logits
        gh_all = gh_ref[0]      # (Nh, HW, H)    f32  gathered rel-height logits
        ew = ew_ref[...]        # (W, HW) 0/1: expands kw index to flat (kh,kw)
        eh = eh_ref[...]        # (H, HW) 0/1: expands kh index to flat (kh,kw)
        wp_all = wp_ref[...]    # (Nh, dvh, dv)  bf16 attn-out 1x1 (bn2 folded)

        hw = q_all.shape[1]
        dvh = v_all.shape[-1]
        dv = wp_all.shape[-1]
        acc = jnp.zeros((hw, dv), jnp.float32)
        for n in range(n_heads):                    # static unroll over heads
            logits = jnp.dot(q_all[n], kt_all[n],
                             preferred_element_type=jnp.float32)
            # expand the compact relative logits to the dense key axis in-regs
            logits = logits + jnp.dot(gw_all[n], ew,
                                      preferred_element_type=jnp.float32)
            logits = logits + jnp.dot(gh_all[n], eh,
                                      preferred_element_type=jnp.float32)
            m = jnp.max(logits, axis=-1, keepdims=True)
            p = jnp.exp(logits - m)
            wts = p * pl.reciprocal(jnp.sum(p, axis=-1, keepdims=True),
                                    approx=True)
            attn = jnp.dot(wts.astype(v_all.dtype), v_all[n],
                           preferred_element_type=jnp.float32)       # (HW, dvh)
            # fused attn-out 1x1 projection: tiny K, done as VPU outer products
            wp_n = wp_all[n].astype(jnp.float32)                     # (dvh, dv)
            for j in range(dvh):
                acc = acc + attn[:, j:j + 1] * wp_n[j:j + 1, :]
        # fused projection bias + bn2 shift + relu
        o_ref[0] = jnp.maximum(acc + pb_ref[...], 0.0)
    return kernel


def multihead_attention_block(q, kt, v, gw, gh, ew, eh, wp, pbias, n_heads):
    """One grid step per batch; all heads batched; returns relu(bn2(attn_out))."""
    B, _, HW, dkh = q.shape
    dvh = v.shape[-1]
    Wk = gw.shape[-1]
    Hk = gh.shape[-1]
    dv = wp.shape[-1]
    return pl.pallas_call(
        _make_attention_kernel(n_heads),
        out_shape=jax.ShapeDtypeStruct((B, HW, dv), jnp.float32),
        grid=(B,),
        in_specs=[
            pl.BlockSpec((1, n_heads, HW, dkh), lambda b: (b, 0, 0, 0)),
            pl.BlockSpec((1, n_heads, dkh, HW), lambda b: (b, 0, 0, 0)),
            pl.BlockSpec((1, n_heads, HW, dvh), lambda b: (b, 0, 0, 0)),
            pl.BlockSpec((1, n_heads, HW, Wk), lambda b: (b, 0, 0, 0)),
            pl.BlockSpec((1, n_heads, HW, Hk), lambda b: (b, 0, 0, 0)),
            pl.BlockSpec((Wk, HW), lambda b: (0, 0)),
            pl.BlockSpec((Hk, HW), lambda b: (0, 0)),
            pl.BlockSpec((n_heads, dvh, dv), lambda b: (0, 0, 0)),
            pl.BlockSpec((1, dv), lambda b: (0, 0)),
        ],
        out_specs=pl.BlockSpec((1, HW, dv), lambda b: (b, 0, 0)),
        compiler_params=pltpu.CompilerParams(dimension_semantics=("parallel",)),
    )(q, kt, v, gw, gh, ew, eh, wp, pbias)


# ------------------------------ JAX glue ops --------------------------------

def _im2col3x3(x_nhwc, stride=1):
    """3x3, pad=1 patch extraction -> (B*Hout*Wout, 9*C).

    TODO(synk): at real resnet resolutions, replace this materialization with a
    K-axis grid over the 9 taps feeding the matmul's reduction (pattern P3).
    """
    B, H, W, C = x_nhwc.shape
    xp = jnp.pad(x_nhwc, ((0, 0), (1, 1), (1, 1), (0, 0)))
    Hout = (H + 2 - 3) // stride + 1
    Wout = (W + 2 - 3) // stride + 1
    cols = []
    for kh in range(3):
        for kw in range(3):
            cols.append(xp[:, kh:kh + stride * Hout:stride,
                           kw:kw + stride * Wout:stride, :])
    patches = jnp.concatenate(cols, axis=-1)              # (B,Hout,Wout,9*C)
    return patches.reshape(B * Hout * Wout, 9 * C), Hout, Wout


def aa_wide_basic_forward(x_nchw, params, *, Nh, dk, dv, stride):
    x = jnp.transpose(x_nchw, (0, 2, 3, 1)).astype(jnp.float32)   # NCHW -> NHWC
    B, H, W, Cin = x.shape
    dkh, dvh = dk // Nh, dv // Nh
    HW = H * W

    planes = params['conv2_w'].shape[0]
    conv_ch = planes - dv
    s1, t1 = params['bn1_scale'], params['bn1_shift']
    s2, t2 = params['bn2_scale'], params['bn2_shift']

    # ---- stage 1: fused [3x3 conv branch | qkv 1x1] lane-dense matmul ----
    # bn1+relu applied pre-pad/pre-gather (cannot be a raw-patch prologue).
    h1 = jnp.maximum(x * s1 + t1, 0.0).astype(jnp.bfloat16)
    patches1, _, _ = _im2col3x3(h1, stride=1)                     # (M, 9*Cin) bf16

    conv_wt = jnp.transpose(params['conv_w'], (2, 3, 1, 0)).reshape(9 * Cin, conv_ch)
    conv_wt = conv_wt * s2[:conv_ch][None, :]                     # fold bn2 scale
    conv_b = params['conv_b'] * s2[:conv_ch] + t2[:conv_ch]       # fold bn2 shift
    nqkv = 2 * dk + dv
    qkv_wt = jnp.zeros((9 * Cin, nqkv), jnp.float32)              # centre tap only
    qkv_wt = qkv_wt.at[4 * Cin:5 * Cin, :].set(params['qkv_w'].reshape(nqkv, Cin).T)
    qscale = jnp.concatenate([jnp.full((dk,), dkh ** -0.5, jnp.float32),
                              jnp.ones((dk + dv,), jnp.float32)])
    qkv_wt = qkv_wt * qscale[None, :]                             # fold q scaling
    qkv_b = params['qkv_b'] * qscale

    n_raw = conv_ch + nqkv
    n_pad = (-n_raw) % 128                                        # lane-dense N
    w1 = jnp.concatenate([conv_wt, qkv_wt,
                          jnp.zeros((9 * Cin, n_pad), jnp.float32)], axis=1)
    b1 = jnp.concatenate([conv_b, qkv_b, jnp.zeros((n_pad,), jnp.float32)])
    f1 = jnp.concatenate([jnp.zeros((conv_ch,), jnp.float32),      # relu(bn2(conv))
                          jnp.full((nqkv + n_pad,), _NEG_BIG, jnp.float32)])
    y1 = fused_matmul(patches1, w1, b1, f1)                        # (M, 128k) f32

    conv_act = y1[:, :conv_ch]                       # already relu(bn2(conv_out))
    q = y1[:, conv_ch:conv_ch + dk]                  # already scaled by dkh**-0.5
    k = y1[:, conv_ch + dk:conv_ch + 2 * dk]
    v = y1[:, conv_ch + 2 * dk:conv_ch + 2 * dk + dv]

    # ---- stage 2 (JAX glue): head split + compact relative-position logits ----
    def heads(t, d):
        return t.reshape(B, H, W, Nh, d).transpose(0, 3, 1, 2, 4)  # (B,Nh,H,W,d)

    q5 = heads(q, dkh)
    # TODO(synk): the relative-offset gather of key_rel_{w,h} stays in JAX glue;
    # the expansion to the dense (HW, HW) bias happens inside the Pallas kernel.
    idx_w = jnp.arange(W)[None, :] - jnp.arange(W)[:, None] + (W - 1)   # [qw, kw]
    idx_h = jnp.arange(H)[None, :] - jnp.arange(H)[:, None] + (H - 1)   # [qh, kh]
    rw = params['key_rel_w'][idx_w]                                # (W, W, dkh)
    rh = params['key_rel_h'][idx_h]                                # (H, H, dkh)
    gw = jnp.einsum('bnhwd,wkd->bnhwk', q5, rw).reshape(B, Nh, HW, W)
    gh = jnp.einsum('bnhwd,hkd->bnhwk', q5, rh).reshape(B, Nh, HW, H)

    qf = q5.reshape(B, Nh, HW, dkh).astype(jnp.bfloat16)
    ktf = heads(k, dkh).reshape(B, Nh, HW, dkh).transpose(0, 1, 3, 2).astype(jnp.bfloat16)
    vf = heads(v, dvh).reshape(B, Nh, HW, dvh).astype(jnp.bfloat16)

    # 0/1 expansion matrices (compact rel logits -> dense key axis, in-kernel)
    ew = jnp.tile(jnp.eye(W, dtype=jnp.float32), (1, H))           # [kw, kh*W+kw]
    eh = jnp.repeat(jnp.eye(H, dtype=jnp.float32), W, axis=1)      # [kh, kh*W+kw]

    # attn-out 1x1 projection per head, bn2 folded into weights/bias
    wp_full = params['attn_w'].reshape(dv, dv).T                   # (in, out)
    wp = (wp_full * s2[conv_ch:][None, :]).reshape(Nh, dvh, dv).astype(jnp.bfloat16)
    pb = (params['attn_b'] * s2[conv_ch:] + t2[conv_ch:]).reshape(1, dv)

    attn_act = multihead_attention_block(qf, ktf, vf, gw, gh, ew, eh, wp, pb, Nh)
    # attn_act: (B, HW, dv) = relu(bn2(attn branch)); dropout = identity (eval)

    # ---- stage 3: fused [conv2 3x3 | 1x1 shortcut] matmul (+ residual) ----
    h2 = jnp.concatenate([conv_act.reshape(B, H, W, conv_ch),
                          attn_act.reshape(B, H, W, dv)], axis=-1)  # relu(bn2(out))
    patches2, Hout, Wout = _im2col3x3(h2.astype(jnp.bfloat16), stride=stride)
    conv2_wt = jnp.transpose(params['conv2_w'], (2, 3, 1, 0)).reshape(9 * planes, planes)
    f2 = jnp.full((planes,), _NEG_BIG, jnp.float32)                # no relu at end

    if 'short_w' in params:
        xs = x[:, ::stride, ::stride, :].reshape(B * Hout * Wout, Cin)
        a2 = jnp.concatenate([patches2, xs.astype(jnp.bfloat16)], axis=-1)
        w2 = jnp.concatenate([conv2_wt,
                              params['short_w'].reshape(planes, Cin).T], axis=0)
        b2 = params['conv2_b'] + params['short_b']
        out = fused_matmul(a2, w2, b2, f2)
    else:   # identity shortcut: residual add fused into the matmul epilogue
        res = x[:, ::stride, ::stride, :].reshape(B * Hout * Wout, planes)
        out = fused_matmul(patches2, conv2_wt, params['conv2_b'], f2, residual=res)

    y = out.reshape(B, Hout, Wout, planes)
    return jnp.transpose(y, (0, 3, 1, 2))                          # back to NCHW


# ------------------------------ parameter init ------------------------------

def init_params(key, in_planes, planes, Nh, dk, dv, fh, fw, need_shortcut):
    keys = iter(jax.random.split(key, 32))

    def nrm(shape, scale=0.05):
        return scale * jax.random.normal(next(keys), shape, jnp.float32)

    dkh = dk // Nh
    conv_out_ch = planes - dv
    eps = 1e-5
    p = {}

    gamma1 = 1.0 + 0.1 * jax.random.normal(next(keys), (in_planes,), jnp.float32)
    beta1 = 0.1 * jax.random.normal(next(keys), (in_planes,), jnp.float32)
    mean1 = 0.1 * jax.random.normal(next(keys), (in_planes,), jnp.float32)
    var1 = 1.0 + 0.1 * jax.random.uniform(next(keys), (in_planes,), jnp.float32)
    s1 = gamma1 / jnp.sqrt(var1 + eps)
    p['bn1_scale'], p['bn1_shift'] = s1, beta1 - mean1 * s1

    p['conv_w'] = nrm((conv_out_ch, in_planes, 3, 3))
    p['conv_b'] = nrm((conv_out_ch,))
    p['qkv_w'] = nrm((2 * dk + dv, in_planes, 1, 1))
    p['qkv_b'] = nrm((2 * dk + dv,))
    p['attn_w'] = nrm((dv, dv, 1, 1))
    p['attn_b'] = nrm((dv,))
    p['key_rel_w'] = nrm((2 * fw - 1, dkh), 0.1)
    p['key_rel_h'] = nrm((2 * fh - 1, dkh), 0.1)

    gamma2 = 1.0 + 0.1 * jax.random.normal(next(keys), (planes,), jnp.float32)
    beta2 = 0.1 * jax.random.normal(next(keys), (planes,), jnp.float32)
    mean2 = 0.1 * jax.random.normal(next(keys), (planes,), jnp.float32)
    var2 = 1.0 + 0.1 * jax.random.uniform(next(keys), (planes,), jnp.float32)
    s2 = gamma2 / jnp.sqrt(var2 + eps)
    p['bn2_scale'], p['bn2_shift'] = s2, beta2 - mean2 * s2

    p['conv2_w'] = nrm((planes, planes, 3, 3))
    p['conv2_b'] = nrm((planes,))

    if need_shortcut:
        p['short_w'] = nrm((planes, in_planes, 1, 1))
        p['short_b'] = nrm((planes,))
    return p


# ----------------------------------- main ------------------------------------

if __name__ == "__main__":
    B, in_planes, H, W = 2, 8, 8, 8
    planes, Nh, stride = 40, 2, 1
    k_frac, v_frac = 0.2, 0.1
    fh = fw = H

    # Same dk/dv rule as the PyTorch __init__.
    dk = 20 * Nh if int(k_frac * planes) < 20 * Nh else int(k_frac * planes)
    dv = int(v_frac * planes)
    assert dk % Nh == 0 and dv % Nh == 0

    key = jax.random.PRNGKey(0)
    pkey, xkey = jax.random.split(key)
    need_shortcut = (stride != 1) or (in_planes != planes)
    params = init_params(pkey, in_planes, planes, Nh, dk, dv, fh, fw, need_shortcut)

    x = jax.random.normal(xkey, (B, in_planes, H, W), jnp.float32)

    fwd = jax.jit(functools.partial(aa_wide_basic_forward,
                                    Nh=Nh, dk=dk, dv=dv, stride=stride))
    y = fwd(x, params)
    jax.block_until_ready(y)
    assert y.shape == (B, planes, (H - 1) // stride + 1, (W - 1) // stride + 1)
    assert bool(jnp.all(jnp.isfinite(y)))
    print("KERNEL_OK")
</pallas_src>

<mosaic_0001>
module attributes {stable_mosaic.version = 11 : i64} {
  func.func @_mm_kernel(%arg0: i32, %arg1: memref<64x72xbf16, #tpu.memory_space<vmem>>, %arg2: memref<72x128xbf16, #tpu.memory_space<vmem>>, %arg3: memref<1x128xf32, #tpu.memory_space<vmem>>, %arg4: memref<1x128xf32, #tpu.memory_space<vmem>>, %arg5: memref<64x128xf32, #tpu.memory_space<vmem>>) attributes {dimension_semantics = [#tpu.dimension_semantics<parallel>], iteration_bounds = array<i64: 2>, scalar_prefetch = 0 : i64, scratch_operands = 0 : i64, tpu.core_type = #tpu.core_type<tc>, window_params = [{transform_indices = @transform_0, window_bounds = array<i64: 64, 72>}, {pipeline_mode = #tpu.pipeline_mode<synchronous>, transform_indices = @transform_1, window_bounds = array<i64: 72, 128>}, {pipeline_mode = #tpu.pipeline_mode<synchronous>, transform_indices = @transform_2, window_bounds = array<i64: 1, 128>}, {pipeline_mode = #tpu.pipeline_mode<synchronous>, transform_indices = @transform_3, window_bounds = array<i64: 1, 128>}, {transform_indices = @transform_4, window_bounds = array<i64: 64, 128>}]} {
    %c0 = arith.constant 0 : index
    %c0_0 = arith.constant 0 : index
    %0 = vector.load %arg1[%c0, %c0_0] : memref<64x72xbf16, #tpu.memory_space<vmem>>, vector<64x72xbf16>
    %c0_1 = arith.constant 0 : index
    %c0_2 = arith.constant 0 : index
    %1 = vector.load %arg2[%c0_1, %c0_2] : memref<72x128xbf16, #tpu.memory_space<vmem>>, vector<72x128xbf16>
    %cst = arith.constant dense<0.000000e+00> : vector<64x128xf32>
    %2 = tpu.matmul %0, %1, %cst {dimension_numbers = #tpu.dot_dimension_numbers<[1], [0], [0], [1], [0, 0, 1, 1], [], []>} : vector<64x72xbf16>, vector<72x128xbf16>, vector<64x128xf32> -> vector<64x128xf32>
    %c0_3 = arith.constant 0 : index
    %c0_4 = arith.constant 0 : index
    %3 = vector.load %arg3[%c0_3, %c0_4] : memref<1x128xf32, #tpu.memory_space<vmem>>, vector<1x128xf32>
    %4 = vector.broadcast %3 : vector<1x128xf32> to vector<64x128xf32>
    %5 = arith.addf %2, %4 : vector<64x128xf32>
    %c0_5 = arith.constant 0 : index
    %c0_6 = arith.constant 0 : index
    %6 = vector.load %arg4[%c0_5, %c0_6] : memref<1x128xf32, #tpu.memory_space<vmem>>, vector<1x128xf32>
    %7 = vector.broadcast %6 : vector<1x128xf32> to vector<64x128xf32>
    %8 = arith.maximumf %5, %7 : vector<64x128xf32>
    %c0_7 = arith.constant 0 : index
    %c0_8 = arith.constant 0 : index
    %9 = vector.load %arg5[%c0_7, %c0_8] : memref<64x128xf32, #tpu.memory_space<vmem>>, vector<64x128xf32>
    tpu.vector_store %arg5[%c0_7, %c0_8], %8 {strides = array<i32>} : memref<64x128xf32, #tpu.memory_space<vmem>>, vector<64x128xf32>,
    return
  }
  func.func @transform_0(%arg0: i32) -> (i32, i32) {
    %c0_i32 = arith.constant 0 : i32
    %c0_i32_0 = arith.constant 0 : i32
    return %arg0, %c0_i32 : i32, i32
  }
  func.func @transform_1(%arg0: i32) -> (i32, i32) {
    %c0_i32 = arith.constant 0 : i32
    %c0_i32_0 = arith.constant 0 : i32
    %c0_i32_1 = arith.constant 0 : i32
    return %c0_i32, %c0_i32_0 : i32, i32
  }
  func.func @transform_2(%arg0: i32) -> (i32, i32) {
    %c0_i32 = arith.constant 0 : i32
    %c0_i32_0 = arith.constant 0 : i32
    %c0_i32_1 = arith.constant 0 : i32
    return %c0_i32, %c0_i32_0 : i32, i32
  }
  func.func @transform_3(%arg0: i32) -> (i32, i32) {
    %c0_i32 = arith.constant 0 : i32
    %c0_i32_0 = arith.constant 0 : i32
    %c0_i32_1 = arith.constant 0 : i32
    return %c0_i32, %c0_i32_0 : i32, i32
  }
  func.func @transform_4(%arg0: i32) -> (i32, i32) {
    %c0_i32 = arith.constant 0 : i32
    %c0_i32_0 = arith.constant 0 : i32
    return %arg0, %c0_i32 : i32, i32
  }
}

module attributes {stable_mosaic.version = 11 : i64} {
  func.func @kernel(%arg0: i32, %arg1: memref<1x2x64x20xbf16, #tpu.memory_space<vmem>>, %arg2: memref<1x2x20x64xbf16, #tpu.memory_space<vmem>>, %arg3: memref<1x2x64x2xbf16, #tpu.memory_space<vmem>>, %arg4: memref<1x2x64x8xf32, #tpu.memory_space<vmem>>, %arg5: memref<1x2x64x8xf32, #tpu.memory_space<vmem>>, %arg6: memref<8x64xf32, #tpu.memory_space<vmem>>, %arg7: memref<8x64xf32, #tpu.memory_space<vmem>>, %arg8: memref<2x2x4xbf16, #tpu.memory_space<vmem>>, %arg9: memref<1x4xf32, #tpu.memory_space<vmem>>, %arg10: memref<1x64x4xf32, #tpu.memory_space<vmem>>) attributes {dimension_semantics = [#tpu.dimension_semantics<parallel>], iteration_bounds = array<i64: 2>, scalar_prefetch = 0 : i64, scratch_operands = 0 : i64, tpu.core_type = #tpu.core_type<tc>, window_params = [{transform_indices = @transform_0, window_bounds = array<i64: 1, 2, 64, 20>}, {transform_indices = @transform_1, window_bounds = array<i64: 1, 2, 20, 64>}, {transform_indices = @transform_2, window_bounds = array<i64: 1, 2, 64, 2>}, {transform_indices = @transform_3, window_bounds = array<i64: 1, 2, 64, 8>}, {transform_indices = @transform_4, window_bounds = array<i64: 1, 2, 64, 8>}, {pipeline_mode = #tpu.pipeline_mode<synchronous>, transform_indices = @transform_5, window_bounds = array<i64: 8, 64>}, {pipeline_mode = #tpu.pipeline_mode<synchronous>, transform_indices = @transform_6, window_bounds = array<i64: 8, 64>}, {pipeline_mode = #tpu.pipeline_mode<synchronous>, transform_indices = @transform_7, window_bounds = array<i64: 2, 2, 4>}, {pipeline_mode = #tpu.pipeline_mode<synchronous>, transform_indices = @transform_8, window_bounds = array<i64: 1, 4>}, {transform_indices = @transform_9, window_bounds = array<i64: 1, 64, 4>}]} {
    %c0 = arith.constant 0 : index
    %c0_0 = arith.constant 0 : index
    %c0_1 = arith.constant 0 : index
    %c0_2 = arith.constant 0 : index
    %0 = vector.load %arg1[%c0, %c0_0, %c0_1, %c0_2] : memref<1x2x64x20xbf16, #tpu.memory_space<vmem>>, vector<1x2x64x20xbf16>
    %1 = vector.shape_cast %0 : vector<1x2x64x20xbf16> to vector<2x64x20xbf16>
    %c0_3 = arith.constant 0 : index
    %c0_4 = arith.constant 0 : index
    %c0_5 = arith.constant 0 : index
    %c0_6 = arith.constant 0 : index
    %2 = vector.load %arg2[%c0_3, %c0_4, %c0_5, %c0_6] : memref<1x2x20x64xbf16, #tpu.memory_space<vmem>>, vector<1x2x20x64xbf16>
    %3 = vector.shape_cast %2 : vector<1x2x20x64xbf16> to vector<2x20x64xbf16>
    %c0_7 = arith.constant 0 : index
    %c0_8 = arith.constant 0 : index
    %c0_9 = arith.constant 0 : index
    %c0_10 = arith.constant 0 : index
    %4 = vector.load %arg3[%c0_7, %c0_8, %c0_9, %c0_10] : memref<1x2x64x2xbf16, #tpu.memory_space<vmem>>, vector<1x2x64x2xbf16>
    %5 = vector.shape_cast %4 : vector<1x2x64x2xbf16> to vector<2x64x2xbf16>
    %c0_11 = arith.constant 0 : index
    %c0_12 = arith.constant 0 : index
    %c0_13 = arith.constant 0 : index
    %c0_14 = arith.constant 0 : index
    %6 = vector.load %arg4[%c0_11, %c0_12, %c0_13, %c0_14] : memref<1x2x64x8xf32, #tpu.memory_space<vmem>>, vector<1x2x64x8xf32>
    %7 = vector.shape_cast %6 : vector<1x2x64x8xf32> to vector<2x64x8xf32>
    %c0_15 = arith.constant 0 : index
    %c0_16 = arith.constant 0 : index
    %c0_17 = arith.constant 0 : index
    %c0_18 = arith.constant 0 : index
    %8 = vector.load %arg5[%c0_15, %c0_16, %c0_17, %c0_18] : memref<1x2x64x8xf32, #tpu.memory_space<vmem>>, vector<1x2x64x8xf32>
    %9 = vector.shape_cast %8 : vector<1x2x64x8xf32> to vector<2x64x8xf32>
    %c0_19 = arith.constant 0 : index
    %c0_20 = arith.constant 0 : index
    %10 = vector.load %arg6[%c0_19, %c0_20] : memref<8x64xf32, #tpu.memory_space<vmem>>, vector<8x64xf32>
    %c0_21 = arith.constant 0 : index
    %c0_22 = arith.constant 0 : index
    %11 = vector.load %arg7[%c0_21, %c0_22] : memref<8x64xf32, #tpu.memory_space<vmem>>, vector<8x64xf32>
    %c0_23 = arith.constant 0 : index
    %c0_24 = arith.constant 0 : index
    %c0_25 = arith.constant 0 : index
    %12 = vector.load %arg8[%c0_23, %c0_24, %c0_25] : memref<2x2x4xbf16, #tpu.memory_space<vmem>>, vector<2x2x4xbf16>
    %cst = arith.constant 0.000000e+00 : f32
    %13 = vector.broadcast %cst : f32 to vector<64x4xf32>
    %14 = vector.extract_strided_slice %1 {offsets = [0, 0, 0], sizes = [1, 64, 20], strides = [1, 1, 1]} : vector<2x64x20xbf16> to vector<1x64x20xbf16>
    %15 = vector.shape_cast %14 : vector<1x64x20xbf16> to vector<64x20xbf16>
    %16 = vector.extract_strided_slice %3 {offsets = [0, 0, 0], sizes = [1, 20, 64], strides = [1, 1, 1]} : vector<2x20x64xbf16> to vector<1x20x64xbf16>
    %17 = vector.shape_cast %16 : vector<1x20x64xbf16> to vector<20x64xbf16>
    %cst_26 = arith.constant dense<0.000000e+00> : vector<64x64xf32>
    %18 = tpu.matmul %15, %17, %cst_26 {dimension_numbers = #tpu.dot_dimension_numbers<[1], [0], [0], [1], [0, 0, 1, 1], [], []>} : vector<64x20xbf16>, vector<20x64xbf16>, vector<64x64xf32> -> vector<64x64xf32>
    %19 = vector.extract_strided_slice %7 {offsets = [0, 0, 0], sizes = [1, 64, 8], strides = [1, 1, 1]} : vector<2x64x8xf32> to vector<1x64x8xf32>
    %20 = vector.shape_cast %19 : vector<1x64x8xf32> to vector<64x8xf32>
    %cst_27 = arith.constant dense<0.000000e+00> : vector<64x64xf32>
    %21 = tpu.matmul %20, %10, %cst_27 {dimension_numbers = #tpu.dot_dimension_numbers<[1], [0], [0], [1], [0, 0, 1, 1], [], []>} : vector<64x8xf32>, vector<8x64xf32>, vector<64x64xf32> -> vector<64x64xf32>
    %22 = arith.addf %18, %21 : vector<64x64xf32>
    %23 = vector.extract_strided_slice %9 {offsets = [0, 0, 0], sizes = [1, 64, 8], strides = [1, 1, 1]} : vector<2x64x8xf32> to vector<1x64x8xf32>
    %24 = vector.shape_cast %23 : vector<1x64x8xf32> to vector<64x8xf32>
    %cst_28 = arith.constant dense<0.000000e+00> : vector<64x64xf32>
    %25 = tpu.matmul %24, %11, %cst_28 {dimension_numbers = #tpu.dot_dimension_numbers<[1], [0], [0], [1], [0, 0, 1, 1], [], []>} : vector<64x8xf32>, vector<8x64xf32>, vector<64x64xf32> -> vector<64x64xf32>
    %26 = arith.addf %22, %25 : vector<64x64xf32>
    %cst_29 = arith.constant dense<0xFF800000> : vector<64xf32>
    %27 = vector.multi_reduction <maximumf>, %26, %cst_29 [1] : vector<64x64xf32> to vector<64xf32>
    %28 = vector.shape_cast %27 : vector<64xf32> to vector<64x1xf32>
    %29 = vector.broadcast %28 : vector<64x1xf32> to vector<64x64xf32>
    %30 = arith.subf %26, %29 : vector<64x64xf32>
    %31 = math.exp %30 : vector<64x64xf32>
    %cst_30 = arith.constant dense<0.000000e+00> : vector<64xf32>
    %32 = vector.multi_reduction <add>, %31, %cst_30 [1] : vector<64x64xf32> to vector<64xf32>
    %33 = vector.shape_cast %32 : vector<64xf32> to vector<64x1xf32>
    %34 = tpu.reciprocal %33 {approx = true} : vector<64x1xf32> -> vector<64x1xf32>
    %35 = vector.broadcast %34 : vector<64x1xf32> to vector<64x64xf32>
    %36 = arith.mulf %31, %35 : vector<64x64xf32>
    %37 = arith.truncf %36 : vector<64x64xf32> to vector<64x64xbf16>
    %38 = vector.extract_strided_slice %5 {offsets = [0, 0, 0], sizes = [1, 64, 2], strides = [1, 1, 1]} : vector<2x64x2xbf16> to vector<1x64x2xbf16>
    %39 = vector.shape_cast %38 : vector<1x64x2xbf16> to vector<64x2xbf16>
    %cst_31 = arith.constant dense<0.000000e+00> : vector<64x2xf32>
    %40 = tpu.matmul %37, %39, %cst_31 {dimension_numbers = #tpu.dot_dimension_numbers<[1], [0], [0], [1], [0, 0, 1, 1], [], []>} : vector<64x64xbf16>, vector<64x2xbf16>, vector<64x2xf32> -> vector<64x2xf32>
    %41 = vector.extract_strided_slice %12 {offsets = [0, 0, 0], sizes = [1, 2, 4], strides = [1, 1, 1]} : vector<2x2x4xbf16> to vector<1x2x4xbf16>
    %42 = vector.shape_cast %41 : vector<1x2x4xbf16> to vector<2x4xbf16>
    %43 = arith.extf %42 : vector<2x4xbf16> to vector<2x4xf32>
    %44 = vector.extract_strided_slice %40 {offsets = [0, 0], sizes = [64, 1], strides = [1, 1]} : vector<64x2xf32> to vector<64x1xf32>
    %45 = vector.extract_strided_slice %43 {offsets = [0, 0], sizes = [1, 4], strides = [1, 1]} : vector<2x4xf32> to vector<1x4xf32>
    %46 = vector.broadcast %44 : vector<64x1xf32> to vector<64x4xf32>
    %47 = vector.broadcast %45 : vector<1x4xf32> to vector<64x4xf32>
    %48 = arith.mulf %46, %47 : vector<64x4xf32>
    %49 = arith.addf %13, %48 : vector<64x4xf32>
    %50 = vector.extract_strided_slice %40 {offsets = [0, 1], sizes = [64, 1], strides = [1, 1]} : vector<64x2xf32> to vector<64x1xf32>
    %51 = vector.extract_strided_slice %43 {offsets = [1, 0], sizes = [1, 4], strides = [1, 1]} : vector<2x4xf32> to vector<1x4xf32>
    %52 = vector.broadcast %50 : vector<64x1xf32> to vector<64x4xf32>
    %53 = vector.broadcast %51 : vector<1x4xf32> to vector<64x4xf32>
    %54 = arith.mulf %52, %53 : vector<64x4xf32>
    %55 = arith.addf %49, %54 : vector<64x4xf32>
    %56 = vector.extract_strided_slice %1 {offsets = [1, 0, 0], sizes = [1, 64, 20], strides = [1, 1, 1]} : vector<2x64x20xbf16> to vector<1x64x20xbf16>
    %57 = vector.shape_cast %56 : vector<1x64x20xbf16> to vector<64x20xbf16>
    %58 = vector.extract_strided_slice %3 {offsets = [1, 0, 0], sizes = [1, 20, 64], strides = [1, 1, 1]} : vector<2x20x64xbf16> to vector<1x20x64xbf16>
    %59 = vector.shape_cast %58 : vector<1x20x64xbf16> to vector<20x64xbf16>
    %cst_32 = arith.constant dense<0.000000e+00> : vector<64x64xf32>
    %60 = tpu.matmul %57, %59, %cst_32 {dimension_numbers = #tpu.dot_dimension_numbers<[1], [0], [0], [1], [0, 0, 1, 1], [], []>} : vector<64x20xbf16>, vector<20x64xbf16>, vector<64x64xf32> -> vector<64x64xf32>
    %61 = vector.extract_strided_slice %7 {offsets = [1, 0, 0], sizes = [1, 64, 8], strides = [1, 1, 1]} : vector<2x64x8xf32> to vector<1x64x8xf32>
    %62 = vector.shape_cast %61 : vector<1x64x8xf32> to vector<64x8xf32>
    %cst_33 = arith.constant dense<0.000000e+00> : vector<64x64xf32>
    %63 = tpu.matmul %62, %10, %cst_33 {dimension_numbers = #tpu.dot_dimension_numbers<[1], [0], [0], [1], [0, 0, 1, 1], [], []>} : vector<64x8xf32>, vector<8x64xf32>, vector<64x64xf32> -> vector<64x64xf32>
    %64 = arith.addf %60, %63 : vector<64x64xf32>
    %65 = vector.extract_strided_slice %9 {offsets = [1, 0, 0], sizes = [1, 64, 8], strides = [1, 1, 1]} : vector<2x64x8xf32> to vector<1x64x8xf32>
    %66 = vector.shape_cast %65 : vector<1x64x8xf32> to vector<64x8xf32>
    %cst_34 = arith.constant dense<0.000000e+00> : vector<64x64xf32>
    %67 = tpu.matmul %66, %11, %cst_34 {dimension_numbers = #tpu.dot_dimension_numbers<[1], [0], [0], [1], [0, 0, 1, 1], [], []>} : vector<64x8xf32>, vector<8x64xf32>, vector<64x64xf32> -> vector<64x64xf32>
    %68 = arith.addf %64, %67 : vector<64x64xf32>
    %cst_35 = arith.constant dense<0xFF800000> : vector<64xf32>
    %69 = vector.multi_reduction <maximumf>, %68, %cst_35 [1] : vector<64x64xf32> to vector<64xf32>
    %70 = vector.shape_cast %69 : vector<64xf32> to vector<64x1xf32>
    %71 = vector.broadcast %70 : vector<64x1xf32> to vector<64x64xf32>
    %72 = arith.subf %68, %71 : vector<64x64xf32>
    %73 = math.exp %72 : vector<64x64xf32>
    %cst_36 = arith.constant dense<0.000000e+00> : vector<64xf32>
    %74 = vector.multi_reduction <add>, %73, %cst_36 [1] : vector<64x64xf32> to vector<64xf32>
    %75 = vector.shape_cast %74 : vector<64xf32> to vector<64x1xf32>
    %76 = tpu.reciprocal %75 {approx = true} : vector<64x1xf32> -> vector<64x1xf32>
    %77 = vector.broadcast %76 : vector<64x1xf32> to vector<64x64xf32>
    %78 = arith.mulf %73, %77 : vector<64x64xf32>
    %79 = arith.truncf %78 : vector<64x64xf32> to vector<64x64xbf16>
    %80 = vector.extract_strided_slice %5 {offsets = [1, 0, 0], sizes = [1, 64, 2], strides = [1, 1, 1]} : vector<2x64x2xbf16> to vector<1x64x2xbf16>
    %81 = vector.shape_cast %80 : vector<1x64x2xbf16> to vector<64x2xbf16>
    %cst_37 = arith.constant dense<0.000000e+00> : vector<64x2xf32>
    %82 = tpu.matmul %79, %81, %cst_37 {dimension_numbers = #tpu.dot_dimension_numbers<[1], [0], [0], [1], [0, 0, 1, 1], [], []>} : vector<64x64xbf16>, vector<64x2xbf16>, vector<64x2xf32> -> vector<64x2xf32>
    %83 = vector.extract_strided_slice %12 {offsets = [1, 0, 0], sizes = [1, 2, 4], strides = [1, 1, 1]} : vector<2x2x4xbf16> to vector<1x2x4xbf16>
    %84 = vector.shape_cast %83 : vector<1x2x4xbf16> to vector<2x4xbf16>
    %85 = arith.extf %84 : vector<2x4xbf16> to vector<2x4xf32>
    %86 = vector.extract_strided_slice %82 {offsets = [0, 0], sizes = [64, 1], strides = [1, 1]} : vector<64x2xf32> to vector<64x1xf32>
    %87 = vector.extract_strided_slice %85 {offsets = [0, 0], sizes = [1, 4], strides = [1, 1]} : vector<2x4xf32> to vector<1x4xf32>
    %88 = vector.broadcast %86 : vector<64x1xf32> to vector<64x4xf32>
    %89 = vector.broadcast %87 : vector<1x4xf32> to vector<64x4xf32>
    %90 = arith.mulf %88, %89 : vector<64x4xf32>
    %91 = arith.addf %55, %90 : vector<64x4xf32>
    %92 = vector.extract_strided_slice %82 {offsets = [0, 1], sizes = [64, 1], strides = [1, 1]} : vector<64x2xf32> to vector<64x1xf32>
    %93 = vector.extract_strided_slice %85 {offsets = [1, 0], sizes = [1, 4], strides = [1, 1]} : vector<2x4xf32> to vector<1x4xf32>
    %94 = vector.broadcast %92 : vector<64x1xf32> to vector<64x4xf32>
    %95 = vector.broadcast %93 : vector<1x4xf32> to vector<64x4xf32>
    %96 = arith.mulf %94, %95 : vector<64x4xf32>
    %97 = arith.addf %91, %96 : vector<64x4xf32>
    %c0_38 = arith.constant 0 : index
    %c0_39 = arith.constant 0 : index
    %98 = vector.load %arg9[%c0_38, %c0_39] : memref<1x4xf32, #tpu.memory_space<vmem>>, vector<1x4xf32>
    %99 = vector.broadcast %98 : vector<1x4xf32> to vector<64x4xf32>
    %100 = arith.addf %97, %99 : vector<64x4xf32>
    %cst_40 = arith.constant 0.000000e+00 : f32
    %101 = vector.broadcast %cst_40 : f32 to vector<64x4xf32>
    %102 = arith.maximumf %100, %101 : vector<64x4xf32>
    %c0_41 = arith.constant 0 : index
    %c0_42 = arith.constant 0 : index
    %c0_43 = arith.constant 0 : index
    %103 = vector.load %arg10[%c0_41, %c0_42, %c0_43] : memref<1x64x4xf32, #tpu.memory_space<vmem>>, vector<1x64x4xf32>
    %104 = vector.shape_cast %103 : vector<1x64x4xf32> to vector<64x4xf32>
    %105 = vector.shape_cast %102 : vector<64x4xf32> to vector<1x64x4xf32>
    tpu.vector_store %arg10[%c0_41, %c0_42, %c0_43], %105 {strides = array<i32>} : memref<1x64x4xf32, #tpu.memory_space<vmem>>, vector<1x64x4xf32>,
    return
  }
  func.func @transform_0(%arg0: i32) -> (i32, i32, i32, i32) {
    %c0_i32 = arith.constant 0 : i32
    %c0_i32_0 = arith.constant 0 : i32
    %c0_i32_1 = arith.constant 0 : i32
    %c0_i32_2 = arith.constant 0 : i32
    return %arg0, %c0_i32, %c0_i32_0, %c0_i32_1 : i32, i32, i32, i32
  }
  func.func @transform_1(%arg0: i32) -> (i32, i32, i32, i32) {
    %c0_i32 = arith.constant 0 : i32
    %c0_i32_0 = arith.constant 0 : i32
    %c0_i32_1 = arith.constant 0 : i32
    %c0_i32_2 = arith.constant 0 : i32
    return %arg0, %c0_i32, %c0_i32_0, %c0_i32_1 : i32, i32, i32, i32
  }
  func.func @transform_2(%arg0: i32) -> (i32, i32, i32, i32) {
    %c0_i32 = arith.constant 0 : i32
    %c0_i32_0 = arith.constant 0 : i32
    %c0_i32_1 = arith.constant 0 : i32
    %c0_i32_2 = arith.constant 0 : i32
    return %arg0, %c0_i32, %c0_i32_0, %c0_i32_1 : i32, i32, i32, i32
  }
  func.func @transform_3(%arg0: i32) -> (i32, i32, i32, i32) {
    %c0_i32 = arith.constant 0 : i32
    %c0_i32_0 = arith.constant 0 : i32
    %c0_i32_1 = arith.constant 0 : i32
    %c0_i32_2 = arith.constant 0 : i32
    return %arg0, %c0_i32, %c0_i32_0, %c0_i32_1 : i32, i32, i32, i32
  }
  func.func @transform_4(%arg0: i32) -> (i32, i32, i32, i32) {
    %c0_i32 = arith.constant 0 : i32
    %c0_i32_0 = arith.constant 0 : i32
    %c0_i32_1 = arith.constant 0 : i32
    %c0_i32_2 = arith.constant 0 : i32
    return %arg0, %c0_i32, %c0_i32_0, %c0_i32_1 : i32, i32, i32, i32
  }
  func.func @transform_5(%arg0: i32) -> (i32, i32) {
    %c0_i32 = arith.constant 0 : i32
    %c0_i32_0 = arith.constant 0 : i32
    %c0_i32_1 = arith.constant 0 : i32
    return %c0_i32, %c0_i32_0 : i32, i32
  }
  func.func @transform_6(%arg0: i32) -> (i32, i32) {
    %c0_i32 = arith.constant 0 : i32
    %c0_i32_0 = arith.constant 0 : i32
    %c0_i32_1 = arith.constant 0 : i32
    return %c0_i32, %c0_i32_0 : i32, i32
  }
  func.func @transform_7(%arg0: i32) -> (i32, i32, i32) {
    %c0_i32 = arith.constant 0 : i32
    %c0_i32_0 = arith.constant 0 : i32
    %c0_i32_1 = arith.constant 0 : i32
    %c0_i32_2 = arith.constant 0 : i32
    return %c0_i32, %c0_i32_0, %c0_i32_1 : i32, i32, i32
  }
  func.func @transform_8(%arg0: i32) -> (i32, i32) {
    %c0_i32 = arith.constant 0 : i32
    %c0_i32_0 = arith.constant 0 : i32
    %c0_i32_1 = arith.constant 0 : i32
    return %c0_i32, %c0_i32_0 : i32, i32
  }
  func.func @transform_9(%arg0: i32) -> (i32, i32, i32) {
    %c0_i32 = arith.constant 0 : i32
    %c0_i32_0 = arith.constant 0 : i32
    %c0_i32_1 = arith.constant 0 : i32
    return %arg0, %c0_i32, %c0_i32_0 : i32, i32, i32
  }
}

module attributes {stable_mosaic.version = 11 : i64} {
  func.func @_mm_kernel(%arg0: i32, %arg1: memref<64x368xbf16, #tpu.memory_space<vmem>>, %arg2: memref<368x40xbf16, #tpu.memory_space<vmem>>, %arg3: memref<1x40xf32, #tpu.memory_space<vmem>>, %arg4: memref<1x40xf32, #tpu.memory_space<vmem>>, %arg5: memref<64x40xf32, #tpu.memory_space<vmem>>) attributes {dimension_semantics = [#tpu.dimension_semantics<parallel>], iteration_bounds = array<i64: 2>, scalar_prefetch = 0 : i64, scratch_operands = 0 : i64, tpu.core_type = #tpu.core_type<tc>, window_params = [{transform_indices = @transform_0, window_bounds = array<i64: 64, 368>}, {pipeline_mode = #tpu.pipeline_mode<synchronous>, transform_indices = @transform_1, window_bounds = array<i64: 368, 40>}, {pipeline_mode = #tpu.pipeline_mode<synchronous>, transform_indices = @transform_2, window_bounds = array<i64: 1, 40>}, {pipeline_mode = #tpu.pipeline_mode<synchronous>, transform_indices = @transform_3, window_bounds = array<i64: 1, 40>}, {transform_indices = @transform_4, window_bounds = array<i64: 64, 40>}]} {
    %c0 = arith.constant 0 : index
    %c0_0 = arith.constant 0 : index
    %0 = vector.load %arg1[%c0, %c0_0] : memref<64x368xbf16, #tpu.memory_space<vmem>>, vector<64x368xbf16>
    %c0_1 = arith.constant 0 : index
    %c0_2 = arith.constant 0 : index
    %1 = vector.load %arg2[%c0_1, %c0_2] : memref<368x40xbf16, #tpu.memory_space<vmem>>, vector<368x40xbf16>
    %cst = arith.constant dense<0.000000e+00> : vector<64x40xf32>
    %2 = tpu.matmul %0, %1, %cst {dimension_numbers = #tpu.dot_dimension_numbers<[1], [0], [0], [1], [0, 0, 1, 1], [], []>} : vector<64x368xbf16>, vector<368x40xbf16>, vector<64x40xf32> -> vector<64x40xf32>
    %c0_3 = arith.constant 0 : index
    %c0_4 = arith.constant 0 : index
    %3 = vector.load %arg3[%c0_3, %c0_4] : memref<1x40xf32, #tpu.memory_space<vmem>>, vector<1x40xf32>
    %4 = vector.broadcast %3 : vector<1x40xf32> to vector<64x40xf32>
    %5 = arith.addf %2, %4 : vector<64x40xf32>
    %c0_5 = arith.constant 0 : index
    %c0_6 = arith.constant 0 : index
    %6 = vector.load %arg4[%c0_5, %c0_6] : memref<1x40xf32, #tpu.memory_space<vmem>>, vector<1x40xf32>
    %7 = vector.broadcast %6 : vector<1x40xf32> to vector<64x40xf32>
    %8 = arith.maximumf %5, %7 : vector<64x40xf32>
    %c0_7 = arith.constant 0 : index
    %c0_8 = arith.constant 0 : index
    %9 = vector.load %arg5[%c0_7, %c0_8] : memref<64x40xf32, #tpu.memory_space<vmem>>, vector<64x40xf32>
    tpu.vector_store %arg5[%c0_7, %c0_8], %8 {strides = array<i32>} : memref<64x40xf32, #tpu.memory_space<vmem>>, vector<64x40xf32>,
    return
  }
  func.func @transform_0(%arg0: i32) -> (i32, i32) {
    %c0_i32 = arith.constant 0 : i32
    %c0_i32_0 = arith.constant 0 : i32
    return %arg0, %c0_i32 : i32, i32
  }
  func.func @transform_1(%arg0: i32) -> (i32, i32) {
    %c0_i32 = arith.constant 0 : i32
    %c0_i32_0 = arith.constant 0 : i32
    %c0_i32_1 = arith.constant 0 : i32
    return %c0_i32, %c0_i32_0 : i32, i32
  }
  func.func @transform_2(%arg0: i32) -> (i32, i32) {
    %c0_i32 = arith.constant 0 : i32
    %c0_i32_0 = arith.constant 0 : i32
    %c0_i32_1 = arith.constant 0 : i32
    return %c0_i32, %c0_i32_0 : i32, i32
  }
  func.func @transform_3(%arg0: i32) -> (i32, i32) {
    %c0_i32 = arith.constant 0 : i32
    %c0_i32_0 = arith.constant 0 : i32
    %c0_i32_1 = arith.constant 0 : i32
    return %c0_i32, %c0_i32_0 : i32, i32
  }
  func.func @transform_4(%arg0: i32) -> (i32, i32) {
    %c0_i32 = arith.constant 0 : i32
    %c0_i32_0 = arith.constant 0 : i32
    return %arg0, %c0_i32 : i32, i32
  }
}

</mosaic_0001>

<llo_original>
// kernel: mul.32
$region0: #{mul.32}
  #allocation0 [shape = 's32[1]{0}', space=sflag, size = 0x4, scoped, tag = 'scoped memory for mul.32']
  %s0 = inlined_call_operand.vmem [shape: f32[84], index: 0, kind: input, shape index: {}]
  %s1 = inlined_call_operand.vmem [shape: f32[84], index: 1, kind: input, shape index: {}]
  %s2 = inlined_call_operand.vmem [shape: f32[84], index: 2, kind: output, shape index: {}]
  %v3 = vld [vmem:[%s0] sm:$0x1]
  %v4 = vld [vmem:[%s1] sm:$0x1]
  %5 = xla_tuple %v3, %v4
  %6 = xla_tuple %5
  %v7 = vmul.f32 %v3, %v4
  %8 = xla_tuple %v7
  %9 = vst [vmem:[%s2] sm:$0x1] %v7

// kernel: aa_wide_basic_forward.3
$region0: #{aa_wide_basic_forward.3}
  #allocation0 [shape = 'u32[]', space=smem, size = 0x4, offset = 0x4, fixed_abs, tag = 'smem constant byte address 0x4 - core index']
  #allocation1 [shape = 'u32[144,128]{1,0:T(1,128)}', space=vmem, size = 0x12000, scoped, tag = 'internal scratch']
  %s0 = inlined_call_operand.vmem [shape: bf16[128,72], index: 0, kind: input, shape index: {}]
  %s1 = inlined_call_operand.vmem [shape: bf16[72,128], index: 1, kind: input, shape index: {}]
  %s2 = inlined_call_operand.vmem [shape: f32[1,128], index: 2, kind: input, shape index: {}]
  %s3 = inlined_call_operand.vmem [shape: f32[1,128], index: 3, kind: input, shape index: {}]
  %s4 = inlined_call_operand.vmem [shape: f32[128,128], index: 4, kind: output, shape index: {}]
  %s5 = sld [smem:[#allocation0]]
  $region49: #{aa_wide_basic_forward.3} parent=0
    _
  %s7 = ssub.s32 1, %s5
  %s8 = scalar_select 0, %s7, %s5
  loop: start=0, step=1, limit=4
  $region2: #{aa_wide_basic_forward.3} parent=0 // loop_pre_header
    _
  $region3: #{aa_wide_basic_forward.3} parent=0 // loop_header
    %s10 = sphi 0, %s14
    %p11 = scmp.ge.s32.totalorder %s10, 4
    %s20 = sphi 0, %s22
    %s23 = sphi 0, %s20
    %s24 = sphi 0, %s23
    %s40 = sphi 0, %s24
    %s44 = sphi 0, %s44
    %s46 = sphi 0, %s44
    %s47 = sphi 0, %s46
    %s61 = sphi 0, %s47
    %s65 = sphi 0, %s65
    %s67 = sphi 0, %s65
    %s68 = sphi 0, %s67
    %s82 = sphi 0, %s68
    %s86 = sphi 0, %s86
    %s88 = sphi 0, %s86
    %s89 = sphi 0, %s88
    %s103 = sphi 0, %s89
    %s109 = sphi 0, %s111
    %s112 = sphi 0, %s109
    %s113 = sphi 0, %s112
    %s129 = sphi 0, %s113
  $region4: #{aa_wide_basic_forward.3} parent=0 // loop_header_branch
    %13 = sbr.rel (%p11) target = $region8
  $region5: #{aa_wide_basic_forward.3} parent=0 // loop_body
    %s15 = ssub.s32 %s10, 1
    %s16 = ssub.s32 %s10, 2
    %s17 = sadd.s32 %s10, 1
    %s18 = ssub.s32 %s10, %s17
    %p19 = scmp.eq.s32.totalorder %s18, 0
    %s21 = sadd.s32 %s20, 1
    %s22 = scalar_select %p19, %s20, %s21
    %p25 = pneg %p19
    %p26 = scmp.eq.s32.totalorder %s10, 1
    %p27 = por %p25, %p26
    %p28 = scmp.ne.s32.totalorder %s20, %s23
    %p29 = scmp.eq.s32.totalorder %s10, 0
    %p30 = por %p28, %p29
    %p31 = scmp.ne.s32.totalorder %s20, %s23
    %p32 = scmp.eq.s32.totalorder %s15, 1
    %p33 = por %p31, %p32
    %p34 = scmp.ne.s32.totalorder %s23, %s24
    %p35 = scmp.eq.s32.totalorder %s15, 0
    %p36 = por %p34, %p35
    %p37 = scmp.ne.s32.totalorder %s23, %s24
    %p38 = scmp.eq.s32.totalorder %s16, 1
    %p39 = por %p37, %p38
    %p41 = scmp.ne.s32.totalorder %s24, %s40
    %p42 = scmp.eq.s32.totalorder %s16, 0
    %p43 = por %p41, %p42
    %s45 = sadd.s32 %s44, 1
    %p48 = scmp.eq.s32.totalorder %s10, 1
    %p49 = scmp.ne.s32.totalorder %s44, %s46
    %p50 = scmp.eq.s32.totalorder %s10, 0
    %p51 = por %p49, %p50
    %p52 = scmp.ne.s32.totalorder %s44, %s46
    %p53 = scmp.eq.s32.totalorder %s15, 1
    %p54 = por %p52, %p53
    %p55 = scmp.ne.s32.totalorder %s46, %s47
    %p56 = scmp.eq.s32.totalorder %s15, 0
    %p57 = por %p55, %p56
    %p58 = scmp.ne.s32.totalorder %s46, %s47
    %p59 = scmp.eq.s32.totalorder %s16, 1
    %p60 = por %p58, %p59
    %p62 = scmp.ne.s32.totalorder %s47, %s61
    %p63 = scmp.eq.s32.totalorder %s16, 0
    %p64 = por %p62, %p63
    %s66 = sadd.s32 %s65, 1
    %p69 = scmp.eq.s32.totalorder %s10, 1
    %p70 = scmp.ne.s32.totalorder %s65, %s67
    %p71 = scmp.eq.s32.totalorder %s10, 0
    %p72 = por %p70, %p71
    %p73 = scmp.ne.s32.totalorder %s65, %s67
    %p74 = scmp.eq.s32.totalorder %s15, 1
    %p75 = por %p73, %p74
    %p76 = scmp.ne.s32.totalorder %s67, %s68
    %p77 = scmp.eq.s32.totalorder %s15, 0
    %p78 = por %p76, %p77
    %p79 = scmp.ne.s32.totalorder %s67, %s68
    %p80 = scmp.eq.s32.totalorder %s16, 1
    %p81 = por %p79, %p80
    %p83 = scmp.ne.s32.totalorder %s68, %s82
    %p84 = scmp.eq.s32.totalorder %s16, 0
    %p85 = por %p83, %p84
    %s87 = sadd.s32 %s86, 1
    %p90 = scmp.eq.s32.totalorder %s10, 1
    %p91 = scmp.ne.s32.totalorder %s86, %s88
    %p92 = scmp.eq.s32.totalorder %s10, 0
    %p93 = por %p91, %p92
    %p94 = scmp.ne.s32.totalorder %s86, %s88
    %p95 = scmp.eq.s32.totalorder %s15, 1
    %p96 = por %p94, %p95
    %p97 = scmp.ne.s32.totalorder %s88, %s89
    %p98 = scmp.eq.s32.totalorder %s15, 0
    %p99 = por %p97, %p98
    %p100 = scmp.ne.s32.totalorder %s88, %s89
    %p101 = scmp.eq.s32.totalorder %s16, 1
    %p102 = por %p100, %p101
    %p104 = scmp.ne.s32.totalorder %s89, %s103
    %p105 = scmp.eq.s32.totalorder %s16, 0
    %p106 = por %p104, %p105
    %s107 = ssub.s32 %s10, %s17
    %p108 = scmp.eq.s32.totalorder %s107, 0
    %s110 = sadd.s32 %s109, 1
    %s111 = scalar_select %p108, %s109, %s110
    %p114 = pneg %p108
    %p115 = scmp.eq.s32.totalorder %s10, 1
    %p116 = por %p114, %p115
    %p117 = scmp.ne.s32.totalorder %s109, %s112
    %p118 = scmp.eq.s32.totalorder %s10, 0
    %p119 = por %p117, %p118
    %p120 = scmp.ne.s32.totalorder %s109, %s112
    %p121 = scmp.eq.s32.totalorder %s15, 1
    %p122 = por %p120, %p121
    %p123 = scmp.ne.s32.totalorder %s112, %s113
    %p124 = scmp.eq.s32.totalorder %s15, 0
    %p125 = por %p123, %p124
    %p126 = scmp.ne.s32.totalorder %s112, %s113
    %p127 = scmp.eq.s32.totalorder %s16, 1
    %p128 = por %p126, %p127
    %p130 = scmp.ne.s32.totalorder %s113, %s129
    %p131 = scmp.eq.s32.totalorder %s16, 0
    %p132 = por %p130, %p131
    %p133 = scmp.le.s32.totalorder 1, %s10
    %p134 = scmp.lt.s32.totalorder %s10, 3
    %p135 = pnand %p133, %p134
    %p136 = pneg %p135
    // Predicated region
    $region9: #{aa_wide_basic_forward.3} parent=5 // pred_check
      _
    $region10: #{aa_wide_basic_forward.3} parent=5 // pred_check_branch
      %138 = sbr.rel (%p135) target = $region12
    $region11: #{aa_wide_basic_forward.3} parent=5 // pred_region
      %s139 = ssub.s32 %s10, 1
      // Predicated region
      $region13: #{aa_wide_basic_forward.3} parent=11 // pred_check
        %p140 = pneg %p57
      $region14: #{aa_wide_basic_forward.3} parent=11 // pred_check_branch
        %142 = sbr.rel (%p140) target = $region16
      $region15: #{aa_wide_basic_forward.3} parent=11 // pred_region
        _
      $region16: #{aa_wide_basic_forward.3} parent=11 // pred_fallthru
        _
      // Predicated region
      $region17: #{aa_wide_basic_forward.3} parent=11 // pred_check
        %p143 = pneg %p78
      $region18: #{aa_wide_basic_forward.3} parent=11 // pred_check_branch
        %145 = sbr.rel (%p143) target = $region20
      $region19: #{aa_wide_basic_forward.3} parent=11 // pred_region
        _
      $region20: #{aa_wide_basic_forward.3} parent=11 // pred_fallthru
        _
      // Predicated region
      $region21: #{aa_wide_basic_forward.3} parent=11 // pred_check
        %p146 = pneg %p99
      $region22: #{aa_wide_basic_forward.3} parent=11 // pred_check_branch
        %148 = sbr.rel (%p146) target = $region24
      $region23: #{aa_wide_basic_forward.3} parent=11 // pred_region
        _
      $region24: #{aa_wide_basic_forward.3} parent=11 // pred_fallthru
        _
    $region12: #{aa_wide_basic_forward.3} parent=5 // pred_fallthru
      _
    %p149 = scmp.lt.s32.totalorder %s10, 2
    // Predicated region
    $region25: #{aa_wide_basic_forward.3} parent=5 // pred_check
      %p150 = pneg %p149
    $region26: #{aa_wide_basic_forward.3} parent=5 // pred_check_branch
      %152 = sbr.rel (%p150) target = $region28
    $region27: #{aa_wide_basic_forward.3} parent=5 // pred_region
      // Predicated region
      $region29: #{aa_wide_basic_forward.3} parent=27 // pred_check
        %p153 = pneg %p30
      $region30: #{aa_wide_basic_forward.3} parent=27 // pred_check_branch
        %155 = sbr.rel (%p153) target = $region32
      $region31: #{aa_wide_basic_forward.3} parent=27 // pred_region
        %s156 = smul.u32 8, %s10
        %p157 = scmp.lt.s32.totalorder %s156, 15
        %s158 = scalar_select %p157, %s156, 15
        %s159 = smul.addr %s158, 4
        %s160 = scalar_lea.vmem %s0, %s159
        %s161 = smul.u32 8, %s10
      $region32: #{aa_wide_basic_forward.3} parent=27 // pred_fallthru
        _
    $region28: #{aa_wide_basic_forward.3} parent=5 // pred_fallthru
      _
    %p162 = scmp.le.s32.totalorder 1, %s10
    %p163 = scmp.lt.s32.totalorder %s10, 3
    %p164 = pnand %p162, %p163
    %p165 = pneg %p164
    // Predicated region
    $region33: #{aa_wide_basic_forward.3} parent=5 // pred_check
      _
    $region34: #{aa_wide_basic_forward.3} parent=5 // pred_check_branch
      %167 = sbr.rel (%p164) target = $region36
    $region35: #{aa_wide_basic_forward.3} parent=5 // pred_region
      %s168 = ssub.s32 %s10, 1
      %s169 = smul.u32 8, %s15
      %p170 = scmp.lt.s32.totalorder %s169, 15
      %s171 = scalar_select %p170, %s169, 15
      %s172 = smul.addr %s171, 4
      %s173 = scalar_lea.vmem %s0, %s172
      %p174 = pneg %p36
      %p175 = pneg %p33
      %p176 = pneg %p57
      %p177 = pneg %p54
      %p178 = pneg %p78
      %p179 = pneg %p75
      %p180 = pneg %p99
      %p181 = pneg %p96
      %p182 = pneg %p125
      %p183 = pneg %p122
      %s184 = smul.u32 8, %s15
      %p185 = scmp.lt.s32.totalorder %s184, 15
      %s186 = scalar_select %p185, %s184, 15
      %s187 = smul.addr %s186, 8
      %s188 = scalar_lea.vmem %s4, %s187
      %s189 = smul.u32 8, %s15
      %p190 = scmp.lt.s32.totalorder %s189, 15
      %s191 = scalar_select %p190, %s189, 15
      %s192 = smul.addr %s191, 4
      %s193 = scalar_lea.vmem %s0, %s192
      %s194 = smul.u32 8, %s15
      %s195 = smul.u32 8, %s15
      %p196 = scmp.lt.s32.totalorder %s195, 15
      %s197 = scalar_select %p196, %s195, 15
      %s198 = smul.addr %s197, 8
      %s199 = scalar_lea.vmem %s4, %s198
      %s200 = smul.u32 8, %s15
      %v202 = vld [vmem:[%s193] sm:$0xf]
      %v203 = vld [vmem:[%s193 + $0x4] sm:$0xf]
      %v204 = vld [vmem:[%s193 + $0x8] sm:$0xf]
      %v205 = vld [vmem:[%s193 + $0xc] sm:$0xf]
      %v206 = vld [vmem:[%s193 + $0x10] sm:$0xf]
      %v207 = vld [vmem:[%s193 + $0x14] sm:$0xf]
      %v208 = vld [vmem:[%s193 + $0x18] sm:$0xf]
      %v209 = vld [vmem:[%s193 + $0x1c] sm:$0xf]
      %v210 = vld [vmem:[%s1] sm:$0xf]
      %v211 = vld [vmem:[%s1 + $0x4] sm:$0xf]
      %v212 = vld [vmem:[%s1 + $0x8] sm:$0xf]
      %v213 = vld [vmem:[%s1 + $0xc] sm:$0xf]
      %v214 = vld [vmem:[%s1 + $0x10] sm:$0xf]
      %v215 = vld [vmem:[%s1 + $0x14] sm:$0xf]
      %v216 = vld [vmem:[%s1 + $0x18] sm:$0xf]
      %v217 = vld [vmem:[%s1 + $0x1c] sm:$0xf]
      %v218 = vld [vmem:[%s1 + $0x20] sm:$0xf]
      %v219 = vld [vmem:[%s2] sm:$0x1]
      %v221 = vlaneseq
      %v222 = vshrl.u32 %v221, 7
      %v223 = vsub.s32 0, %v222
      %v224 = vrot.slane %v219, %v223
      %v234 = vunpack.c.l.b16 %v202
      %v235 = vunpack.c.l.b16 %v203
      %v236 = vunpack.c.l.b16 %v204
      %v237 = vunpack.c.l.b16 %v205
      %v238 = vunpack.c.l.b16 %v206
      %v239 = vunpack.c.l.b16 %v207
      %v240 = vunpack.c.l.b16 %v208
      %v241 = vunpack.c.l.b16 %v209
      %v242 = vpack.c.b16 %v235, %v234
      %v243 = vpack.c.b16 %v237, %v236
      %v244 = vpack.c.b16 %v239, %v238
      %v245 = vpack.c.b16 %v241, %v240
      %v255 = vunpack.c.l.b16 %v210
      %v256 = vunpack.c.l.b16 %v211
      %v257 = vunpack.c.l.b16 %v212
      %v258 = vunpack.c.l.b16 %v213
      %v259 = vunpack.c.l.b16 %v214
      %v260 = vunpack.c.l.b16 %v215
      %v261 = vunpack.c.l.b16 %v216
      %v262 = vunpack.c.l.b16 %v217
      %v263 = vunpack.c.l.b16 %v218
      %v264 = vpack.c.b16 %v256, %v255
      %v265 = vpack.c.b16 %v258, %v257
      %v266 = vpack.c.b16 %v260, %v259
      %v267 = vpack.c.b16 %v262, %v261
      %v268 = vpack.c.b16 %v263, %v263
      %vm273 = vcmask 588800
      %v275 = vsel %vm273, %v242, 0
      %v278 = vsel %vm273, %v243, 0
      %v281 = vsel %vm273, %v244, 0
      %v284 = vsel %vm273, %v245, 0
      %vm286 = vcmask 1043456
      %v288 = vsel %vm286, %v268, 0
      %290 = vmatprep.subr.bf16.mxu0 0
      %291 = vmatpush1.bf16.msra.mxu0 %v264
      %292 = vmatprep.subr.bf16.mxu0 0
      %293 = vmatpush1.bf16.msra.mxu0 %v265
      %294 = vmatprep.subr.bf16.mxu0 0
      %295 = vmatpush1.bf16.msra.mxu0 %v266
      %296 = vmatprep.subr.bf16.mxu0 0
      %297 = vmatpush1.bf16.msra.mxu0 %v267
      %298 = vmatprep.subr.bf16.mxu0 0
      %299 = vmatpush1.bf16.msra.mxu0 %v288
      %300 = vmatprep.subr.bf16.mxu0 0
      %301 = vmatpush1.bf16.msra.mxu0 0
      %302 = vmatprep.subr.bf16.mxu0 0
      %303 = vmatpush1.bf16.msra.mxu0 0
      %304 = vmatprep.subr.bf16.mxu0 0
      %305 = vmatpush1.bf16.msra.mxu0 0
      %306 = vmatprep.subr.bf16.mxu0 0
      %307 = vmatpush1.bf16.msra.mxu0 0
      %308 = vmatprep.subr.bf16.mxu0 0
      %309 = vmatpush1.bf16.msra.mxu0 0
      %310 = vmatprep.subr.bf16.mxu0 0
      %311 = vmatpush1.bf16.msra.mxu0 0
      %312 = vmatprep.subr.bf16.mxu0 0
      %313 = vmatpush1.bf16.msra.mxu0 0
      %314 = vmatprep.subr.bf16.mxu0 0
      %315 = vmatpush1.bf16.msra.mxu0 0
      %316 = vmatprep.subr.bf16.mxu0 0
      %317 = vmatpush1.bf16.msra.mxu0 0
      %318 = vmatprep.subr.bf16.mxu0 0
      %319 = vmatpush1.bf16.msra.mxu0 0
      %320 = vmatprep.subr.bf16.mxu0 0
      %321 = vmatpush1.bf16.msra.mxu0 0
      %322 = vmatprep.mubr.bf16.mxu0 0
      %323 = vmatmul.mubr.bf16.gmra.mrb[0].mxu0 %v275
      %v324 = vpop.f32.mrb[0].mxu0
      %v325 = vadd.f32 %v224, %v324
      %v326 = vpop.f32.mrb[0].mxu0
      %v327 = vpop.f32.mrb[0].mxu0
      %v328 = vadd.f32 %v224, %v327
      %v329 = vpop.f32.mrb[0].mxu0
      %330 = vmatprep.mubr.bf16.mxu0 0
      %331 = vmatmul.mubr.bf16.gmra.mrb[0].mxu0 %v278
      %v332 = vpop.f32.mrb[0].mxu0
      %v333 = vadd.f32 %v224, %v332
      %v334 = vpop.f32.mrb[0].mxu0
      %v335 = vpop.f32.mrb[0].mxu0
      %v336 = vadd.f32 %v224, %v335
      %v337 = vpop.f32.mrb[0].mxu0
      %338 = vmatprep.mubr.bf16.mxu0 0
      %339 = vmatmul.mubr.bf16.gmra.mrb[0].mxu0 %v281
      %v340 = vpop.f32.mrb[0].mxu0
      %v341 = vadd.f32 %v224, %v340
      %v342 = vpop.f32.mrb[0].mxu0
      %v343 = vpop.f32.mrb[0].mxu0
      %v344 = vadd.f32 %v224, %v343
      %v345 = vpop.f32.mrb[0].mxu0
      %346 = vmatprep.mubr.bf16.mxu0 0
      %347 = vmatmul.mubr.bf16.gmra.mrb[0].mxu0 %v284
      %v348 = vpop.f32.mrb[0].mxu0
      %v349 = vadd.f32 %v224, %v348
      %v350 = vpop.f32.mrb[0].mxu0
      %v351 = vpop.f32.mrb[0].mxu0
      %v352 = vadd.f32 %v224, %v351
      %v353 = vpop.f32.mrb[0].mxu0
      %354 = vdwg.mxu0
      %v355 = vld [vmem:[%s3] sm:$0x1]
      %v357 = vlaneseq
      %v358 = vshrl.u32 %v357, 7
      %v359 = vsub.s32 0, %v358
      %v360 = vrot.slane %v355, %v359
      %v362 = vmax.f32 %v325, %v360
      %v363 = vmax.f32 %v328, %v360
      %v364 = vmax.f32 %v333, %v360
      %v365 = vmax.f32 %v336, %v360
      %v366 = vmax.f32 %v341, %v360
      %v367 = vmax.f32 %v344, %v360
      %v368 = vmax.f32 %v349, %v360
      %v369 = vmax.f32 %v352, %v360
      %370 = vst [vmem:[%s199] sm:$0xff] %v362
      %371 = vst [vmem:[%s199 + $0x8] sm:$0xff] %v363
      %372 = vst [vmem:[%s199 + $0x10] sm:$0xff] %v364
      %373 = vst [vmem:[%s199 + $0x18] sm:$0xff] %v365
      %374 = vst [vmem:[%s199 + $0x20] sm:$0xff] %v366
      %375 = vst [vmem:[%s199 + $0x28] sm:$0xff] %v367
      %376 = vst [vmem:[%s199 + $0x30] sm:$0xff] %v368
      %377 = vst [vmem:[%s199 + $0x38] sm:$0xff] %v369
      %s378 = smul.u32 8, %s15
      %p379 = scmp.lt.s32.totalorder %s378, 15
      %s380 = scalar_select %p379, %s378, 15
      %s381 = smul.addr %s380, 8
      %s382 = scalar_lea.vmem %s4, %s381
      // Predicated region
      $region37: #{aa_wide_basic_forward.3} parent=35 // pred_check
        %p383 = pneg %p122
      $region38: #{aa_wide_basic_forward.3} parent=35 // pred_check_branch
        %385 = sbr.rel (%p383) target = $region40
      $region39: #{aa_wide_basic_forward.3} parent=35 // pred_region
        %s386 = smul.u32 8, %s15
      $region40: #{aa_wide_basic_forward.3} parent=35 // pred_fallthru
        _
    $region36: #{aa_wide_basic_forward.3} parent=5 // pred_fallthru
      _
    %p387 = scmp.le.s32.totalorder 2, %s10
    // Predicated region
    $region41: #{aa_wide_basic_forward.3} parent=5 // pred_check
      %p388 = pneg %p387
    $region42: #{aa_wide_basic_forward.3} parent=5 // pred_check_branch
      %390 = sbr.rel (%p388) target = $region44
    $region43: #{aa_wide_basic_forward.3} parent=5 // pred_region
      %s391 = ssub.s32 %s10, 2
      // Predicated region
      $region45: #{aa_wide_basic_forward.3} parent=43 // pred_check
        %p392 = pneg %p128
      $region46: #{aa_wide_basic_forward.3} parent=43 // pred_check_branch
        %394 = sbr.rel (%p392) target = $region48
      $region47: #{aa_wide_basic_forward.3} parent=43 // pred_region
        %s395 = smul.u32 8, %s16
        %p396 = scmp.lt.s32.totalorder %s395, 15
        %s397 = scalar_select %p396, %s395, 15
        %s398 = smul.addr %s397, 8
        %s399 = scalar_lea.vmem %s4, %s398
      $region48: #{aa_wide_basic_forward.3} parent=43 // pred_fallthru
        _
    $region44: #{aa_wide_basic_forward.3} parent=5 // pred_fallthru
      _
  $region6: #{aa_wide_basic_forward.3} parent=0 // loop_footer
    %s14 = sadd.s32 1, %s10
  $region7: #{aa_wide_basic_forward.3} parent=0 // loop_footer_branch
    %9 = sbr.rel target = $region3
  $region8: #{aa_wide_basic_forward.3} parent=0 // loop_exit
    _

// kernel: aa_wide_basic_forward.4
$region0: #{aa_wide_basic_forward.4}
  #allocation0 [shape = 'u32[]', space=smem, size = 0x4, offset = 0x4, fixed_abs, tag = 'smem constant byte address 0x4 - core index']
  #allocation1 [shape = 'u32[144,128]{1,0:T(1,128)}', space=vmem, size = 0x12000, scoped, tag = 'internal scratch']
  %s0 = inlined_call_operand.vmem [shape: bf16[2,2,64,20], index: 0, kind: input, shape index: {}]
  %s1 = inlined_call_operand.vmem [shape: bf16[2,2,20,64], index: 1, kind: input, shape index: {}]
  %s2 = inlined_call_operand.vmem [shape: bf16[2,2,64,2], index: 2, kind: input, shape index: {}]
  %s3 = inlined_call_operand.vmem [shape: f32[2,2,64,8], index: 3, kind: input, shape index: {}]
  %s4 = inlined_call_operand.vmem [shape: f32[2,2,64,8], index: 4, kind: input, shape index: {}]
  %s5 = inlined_call_operand.vmem [shape: f32[8,64], index: 5, kind: input, shape index: {}]
  %s6 = inlined_call_operand.vmem [shape: f32[8,64], index: 6, kind: input, shape index: {}]
  %s7 = inlined_call_operand.vmem [shape: bf16[2,2,4], index: 7, kind: input, shape index: {}]
  %s8 = inlined_call_operand.vmem [shape: f32[1,4], index: 8, kind: input, shape index: {}]
  %s9 = inlined_call_operand.vmem [shape: f32[2,64,4], index: 9, kind: output, shape index: {}]
  %s10 = sld [smem:[#allocation0]]
  $region69: #{aa_wide_basic_forward.4} parent=0
    _
  %s12 = ssub.s32 1, %s10
  %s13 = scalar_select 0, %s12, %s10
  loop: start=0, step=1, limit=4
  $region2: #{aa_wide_basic_forward.4} parent=0 // loop_pre_header
    _
  $region3: #{aa_wide_basic_forward.4} parent=0 // loop_header
    %s15 = sphi 0, %s19
    %p16 = scmp.ge.s32.totalorder %s15, 4
    %s25 = sphi 0, %s27
    %s28 = sphi 0, %s25
    %s29 = sphi 0, %s28
    %s45 = sphi 0, %s29
    %s51 = sphi 0, %s53
    %s54 = sphi 0, %s51
    %s55 = sphi 0, %s54
    %s71 = sphi 0, %s55
    %s77 = sphi 0, %s79
    %s80 = sphi 0, %s77
    %s81 = sphi 0, %s80
    %s97 = sphi 0, %s81
    %s103 = sphi 0, %s105
    %s106 = sphi 0, %s103
    %s107 = sphi 0, %s106
    %s123 = sphi 0, %s107
    %s129 = sphi 0, %s131
    %s132 = sphi 0, %s129
    %s133 = sphi 0, %s132
    %s149 = sphi 0, %s133
    %s153 = sphi 0, %s153
    %s155 = sphi 0, %s153
    %s156 = sphi 0, %s155
    %s170 = sphi 0, %s156
    %s174 = sphi 0, %s174
    %s176 = sphi 0, %s174
    %s177 = sphi 0, %s176
    %s191 = sphi 0, %s177
    %s195 = sphi 0, %s195
    %s197 = sphi 0, %s195
    %s198 = sphi 0, %s197
    %s212 = sphi 0, %s198
    %s216 = sphi 0, %s216
    %s218 = sphi 0, %s216
    %s219 = sphi 0, %s218
    %s233 = sphi 0, %s219
    %s239 = sphi 0, %s241
    %s242 = sphi 0, %s239
    %s243 = sphi 0, %s242
    %s259 = sphi 0, %s243
  $region4: #{aa_wide_basic_forward.4} parent=0 // loop_header_branch
    %18 = sbr.rel (%p16) target = $region8
  $region5: #{aa_wide_basic_forward.4} parent=0 // loop_body
    %s20 = ssub.s32 %s15, 1
    %s21 = ssub.s32 %s15, 2
    %s22 = sadd.s32 %s15, 1
    %s23 = ssub.s32 %s15, %s22
    %p24 = scmp.eq.s32.totalorder %s23, 0
    %s26 = sadd.s32 %s25, 1
    %s27 = scalar_select %p24, %s25, %s26
    %p30 = pneg %p24
    %p31 = scmp.eq.s32.totalorder %s15, 1
    %p32 = por %p30, %p31
    %p33 = scmp.ne.s32.totalorder %s25, %s28
    %p34 = scmp.eq.s32.totalorder %s15, 0
    %p35 = por %p33, %p34
    %p36 = scmp.ne.s32.totalorder %s25, %s28
    %p37 = scmp.eq.s32.totalorder %s20, 1
    %p38 = por %p36, %p37
    %p39 = scmp.ne.s32.totalorder %s28, %s29
    %p40 = scmp.eq.s32.totalorder %s20, 0
    %p41 = por %p39, %p40
    %p42 = scmp.ne.s32.totalorder %s28, %s29
    %p43 = scmp.eq.s32.totalorder %s21, 1
    %p44 = por %p42, %p43
    %p46 = scmp.ne.s32.totalorder %s29, %s45
    %p47 = scmp.eq.s32.totalorder %s21, 0
    %p48 = por %p46, %p47
    %s49 = ssub.s32 %s15, %s22
    %p50 = scmp.eq.s32.totalorder %s49, 0
    %s52 = sadd.s32 %s51, 1
    %s53 = scalar_select %p50, %s51, %s52
    %p56 = pneg %p50
    %p57 = scmp.eq.s32.totalorder %s15, 1
    %p58 = por %p56, %p57
    %p59 = scmp.ne.s32.totalorder %s51, %s54
    %p60 = scmp.eq.s32.totalorder %s15, 0
    %p61 = por %p59, %p60
    %p62 = scmp.ne.s32.totalorder %s51, %s54
    %p63 = scmp.eq.s32.totalorder %s20, 1
    %p64 = por %p62, %p63
    %p65 = scmp.ne.s32.totalorder %s54, %s55
    %p66 = scmp.eq.s32.totalorder %s20, 0
    %p67 = por %p65, %p66
    %p68 = scmp.ne.s32.totalorder %s54, %s55
    %p69 = scmp.eq.s32.totalorder %s21, 1
    %p70 = por %p68, %p69
    %p72 = scmp.ne.s32.totalorder %s55, %s71
    %p73 = scmp.eq.s32.totalorder %s21, 0
    %p74 = por %p72, %p73
    %s75 = ssub.s32 %s15, %s22
    %p76 = scmp.eq.s32.totalorder %s75, 0
    %s78 = sadd.s32 %s77, 1
    %s79 = scalar_select %p76, %s77, %s78
    %p82 = pneg %p76
    %p83 = scmp.eq.s32.totalorder %s15, 1
    %p84 = por %p82, %p83
    %p85 = scmp.ne.s32.totalorder %s77, %s80
    %p86 = scmp.eq.s32.totalorder %s15, 0
    %p87 = por %p85, %p86
    %p88 = scmp.ne.s32.totalorder %s77, %s80
    %p89 = scmp.eq.s32.totalorder %s20, 1
    %p90 = por %p88, %p89
    %p91 = scmp.ne.s32.totalorder %s80, %s81
    %p92 = scmp.eq.s32.totalorder %s20, 0
    %p93 = por %p91, %p92
    %p94 = scmp.ne.s32.totalorder %s80, %s81
    %p95 = scmp.eq.s32.totalorder %s21, 1
    %p96 = por %p94, %p95
    %p98 = scmp.ne.s32.totalorder %s81, %s97
    %p99 = scmp.eq.s32.totalorder %s21, 0
    %p100 = por %p98, %p99
    %s101 = ssub.s32 %s15, %s22
    %p102 = scmp.eq.s32.totalorder %s101, 0
    %s104 = sadd.s32 %s103, 1
    %s105 = scalar_select %p102, %s103, %s104
    %p108 = pneg %p102
    %p109 = scmp.eq.s32.totalorder %s15, 1
    %p110 = por %p108, %p109
    %p111 = scmp.ne.s32.totalorder %s103, %s106
    %p112 = scmp.eq.s32.totalorder %s15, 0
    %p113 = por %p111, %p112
    %p114 = scmp.ne.s32.totalorder %s103, %s106
    %p115 = scmp.eq.s32.totalorder %s20, 1
    %p116 = por %p114, %p115
    %p117 = scmp.ne.s32.totalorder %s106, %s107
    %p118 = scmp.eq.s32.totalorder %s20, 0
    %p119 = por %p117, %p118
    %p120 = scmp.ne.s32.totalorder %s106, %s107
    %p121 = scmp.eq.s32.totalorder %s21, 1
    %p122 = por %p120, %p121
    %p124 = scmp.ne.s32.totalorder %s107, %s123
    %p125 = scmp.eq.s32.totalorder %s21, 0
    %p126 = por %p124, %p125
    %s127 = ssub.s32 %s15, %s22
    %p128 = scmp.eq.s32.totalorder %s127, 0
    %s130 = sadd.s32 %s129, 1
    %s131 = scalar_select %p128, %s129, %s130
    %p134 = pneg %p128
    %p135 = scmp.eq.s32.totalorder %s15, 1
    %p136 = por %p134, %p135
    %p137 = scmp.ne.s32.totalorder %s129, %s132
    %p138 = scmp.eq.s32.totalorder %s15, 0
    %p139 = por %p137, %p138
    %p140 = scmp.ne.s32.totalorder %s129, %s132
    %p141 = scmp.eq.s32.totalorder %s20, 1
    %p142 = por %p140, %p141
    %p143 = scmp.ne.s32.totalorder %s132, %s133
    %p144 = scmp.eq.s32.totalorder %s20, 0
    %p145 = por %p143, %p144
    %p146 = scmp.ne.s32.totalorder %s132, %s133
    %p147 = scmp.eq.s32.totalorder %s21, 1
    %p148 = por %p146, %p147
    %p150 = scmp.ne.s32.totalorder %s133, %s149
    %p151 = scmp.eq.s32.totalorder %s21, 0
    %p152 = por %p150, %p151
    %s154 = sadd.s32 %s153, 1
    %p157 = scmp.eq.s32.totalorder %s15, 1
    %p158 = scmp.ne.s32.totalorder %s153, %s155
    %p159 = scmp.eq.s32.totalorder %s15, 0
    %p160 = por %p158, %p159
    %p161 = scmp.ne.s32.totalorder %s153, %s155
    %p162 = scmp.eq.s32.totalorder %s20, 1
    %p163 = por %p161, %p162
    %p164 = scmp.ne.s32.totalorder %s155, %s156
    %p165 = scmp.eq.s32.totalorder %s20, 0
    %p166 = por %p164, %p165
    %p167 = scmp.ne.s32.totalorder %s155, %s156
    %p168 = scmp.eq.s32.totalorder %s21, 1
    %p169 = por %p167, %p168
    %p171 = scmp.ne.s32.totalorder %s156, %s170
    %p172 = scmp.eq.s32.totalorder %s21, 0
    %p173 = por %p171, %p172
    %s175 = sadd.s32 %s174, 1
    %p178 = scmp.eq.s32.totalorder %s15, 1
    %p179 = scmp.ne.s32.totalorder %s174, %s176
    %p180 = scmp.eq.s32.totalorder %s15, 0
    %p181 = por %p179, %p180
    %p182 = scmp.ne.s32.totalorder %s174, %s176
    %p183 = scmp.eq.s32.totalorder %s20, 1
    %p184 = por %p182, %p183
    %p185 = scmp.ne.s32.totalorder %s176, %s177
    %p186 = scmp.eq.s32.totalorder %s20, 0
    %p187 = por %p185, %p186
    %p188 = scmp.ne.s32.totalorder %s176, %s177
    %p189 = scmp.eq.s32.totalorder %s21, 1
    %p190 = por %p188, %p189
    %p192 = scmp.ne.s32.totalorder %s177, %s191
    %p193 = scmp.eq.s32.totalorder %s21, 0
    %p194 = por %p192, %p193
    %s196 = sadd.s32 %s195, 1
    %p199 = scmp.eq.s32.totalorder %s15, 1
    %p200 = scmp.ne.s32.totalorder %s195, %s197
    %p201 = scmp.eq.s32.totalorder %s15, 0
    %p202 = por %p200, %p201
    %p203 = scmp.ne.s32.totalorder %s195, %s197
    %p204 = scmp.eq.s32.totalorder %s20, 1
    %p205 = por %p203, %p204
    %p206 = scmp.ne.s32.totalorder %s197, %s198
    %p207 = scmp.eq.s32.totalorder %s20, 0
    %p208 = por %p206, %p207
    %p209 = scmp.ne.s32.totalorder %s197, %s198
    %p210 = scmp.eq.s32.totalorder %s21, 1
    %p211 = por %p209, %p210
    %p213 = scmp.ne.s32.totalorder %s198, %s212
    %p214 = scmp.eq.s32.totalorder %s21, 0
    %p215 = por %p213, %p214
    %s217 = sadd.s32 %s216, 1
    %p220 = scmp.eq.s32.totalorder %s15, 1
    %p221 = scmp.ne.s32.totalorder %s216, %s218
    %p222 = scmp.eq.s32.totalorder %s15, 0
    %p223 = por %p221, %p222
    %p224 = scmp.ne.s32.totalorder %s216, %s218
    %p225 = scmp.eq.s32.totalorder %s20, 1
    %p226 = por %p224, %p225
    %p227 = scmp.ne.s32.totalorder %s218, %s219
    %p228 = scmp.eq.s32.totalorder %s20, 0
    %p229 = por %p227, %p228
    %p230 = scmp.ne.s32.totalorder %s218, %s219
    %p231 = scmp.eq.s32.totalorder %s21, 1
    %p232 = por %p230, %p231
    %p234 = scmp.ne.s32.totalorder %s219, %s233
    %p235 = scmp.eq.s32.totalorder %s21, 0
    %p236 = por %p234, %p235
    %s237 = ssub.s32 %s15, %s22
    %p238 = scmp.eq.s32.totalorder %s237, 0
    %s240 = sadd.s32 %s239, 1
    %s241 = scalar_select %p238, %s239, %s240
    %p244 = pneg %p238
    %p245 = scmp.eq.s32.totalorder %s15, 1
    %p246 = por %p244, %p245
    %p247 = scmp.ne.s32.totalorder %s239, %s242
    %p248 = scmp.eq.s32.totalorder %s15, 0
    %p249 = por %p247, %p248
    %p250 = scmp.ne.s32.totalorder %s239, %s242
    %p251 = scmp.eq.s32.totalorder %s20, 1
    %p252 = por %p250, %p251
    %p253 = scmp.ne.s32.totalorder %s242, %s243
    %p254 = scmp.eq.s32.totalorder %s20, 0
    %p255 = por %p253, %p254
    %p256 = scmp.ne.s32.totalorder %s242, %s243
    %p257 = scmp.eq.s32.totalorder %s21, 1
    %p258 = por %p256, %p257
    %p260 = scmp.ne.s32.totalorder %s243, %s259
    %p261 = scmp.eq.s32.totalorder %s21, 0
    %p262 = por %p260, %p261
    %p263 = scmp.le.s32.totalorder 1, %s15
    %p264 = scmp.lt.s32.totalorder %s15, 3
    %p265 = pnand %p263, %p264
    %p266 = pneg %p265
    // Predicated region
    $region9: #{aa_wide_basic_forward.4} parent=5 // pred_check
      _
    $region10: #{aa_wide_basic_forward.4} parent=5 // pred_check_branch
      %268 = sbr.rel (%p265) target = $region12
    $region11: #{aa_wide_basic_forward.4} parent=5 // pred_region
      %s269 = ssub.s32 %s15, 1
      // Predicated region
      $region13: #{aa_wide_basic_forward.4} parent=11 // pred_check
        %p270 = pneg %p166
      $region14: #{aa_wide_basic_forward.4} parent=11 // pred_check_branch
        %272 = sbr.rel (%p270) target = $region16
      $region15: #{aa_wide_basic_forward.4} parent=11 // pred_region
        _
      $region16: #{aa_wide_basic_forward.4} parent=11 // pred_fallthru
        _
      // Predicated region
      $region17: #{aa_wide_basic_forward.4} parent=11 // pred_check
        %p273 = pneg %p187
      $region18: #{aa_wide_basic_forward.4} parent=11 // pred_check_branch
        %275 = sbr.rel (%p273) target = $region20
      $region19: #{aa_wide_basic_forward.4} parent=11 // pred_region
        _
      $region20: #{aa_wide_basic_forward.4} parent=11 // pred_fallthru
        _
      // Predicated region
      $region21: #{aa_wide_basic_forward.4} parent=11 // pred_check
        %p276 = pneg %p208
      $region22: #{aa_wide_basic_forward.4} parent=11 // pred_check_branch
        %278 = sbr.rel (%p276) target = $region24
      $region23: #{aa_wide_basic_forward.4} parent=11 // pred_region
        _
      $region24: #{aa_wide_basic_forward.4} parent=11 // pred_fallthru
        _
      // Predicated region
      $region25: #{aa_wide_basic_forward.4} parent=11 // pred_check
        %p279 = pneg %p229
      $region26: #{aa_wide_basic_forward.4} parent=11 // pred_check_branch
        %281 = sbr.rel (%p279) target = $region28
      $region27: #{aa_wide_basic_forward.4} parent=11 // pred_region
        _
      $region28: #{aa_wide_basic_forward.4} parent=11 // pred_fallthru
        _
    $region12: #{aa_wide_basic_forward.4} parent=5 // pred_fallthru
      _
    %p282 = scmp.lt.s32.totalorder %s15, 2
    // Predicated region
    $region29: #{aa_wide_basic_forward.4} parent=5 // pred_check
      %p283 = pneg %p282
    $region30: #{aa_wide_basic_forward.4} parent=5 // pred_check_branch
      %285 = sbr.rel (%p283) target = $region32
    $region31: #{aa_wide_basic_forward.4} parent=5 // pred_region
      // Predicated region
      $region33: #{aa_wide_basic_forward.4} parent=31 // pred_check
        %p286 = pneg %p35
      $region34: #{aa_wide_basic_forward.4} parent=31 // pred_check_branch
        %288 = sbr.rel (%p286) target = $region36
      $region35: #{aa_wide_basic_forward.4} parent=31 // pred_region
        %p289 = scmp.lt.s32.totalorder %s15, 1
        %s290 = scalar_select %p289, %s15, 1
        %s291 = smul.addr %s290, 16
        %s292 = smul.addr %s291, 4
        %s293 = scalar_lea.vmem %s0, %s292
      $region36: #{aa_wide_basic_forward.4} parent=31 // pred_fallthru
        _
      // Predicated region
      $region37: #{aa_wide_basic_forward.4} parent=31 // pred_check
        %p294 = pneg %p61
      $region38: #{aa_wide_basic_forward.4} parent=31 // pred_check_branch
        %296 = sbr.rel (%p294) target = $region40
      $region39: #{aa_wide_basic_forward.4} parent=31 // pred_region
        %p297 = scmp.lt.s32.totalorder %s15, 1
        %s298 = scalar_select %p297, %s15, 1
        %s299 = smul.addr %s298, 6
        %s300 = smul.addr %s299, 4
        %s301 = scalar_lea.vmem %s1, %s300
      $region40: #{aa_wide_basic_forward.4} parent=31 // pred_fallthru
        _
      // Predicated region
      $region41: #{aa_wide_basic_forward.4} parent=31 // pred_check
        %p302 = pneg %p87
      $region42: #{aa_wide_basic_forward.4} parent=31 // pred_check_branch
        %304 = sbr.rel (%p302) target = $region44
      $region43: #{aa_wide_basic_forward.4} parent=31 // pred_region
        %p305 = scmp.lt.s32.totalorder %s15, 1
        %s306 = scalar_select %p305, %s15, 1
        %s307 = smul.addr %s306, 16
        %s308 = smul.addr %s307, 4
        %s309 = scalar_lea.vmem %s2, %s308
      $region44: #{aa_wide_basic_forward.4} parent=31 // pred_fallthru
        _
      // Predicated region
      $region45: #{aa_wide_basic_forward.4} parent=31 // pred_check
        %p310 = pneg %p113
      $region46: #{aa_wide_basic_forward.4} parent=31 // pred_check_branch
        %312 = sbr.rel (%p310) target = $region48
      $region47: #{aa_wide_basic_forward.4} parent=31 // pred_region
        %p313 = scmp.lt.s32.totalorder %s15, 1
        %s314 = scalar_select %p313, %s15, 1
        %s315 = smul.addr %s314, 16
        %s316 = smul.addr %s315, 8
        %s317 = scalar_lea.vmem %s3, %s316
      $region48: #{aa_wide_basic_forward.4} parent=31 // pred_fallthru
        _
      // Predicated region
      $region49: #{aa_wide_basic_forward.4} parent=31 // pred_check
        %p318 = pneg %p139
      $region50: #{aa_wide_basic_forward.4} parent=31 // pred_check_branch
        %320 = sbr.rel (%p318) target = $region52
      $region51: #{aa_wide_basic_forward.4} parent=31 // pred_region
        %p321 = scmp.lt.s32.totalorder %s15, 1
        %s322 = scalar_select %p321, %s15, 1
        %s323 = smul.addr %s322, 16
        %s324 = smul.addr %s323, 8
        %s325 = scalar_lea.vmem %s4, %s324
      $region52: #{aa_wide_basic_forward.4} parent=31 // pred_fallthru
        _
    $region32: #{aa_wide_basic_forward.4} parent=5 // pred_fallthru
      _
    %p326 = scmp.le.s32.totalorder 1, %s15
    %p327 = scmp.lt.s32.totalorder %s15, 3
    %p328 = pnand %p326, %p327
    %p329 = pneg %p328
    // Predicated region
    $region53: #{aa_wide_basic_forward.4} parent=5 // pred_check
      _
    $region54: #{aa_wide_basic_forward.4} parent=5 // pred_check_branch
      %331 = sbr.rel (%p328) target = $region56
    $region55: #{aa_wide_basic_forward.4} parent=5 // pred_region
      %s332 = ssub.s32 %s15, 1
      %p333 = scmp.lt.s32.totalorder %s20, 1
      %s334 = scalar_select %p333, %s20, 1
      %s335 = smul.addr %s334, 16
      %s336 = smul.addr %s335, 4
      %s337 = scalar_lea.vmem %s0, %s336
      %p338 = pneg %p41
      %p339 = pneg %p38
      %p340 = scmp.lt.s32.totalorder %s20, 1
      %s341 = scalar_select %p340, %s20, 1
      %s342 = smul.addr %s341, 6
      %s343 = smul.addr %s342, 4
      %s344 = scalar_lea.vmem %s1, %s343
      %p345 = pneg %p67
      %p346 = pneg %p64
      %p347 = scmp.lt.s32.totalorder %s20, 1
      %s348 = scalar_select %p347, %s20, 1
      %s349 = smul.addr %s348, 16
      %s350 = smul.addr %s349, 4
      %s351 = scalar_lea.vmem %s2, %s350
      %p352 = pneg %p93
      %p353 = pneg %p90
      %p354 = scmp.lt.s32.totalorder %s20, 1
      %s355 = scalar_select %p354, %s20, 1
      %s356 = smul.addr %s355, 16
      %s357 = smul.addr %s356, 8
      %s358 = scalar_lea.vmem %s3, %s357
      %p359 = pneg %p119
      %p360 = pneg %p116
      %p361 = scmp.lt.s32.totalorder %s20, 1
      %s362 = scalar_select %p361, %s20, 1
      %s363 = smul.addr %s362, 16
      %s364 = smul.addr %s363, 8
      %s365 = scalar_lea.vmem %s4, %s364
      %p366 = pneg %p145
      %p367 = pneg %p142
      %p368 = pneg %p166
      %p369 = pneg %p163
      %p370 = pneg %p187
      %p371 = pneg %p184
      %p372 = pneg %p208
      %p373 = pneg %p205
      %p374 = pneg %p229
      %p375 = pneg %p226
      %p376 = pneg %p255
      %p377 = pneg %p252
      %p378 = scmp.lt.s32.totalorder %s20, 1
      %s379 = scalar_select %p378, %s20, 1
      %s380 = smul.addr %s379, 8
      %s381 = smul.addr %s380, 8
      %s382 = scalar_lea.vmem %s9, %s381
      %p383 = scmp.lt.s32.totalorder %s20, 1
      %s384 = scalar_select %p383, %s20, 1
      %s385 = smul.addr %s384, 16
      %s386 = smul.addr %s385, 4
      %s387 = scalar_lea.vmem %s0, %s386
      %p388 = scmp.lt.s32.totalorder %s20, 1
      %s389 = scalar_select %p388, %s20, 1
      %s390 = smul.addr %s389, 6
      %s391 = smul.addr %s390, 4
      %s392 = scalar_lea.vmem %s1, %s391
      %p393 = scmp.lt.s32.totalorder %s20, 1
      %s394 = scalar_select %p393, %s20, 1
      %s395 = smul.addr %s394, 16
      %s396 = smul.addr %s395, 4
      %s397 = scalar_lea.vmem %s2, %s396
      %p398 = scmp.lt.s32.totalorder %s20, 1
      %s399 = scalar_select %p398, %s20, 1
      %s400 = smul.addr %s399, 16
      %s401 = smul.addr %s400, 8
      %s402 = scalar_lea.vmem %s3, %s401
      %p403 = scmp.lt.s32.totalorder %s20, 1
      %s404 = scalar_select %p403, %s20, 1
      %s405 = smul.addr %s404, 16
      %s406 = smul.addr %s405, 8
      %s407 = scalar_lea.vmem %s4, %s406
      %p408 = scmp.lt.s32.totalorder %s20, 1
      %s409 = scalar_select %p408, %s20, 1
      %s410 = smul.addr %s409, 8
      %s411 = smul.addr %s410, 8
      %s412 = scalar_lea.vmem %s9, %s411
      %v414 = vld [vmem:[%s387] sm:$0xf]
      %v415 = vld [vmem:[%s387 + $0x4] sm:$0xf]
      %v416 = vld [vmem:[%s387 + $0x8] sm:$0xf]
      %v417 = vld [vmem:[%s387 + $0xc] sm:$0xf]
      %v418 = vld [vmem:[%s387 + $0x10] sm:$0xf]
      %v419 = vld [vmem:[%s387 + $0x14] sm:$0xf]
      %v420 = vld [vmem:[%s387 + $0x18] sm:$0xf]
      %v421 = vld [vmem:[%s387 + $0x1c] sm:$0xf]
      %v422 = vld [vmem:[%s387 + $0x20] sm:$0xf]
      %v423 = vld [vmem:[%s387 + $0x24] sm:$0xf]
      %v424 = vld [vmem:[%s387 + $0x28] sm:$0xf]
      %v425 = vld [vmem:[%s387 + $0x2c] sm:$0xf]
      %v426 = vld [vmem:[%s387 + $0x30] sm:$0xf]
      %v427 = vld [vmem:[%s387 + $0x34] sm:$0xf]
      %v428 = vld [vmem:[%s387 + $0x38] sm:$0xf]
      %v429 = vld [vmem:[%s387 + $0x3c] sm:$0xf]
      %v430 = vld [vmem:[%s392] sm:$0xf]
      %v431 = vld [vmem:[%s392 + $0x4] sm:$0xf]
      %v432 = vld [vmem:[%s392 + $0x8] sm:$0x3]
      %v433 = vld [vmem:[%s392 + $0xc] sm:$0xf]
      %v434 = vld [vmem:[%s392 + $0x10] sm:$0xf]
      %v435 = vld [vmem:[%s392 + $0x14] sm:$0x3]
      %v436 = vld [vmem:[%s397] sm:$0xf]
      %v437 = vld [vmem:[%s397 + $0x4] sm:$0xf]
      %v438 = vld [vmem:[%s397 + $0x8] sm:$0xf]
      %v439 = vld [vmem:[%s397 + $0xc] sm:$0xf]
      %v440 = vld [vmem:[%s397 + $0x10] sm:$0xf]
      %v441 = vld [vmem:[%s397 + $0x14] sm:$0xf]
      %v442 = vld [vmem:[%s397 + $0x18] sm:$0xf]
      %v443 = vld [vmem:[%s397 + $0x1c] sm:$0xf]
      %v444 = vld [vmem:[%s397 + $0x20] sm:$0xf]
      %v445 = vld [vmem:[%s397 + $0x24] sm:$0xf]
      %v446 = vld [vmem:[%s397 + $0x28] sm:$0xf]
      %v447 = vld [vmem:[%s397 + $0x2c] sm:$0xf]
      %v448 = vld [vmem:[%s397 + $0x30] sm:$0xf]
      %v449 = vld [vmem:[%s397 + $0x34] sm:$0xf]
      %v450 = vld [vmem:[%s397 + $0x38] sm:$0xf]
      %v451 = vld [vmem:[%s397 + $0x3c] sm:$0xf]
      %v452 = vld [vmem:[%s402] sm:$0xff]
      %v453 = vld [vmem:[%s402 + $0x8] sm:$0xff]
      %v454 = vld [vmem:[%s402 + $0x10] sm:$0xff]
      %v455 = vld [vmem:[%s402 + $0x18] sm:$0xff]
      %v456 = vld [vmem:[%s402 + $0x20] sm:$0xff]
      %v457 = vld [vmem:[%s402 + $0x28] sm:$0xff]
      %v458 = vld [vmem:[%s402 + $0x30] sm:$0xff]
      %v459 = vld [vmem:[%s402 + $0x38] sm:$0xff]
      %v460 = vld [vmem:[%s402 + $0x40] sm:$0xff]
      %v461 = vld [vmem:[%s402 + $0x48] sm:$0xff]
      %v462 = vld [vmem:[%s402 + $0x50] sm:$0xff]
      %v463 = vld [vmem:[%s402 + $0x58] sm:$0xff]
      %v464 = vld [vmem:[%s402 + $0x60] sm:$0xff]
      %v465 = vld [vmem:[%s402 + $0x68] sm:$0xff]
      %v466 = vld [vmem:[%s402 + $0x70] sm:$0xff]
      %v467 = vld [vmem:[%s402 + $0x78] sm:$0xff]
      %v468 = vld [vmem:[%s407] sm:$0xff]
      %v469 = vld [vmem:[%s407 + $0x8] sm:$0xff]
      %v470 = vld [vmem:[%s407 + $0x10] sm:$0xff]
      %v471 = vld [vmem:[%s407 + $0x18] sm:$0xff]
      %v472 = vld [vmem:[%s407 + $0x20] sm:$0xff]
      %v473 = vld [vmem:[%s407 + $0x28] sm:$0xff]
      %v474 = vld [vmem:[%s407 + $0x30] sm:$0xff]
      %v475 = vld [vmem:[%s407 + $0x38] sm:$0xff]
      %v476 = vld [vmem:[%s407 + $0x40] sm:$0xff]
      %v477 = vld [vmem:[%s407 + $0x48] sm:$0xff]
      %v478 = vld [vmem:[%s407 + $0x50] sm:$0xff]
      %v479 = vld [vmem:[%s407 + $0x58] sm:$0xff]
      %v480 = vld [vmem:[%s407 + $0x60] sm:$0xff]
      %v481 = vld [vmem:[%s407 + $0x68] sm:$0xff]
      %v482 = vld [vmem:[%s407 + $0x70] sm:$0xff]
      %v483 = vld [vmem:[%s407 + $0x78] sm:$0xff]
      %v484 = vld [vmem:[%s5] sm:$0xff]
      %v485 = vld [vmem:[%s6] sm:$0xff]
      %v486 = vld [vmem:[%s7] sm:$0x1]
      %v487 = vld [vmem:[%s7 + $0x1] sm:$0x1]
      %vm488 = vcmask 64512
      %v490 = vsel %vm488, %v452, 0
      %v493 = vsel %vm488, %v453, 0
      %v496 = vsel %vm488, %v454, 0
      %v499 = vsel %vm488, %v455, 0
      %v502 = vsel %vm488, %v456, 0
      %v505 = vsel %vm488, %v457, 0
      %v508 = vsel %vm488, %v458, 0
      %v511 = vsel %vm488, %v459, 0
      %513 = vmatprep.subr.mxu0 0.0
      %514 = vmatpush1.msra.mxu0 %v484
      %515 = vmatprep.subr.mxu0 0.0
      %516 = vmatpush1.msra.mxu0 0.0
      %517 = vmatprep.subr.mxu0 0.0
      %518 = vmatpush1.msra.mxu0 0.0
      %519 = vmatprep.subr.mxu0 0.0
      %520 = vmatpush1.msra.mxu0 0.0
      %521 = vmatprep.subr.mxu0 0.0
      %522 = vmatpush1.msra.mxu0 0.0
      %523 = vmatprep.subr.mxu0 0.0
      %524 = vmatpush1.msra.mxu0 0.0
      %525 = vmatprep.subr.mxu0 0.0
      %526 = vmatpush1.msra.mxu0 0.0
      %527 = vmatprep.subr.mxu0 0.0
      %528 = vmatpush1.msra.mxu0 0.0
      %529 = vmatprep.subr.mxu0 0.0
      %530 = vmatpush1.msra.mxu0 0.0
      %531 = vmatprep.subr.mxu0 0.0
      %532 = vmatpush1.msra.mxu0 0.0
      %533 = vmatprep.subr.mxu0 0.0
      %534 = vmatpush1.msra.mxu0 0.0
      %535 = vmatprep.subr.mxu0 0.0
      %536 = vmatpush1.msra.mxu0 0.0
      %537 = vmatprep.subr.mxu0 0.0
      %538 = vmatpush1.msra.mxu0 0.0
      %539 = vmatprep.subr.mxu0 0.0
      %540 = vmatpush1.msra.mxu0 0.0
      %541 = vmatprep.subr.mxu0 0.0
      %542 = vmatpush1.msra.mxu0 0.0
      %543 = vmatprep.subr.mxu0 0.0
      %544 = vmatpush1.msra.mxu0 0.0
      %545 = vmatprep.subr.mxu0 0.0
      %546 = vmatpush1.msra.mxu0 0.0
      %547 = vmatprep.subr.mxu0 0.0
      %548 = vmatpush1.msra.mxu0 0.0
      %549 = vmatprep.subr.mxu0 0.0
      %550 = vmatpush1.msra.mxu0 0.0
      %551 = vmatprep.subr.mxu0 0.0
      %552 = vmatpush1.msra.mxu0 0.0
      %553 = vmatprep.subr.mxu0 0.0
      %554 = vmatpush1.msra.mxu0 0.0
      %555 = vmatprep.subr.mxu0 0.0
      %556 = vmatpush1.msra.mxu0 0.0
      %557 = vmatprep.subr.mxu0 0.0
      %558 = vmatpush1.msra.mxu0 0.0
      %559 = vmatprep.subr.mxu0 0.0
      %560 = vmatpush1.msra.mxu0 0.0
      %561 = vmatprep.subr.mxu0 0.0
      %562 = vmatpush1.msra.mxu0 0.0
      %563 = vmatprep.subr.mxu0 0.0
      %564 = vmatpush1.msra.mxu0 0.0
      %565 = vmatprep.subr.mxu0 0.0
      %566 = vmatpush1.msra.mxu0 0.0
      %567 = vmatprep.subr.mxu0 0.0
      %568 = vmatpush1.msra.mxu0 0.0
      %569 = vmatprep.subr.mxu0 0.0
      %570 = vmatpush1.msra.mxu0 0.0
      %571 = vmatprep.subr.mxu0 0.0
      %572 = vmatpush1.msra.mxu0 0.0
      %573 = vmatprep.subr.mxu0 0.0
      %574 = vmatpush1.msra.mxu0 0.0
      %575 = vmatprep.subr.mxu0 0.0
      %576 = vmatpush1.msra.mxu0 0.0
      %577 = vmatprep.mubr.f32.mxu0 0.0
      %578 = vmatmul.mubr.f32.gmra.mrb[0].mxu0 %v490
      %v579 = vpop.f32.mrb[0].mxu0
      %v580 = vadd.f32 0.0, %v579
      %v581 = vpop.f32.mrb[0].mxu0
      %582 = vmatprep.mubr.f32.mxu0 0.0
      %583 = vmatmul.mubr.f32.gmra.mrb[0].mxu0 %v493
      %v584 = vpop.f32.mrb[0].mxu0
      %v585 = vadd.f32 0.0, %v584
      %v586 = vpop.f32.mrb[0].mxu0
      %587 = vmatprep.mubr.f32.mxu0 0.0
      %588 = vmatmul.mubr.f32.gmra.mrb[0].mxu0 %v496
      %v589 = vpop.f32.mrb[0].mxu0
      %v590 = vadd.f32 0.0, %v589
      %v591 = vpop.f32.mrb[0].mxu0
      %592 = vmatprep.mubr.f32.mxu0 0.0
      %593 = vmatmul.mubr.f32.gmra.mrb[0].mxu0 %v499
      %v594 = vpop.f32.mrb[0].mxu0
      %v595 = vadd.f32 0.0, %v594
      %v596 = vpop.f32.mrb[0].mxu0
      %597 = vmatprep.mubr.f32.mxu0 0.0
      %598 = vmatmul.mubr.f32.gmra.mrb[0].mxu0 %v502
      %v599 = vpop.f32.mrb[0].mxu0
      %v600 = vadd.f32 0.0, %v599
      %v601 = vpop.f32.mrb[0].mxu0
      %602 = vmatprep.mubr.f32.mxu0 0.0
      %603 = vmatmul.mubr.f32.gmra.mrb[0].mxu0 %v505
      %v604 = vpop.f32.mrb[0].mxu0
      %v605 = vadd.f32 0.0, %v604
      %v606 = vpop.f32.mrb[0].mxu0
      %607 = vmatprep.mubr.f32.mxu0 0.0
      %608 = vmatmul.mubr.f32.gmra.mrb[0].mxu0 %v508
      %v609 = vpop.f32.mrb[0].mxu0
      %v610 = vadd.f32 0.0, %v609
      %v611 = vpop.f32.mrb[0].mxu0
      %612 = vmatprep.mubr.f32.mxu0 0.0
      %613 = vmatmul.mubr.f32.gmra.mrb[0].mxu0 %v511
      %v614 = vpop.f32.mrb[0].mxu0
      %v615 = vadd.f32 0.0, %v614
      %v616 = vpop.f32.mrb[0].mxu0
      %617 = vdwg.mxu0
      %v626 = vunpack.c.l.b16 %v414
      %v627 = vunpack.c.l.b16 %v415
      %v628 = vunpack.c.l.b16 %v416
      %v629 = vunpack.c.l.b16 %v417
      %v630 = vunpack.c.l.b16 %v418
      %v631 = vunpack.c.l.b16 %v419
      %v632 = vunpack.c.l.b16 %v420
      %v633 = vunpack.c.l.b16 %v421
      %v634 = vpack.c.b16 %v627, %v626
      %v635 = vpack.c.b16 %v629, %v628
      %v636 = vpack.c.b16 %v631, %v630
      %v637 = vpack.c.b16 %v633, %v632
      %v641 = vunpack.c.l.b16 %v430
      %v642 = vunpack.c.l.b16 %v431
      %v643 = vunpack.c.l.b16 %v432
      %v644 = vpack.c.b16 %v642, %v641
      %v645 = vpack.c.b16 %v643, %v643
      %vm647 = vcmask 162816
      %v649 = vsel %vm647, %v634, 0
      %v652 = vsel %vm647, %v635, 0
      %v655 = vsel %vm647, %v636, 0
      %v658 = vsel %vm647, %v637, 0
      %vm660 = vcmask 1041408
      %v662 = vsel %vm660, %v645, 0
      %664 = vmatprep.subr.bf16.mxu0 0
      %665 = vmatpush1.bf16.msra.mxu0 %v644
      %666 = vmatprep.subr.bf16.mxu0 0
      %667 = vmatpush1.bf16.msra.mxu0 %v662
      %668 = vmatprep.subr.bf16.mxu0 0
      %669 = vmatpush1.bf16.msra.mxu0 0
      %670 = vmatprep.subr.bf16.mxu0 0
      %671 = vmatpush1.bf16.msra.mxu0 0
      %672 = vmatprep.subr.bf16.mxu0 0
      %673 = vmatpush1.bf16.msra.mxu0 0
      %674 = vmatprep.subr.bf16.mxu0 0
      %675 = vmatpush1.bf16.msra.mxu0 0
      %676 = vmatprep.subr.bf16.mxu0 0
      %677 = vmatpush1.bf16.msra.mxu0 0
      %678 = vmatprep.subr.bf16.mxu0 0
      %679 = vmatpush1.bf16.msra.mxu0 0
      %680 = vmatprep.subr.bf16.mxu0 0
      %681 = vmatpush1.bf16.msra.mxu0 0
      %682 = vmatprep.subr.bf16.mxu0 0
      %683 = vmatpush1.bf16.msra.mxu0 0
      %684 = vmatprep.subr.bf16.mxu0 0
      %685 = vmatpush1.bf16.msra.mxu0 0
      %686 = vmatprep.subr.bf16.mxu0 0
      %687 = vmatpush1.bf16.msra.mxu0 0
      %688 = vmatprep.subr.bf16.mxu0 0
      %689 = vmatpush1.bf16.msra.mxu0 0
      %690 = vmatprep.subr.bf16.mxu0 0
      %691 = vmatpush1.bf16.msra.mxu0 0
      %692 = vmatprep.subr.bf16.mxu0 0
      %693 = vmatpush1.bf16.msra.mxu0 0
      %694 = vmatprep.subr.bf16.mxu0 0
      %695 = vmatpush1.bf16.msra.mxu0 0
      %696 = vmatprep.mubr.bf16.mxu0 0
      %697 = vmatmul.mubr.bf16.gmra.mrb[0].mxu0 %v649
      %v698 = vpop.f32.mrb[0].mxu0
      %v699 = vadd.f32 %v580, %v698
      %v700 = vpop.f32.mrb[0].mxu0
      %v701 = vpop.f32.mrb[0].mxu0
      %v702 = vadd.f32 %v585, %v701
      %v703 = vpop.f32.mrb[0].mxu0
      %704 = vmatprep.mubr.bf16.mxu0 0
      %705 = vmatmul.mubr.bf16.gmra.mrb[0].mxu0 %v652
      %v706 = vpop.f32.mrb[0].mxu0
      %v707 = vadd.f32 %v590, %v706
      %v708 = vpop.f32.mrb[0].mxu0
      %v709 = vpop.f32.mrb[0].mxu0
      %v710 = vadd.f32 %v595, %v709
      %v711 = vpop.f32.mrb[0].mxu0
      %712 = vmatprep.mubr.bf16.mxu0 0
      %713 = vmatmul.mubr.bf16.gmra.mrb[0].mxu0 %v655
      %v714 = vpop.f32.mrb[0].mxu0
      %v715 = vadd.f32 %v600, %v714
      %v716 = vpop.f32.mrb[0].mxu0
      %v717 = vpop.f32.mrb[0].mxu0
      %v718 = vadd.f32 %v605, %v717
      %v719 = vpop.f32.mrb[0].mxu0
      %720 = vmatprep.mubr.bf16.mxu0 0
      %721 = vmatmul.mubr.bf16.gmra.mrb[0].mxu0 %v658
      %v722 = vpop.f32.mrb[0].mxu0
      %v723 = vadd.f32 %v610, %v722
      %v724 = vpop.f32.mrb[0].mxu0
      %v725 = vpop.f32.mrb[0].mxu0
      %v726 = vadd.f32 %v615, %v725
      %v727 = vpop.f32.mrb[0].mxu0
      %728 = vdwg.mxu0
      %v730 = vsel %vm488, %v468, 0
      %v733 = vsel %vm488, %v469, 0
      %v736 = vsel %vm488, %v470, 0
      %v739 = vsel %vm488, %v471, 0
      %v742 = vsel %vm488, %v472, 0
      %v745 = vsel %vm488, %v473, 0
      %v748 = vsel %vm488, %v474, 0
      %v751 = vsel %vm488, %v475, 0
      %753 = vmatprep.subr.mxu0 0.0
      %754 = vmatpush1.msra.mxu0 %v485
      %755 = vmatprep.subr.mxu0 0.0
      %756 = vmatpush1.msra.mxu0 0.0
      %757 = vmatprep.subr.mxu0 0.0
      %758 = vmatpush1.msra.mxu0 0.0
      %759 = vmatprep.subr.mxu0 0.0
      %760 = vmatpush1.msra.mxu0 0.0
      %761 = vmatprep.subr.mxu0 0.0
      %762 = vmatpush1.msra.mxu0 0.0
      %763 = vmatprep.subr.mxu0 0.0
      %764 = vmatpush1.msra.mxu0 0.0
      %765 = vmatprep.subr.mxu0 0.0
      %766 = vmatpush1.msra.mxu0 0.0
      %767 = vmatprep.subr.mxu0 0.0
      %768 = vmatpush1.msra.mxu0 0.0
      %769 = vmatprep.subr.mxu0 0.0
      %770 = vmatpush1.msra.mxu0 0.0
      %771 = vmatprep.subr.mxu0 0.0
      %772 = vmatpush1.msra.mxu0 0.0
      %773 = vmatprep.subr.mxu0 0.0
      %774 = vmatpush1.msra.mxu0 0.0
      %775 = vmatprep.subr.mxu0 0.0
      %776 = vmatpush1.msra.mxu0 0.0
      %777 = vmatprep.subr.mxu0 0.0
      %778 = vmatpush1.msra.mxu0 0.0
      %779 = vmatprep.subr.mxu0 0.0
      %780 = vmatpush1.msra.mxu0 0.0
      %781 = vmatprep.subr.mxu0 0.0
      %782 = vmatpush1.msra.mxu0 0.0
      %783 = vmatprep.subr.mxu0 0.0
      %784 = vmatpush1.msra.mxu0 0.0
      %785 = vmatprep.subr.mxu0 0.0
      %786 = vmatpush1.msra.mxu0 0.0
      %787 = vmatprep.subr.mxu0 0.0
      %788 = vmatpush1.msra.mxu0 0.0
      %789 = vmatprep.subr.mxu0 0.0
      %790 = vmatpush1.msra.mxu0 0.0
      %791 = vmatprep.subr.mxu0 0.0
      %792 = vmatpush1.msra.mxu0 0.0
      %793 = vmatprep.subr.mxu0 0.0
      %794 = vmatpush1.msra.mxu0 0.0
      %795 = vmatprep.subr.mxu0 0.0
      %796 = vmatpush1.msra.mxu0 0.0
      %797 = vmatprep.subr.mxu0 0.0
      %798 = vmatpush1.msra.mxu0 0.0
      %799 = vmatprep.subr.mxu0 0.0
      %800 = vmatpush1.msra.mxu0 0.0
      %801 = vmatprep.subr.mxu0 0.0
      %802 = vmatpush1.msra.mxu0 0.0
      %803 = vmatprep.subr.mxu0 0.0
      %804 = vmatpush1.msra.mxu0 0.0
      %805 = vmatprep.subr.mxu0 0.0
      %806 = vmatpush1.msra.mxu0 0.0
      %807 = vmatprep.subr.mxu0 0.0
      %808 = vmatpush1.msra.mxu0 0.0
      %809 = vmatprep.subr.mxu0 0.0
      %810 = vmatpush1.msra.mxu0 0.0
      %811 = vmatprep.subr.mxu0 0.0
      %812 = vmatpush1.msra.mxu0 0.0
      %813 = vmatprep.subr.mxu0 0.0
      %814 = vmatpush1.msra.mxu0 0.0
      %815 = vmatprep.subr.mxu0 0.0
      %816 = vmatpush1.msra.mxu0 0.0
      %817 = vmatprep.mubr.f32.mxu0 0.0
      %818 = vmatmul.mubr.f32.gmra.mrb[0].mxu0 %v730
      %v819 = vpop.f32.mrb[0].mxu0
      %v820 = vadd.f32 0.0, %v819
      %v821 = vpop.f32.mrb[0].mxu0
      %822 = vmatprep.mubr.f32.mxu0 0.0
      %823 = vmatmul.mubr.f32.gmra.mrb[0].mxu0 %v733
      %v824 = vpop.f32.mrb[0].mxu0
      %v825 = vadd.f32 0.0, %v824
      %v826 = vpop.f32.mrb[0].mxu0
      %827 = vmatprep.mubr.f32.mxu0 0.0
      %828 = vmatmul.mubr.f32.gmra.mrb[0].mxu0 %v736
      %v829 = vpop.f32.mrb[0].mxu0
      %v830 = vadd.f32 0.0, %v829
      %v831 = vpop.f32.mrb[0].mxu0
      %832 = vmatprep.mubr.f32.mxu0 0.0
      %833 = vmatmul.mubr.f32.gmra.mrb[0].mxu0 %v739
      %v834 = vpop.f32.mrb[0].mxu0
      %v835 = vadd.f32 0.0, %v834
      %v836 = vpop.f32.mrb[0].mxu0
      %837 = vmatprep.mubr.f32.mxu0 0.0
      %838 = vmatmul.mubr.f32.gmra.mrb[0].mxu0 %v742
      %v839 = vpop.f32.mrb[0].mxu0
      %v840 = vadd.f32 0.0, %v839
      %v841 = vpop.f32.mrb[0].mxu0
      %842 = vmatprep.mubr.f32.mxu0 0.0
      %843 = vmatmul.mubr.f32.gmra.mrb[0].mxu0 %v745
      %v844 = vpop.f32.mrb[0].mxu0
      %v845 = vadd.f32 0.0, %v844
      %v846 = vpop.f32.mrb[0].mxu0
      %847 = vmatprep.mubr.f32.mxu0 0.0
      %848 = vmatmul.mubr.f32.gmra.mrb[0].mxu0 %v748
      %v849 = vpop.f32.mrb[0].mxu0
      %v850 = vadd.f32 0.0, %v849
      %v851 = vpop.f32.mrb[0].mxu0
      %852 = vmatprep.mubr.f32.mxu0 0.0
      %853 = vmatmul.mubr.f32.gmra.mrb[0].mxu0 %v751
      %v854 = vpop.f32.mrb[0].mxu0
      %v855 = vadd.f32 0.0, %v854
      %v856 = vpop.f32.mrb[0].mxu0
      %857 = vdwg.mxu0
      %v858 = vadd.f32 %v699, %v820
      %v859 = vadd.f32 %v702, %v825
      %v860 = vadd.f32 %v707, %v830
      %v861 = vadd.f32 %v710, %v835
      %v862 = vadd.f32 %v715, %v840
      %v863 = vadd.f32 %v718, %v845
      %v864 = vadd.f32 %v723, %v850
      %v865 = vadd.f32 %v726, %v855
      %vm866 = vcmask 523264
      %v867 = vsel %vm866, %v858, -inf
      %868 = vmax.xlane.f32.xlu0 %v867
      %v869 = vpop.xlane.xlu0 %868
      %v870 = vsel %vm866, %v859, -inf
      %871 = vmax.xlane.f32.xlu0 %v870
      %v872 = vpop.xlane.xlu0 %871
      %v873 = vsel %vm866, %v860, -inf
      %874 = vmax.xlane.f32.xlu0 %v873
      %v875 = vpop.xlane.xlu0 %874
      %v876 = vsel %vm866, %v861, -inf
      %877 = vmax.xlane.f32.xlu0 %v876
      %v878 = vpop.xlane.xlu0 %877
      %v879 = vsel %vm866, %v862, -inf
      %880 = vmax.xlane.f32.xlu0 %v879
      %v881 = vpop.xlane.xlu0 %880
      %v882 = vsel %vm866, %v863, -inf
      %883 = vmax.xlane.f32.xlu0 %v882
      %v884 = vpop.xlane.xlu0 %883
      %v885 = vsel %vm866, %v864, -inf
      %886 = vmax.xlane.f32.xlu0 %v885
      %v887 = vpop.xlane.xlu0 %886
      %v888 = vsel %vm866, %v865, -inf
      %889 = vmax.xlane.f32.xlu0 %v888
      %v890 = vpop.xlane.xlu0 %889
      %v891 = vsub.f32 %v858, %v869
      %v892 = vsub.f32 %v859, %v872
      %v893 = vsub.f32 %v860, %v875
      %v894 = vsub.f32 %v861, %v878
      %v895 = vsub.f32 %v862, %v881
      %v896 = vsub.f32 %v863, %v884
      %v897 = vsub.f32 %v864, %v887
      %v898 = vsub.f32 %v865, %v890
      %v899 = vmul.f32 %v891, 1.442695
      %v900 = vpow.pop %v899
      %v901 = vmul.f32 %v892, 1.442695
      %v902 = vpow.pop %v901
      %v903 = vmul.f32 %v893, 1.442695
      %v904 = vpow.pop %v903
      %v905 = vmul.f32 %v894, 1.442695
      %v906 = vpow.pop %v905
      %v907 = vmul.f32 %v895, 1.442695
      %v908 = vpow.pop %v907
      %v909 = vmul.f32 %v896, 1.442695
      %v910 = vpow.pop %v909
      %v911 = vmul.f32 %v897, 1.442695
      %v912 = vpow.pop %v911
      %v913 = vmul.f32 %v898, 1.442695
      %v914 = vpow.pop %v913
      %v915 = vsel %vm866, %v900, 0.0
      %916 = vadd.xlane.f32.xlu0 %v915
      %v917 = vpop.xlane.xlu0 %916
      %v918 = vsel %vm866, %v902, 0.0
      %919 = vadd.xlane.f32.xlu0 %v918
      %v920 = vpop.xlane.xlu0 %919
      %v921 = vsel %vm866, %v904, 0.0
      %922 = vadd.xlane.f32.xlu0 %v921
      %v923 = vpop.xlane.xlu0 %922
      %v924 = vsel %vm866, %v906, 0.0
      %925 = vadd.xlane.f32.xlu0 %v924
      %v926 = vpop.xlane.xlu0 %925
      %v927 = vsel %vm866, %v908, 0.0
      %928 = vadd.xlane.f32.xlu0 %v927
      %v929 = vpop.xlane.xlu0 %928
      %v930 = vsel %vm866, %v910, 0.0
      %931 = vadd.xlane.f32.xlu0 %v930
      %v932 = vpop.xlane.xlu0 %931
      %v933 = vsel %vm866, %v912, 0.0
      %934 = vadd.xlane.f32.xlu0 %v933
      %v935 = vpop.xlane.xlu0 %934
      %v936 = vsel %vm866, %v914, 0.0
      %937 = vadd.xlane.f32.xlu0 %v936
      %v938 = vpop.xlane.xlu0 %937
      %v939 = vrcp.pop %v917
      %v940 = vrcp.pop %v920
      %v941 = vrcp.pop %v923
      %v942 = vrcp.pop %v926
      %v943 = vrcp.pop %v929
      %v944 = vrcp.pop %v932
      %v945 = vrcp.pop %v935
      %v946 = vrcp.pop %v938
      %v947 = vmul.f32 %v900, %v939
      %v948 = vmul.f32 %v902, %v940
      %v949 = vmul.f32 %v904, %v941
      %v950 = vmul.f32 %v906, %v942
      %v951 = vmul.f32 %v908, %v943
      %v952 = vmul.f32 %v910, %v944
      %v953 = vmul.f32 %v912, %v945
      %v954 = vmul.f32 %v914, %v946
      %v955 = vpack.c.bf16 %v948, %v947
      %v956 = vpack.c.bf16 %v950, %v949
      %v957 = vpack.c.bf16 %v952, %v951
      %v958 = vpack.c.bf16 %v954, %v953
      %v967 = vunpack.c.l.b16 %v436
      %v968 = vunpack.c.l.b16 %v437
      %v969 = vunpack.c.l.b16 %v438
      %v970 = vunpack.c.l.b16 %v439
      %v971 = vunpack.c.l.b16 %v440
      %v972 = vunpack.c.l.b16 %v441
      %v973 = vunpack.c.l.b16 %v442
      %v974 = vunpack.c.l.b16 %v443
      %v975 = vpack.c.b16 %v968, %v967
      %v976 = vpack.c.b16 %v970, %v969
      %v977 = vpack.c.b16 %v972, %v971
      %v978 = vpack.c.b16 %v974, %v973
      %v984 = vsel %vm866, %v955, 0
      %v987 = vsel %vm866, %v956, 0
      %v990 = vsel %vm866, %v957, 0
      %v993 = vsel %vm866, %v958, 0
      %995 = vmatprep.subr.bf16.mxu0 0
      %996 = vmatpush1.bf16.msra.mxu0 %v975
      %997 = vmatprep.subr.bf16.mxu0 0
      %998 = vmatpush1.bf16.msra.mxu0 %v976
      %999 = vmatprep.subr.bf16.mxu0 0
      %1000 = vmatpush1.bf16.msra.mxu0 %v977
      %1001 = vmatprep.subr.bf16.mxu0 0
      %1002 = vmatpush1.bf16.msra.mxu0 %v978
      %1003 = vmatprep.subr.bf16.mxu0 0
      %1004 = vmatpush1.bf16.msra.mxu0 0
      %1005 = vmatprep.subr.bf16.mxu0 0
      %1006 = vmatpush1.bf16.msra.mxu0 0
      %1007 = vmatprep.subr.bf16.mxu0 0
      %1008 = vmatpush1.bf16.msra.mxu0 0
      %1009 = vmatprep.subr.bf16.mxu0 0
      %1010 = vmatpush1.bf16.msra.mxu0 0
      %1011 = vmatprep.subr.bf16.mxu0 0
      %1012 = vmatpush1.bf16.msra.mxu0 0
      %1013 = vmatprep.subr.bf16.mxu0 0
      %1014 = vmatpush1.bf16.msra.mxu0 0
      %1015 = vmatprep.subr.bf16.mxu0 0
      %1016 = vmatpush1.bf16.msra.mxu0 0
      %1017 = vmatprep.subr.bf16.mxu0 0
      %1018 = vmatpush1.bf16.msra.mxu0 0
      %1019 = vmatprep.subr.bf16.mxu0 0
      %1020 = vmatpush1.bf16.msra.mxu0 0
      %1021 = vmatprep.subr.bf16.mxu0 0
      %1022 = vmatpush1.bf16.msra.mxu0 0
      %1023 = vmatprep.subr.bf16.mxu0 0
      %1024 = vmatpush1.bf16.msra.mxu0 0
      %1025 = vmatprep.subr.bf16.mxu0 0
      %1026 = vmatpush1.bf16.msra.mxu0 0
      %1027 = vmatprep.mubr.bf16.mxu0 0
      %1028 = vmatmul.mubr.bf16.gmra.mrb[0].mxu0 %v984
      %v1029 = vpop.f32.mrb[0].mxu0
      %v1030 = vadd.f32 0.0, %v1029
      %v1031 = vpop.f32.mrb[0].mxu0
      %v1032 = vpop.f32.mrb[0].mxu0
      %v1033 = vadd.f32 0.0, %v1032
      %v1034 = vpop.f32.mrb[0].mxu0
      %1035 = vmatprep.mubr.bf16.mxu0 0
      %1036 = vmatmul.mubr.bf16.gmra.mrb[0].mxu0 %v987
      %v1037 = vpop.f32.mrb[0].mxu0
      %v1038 = vadd.f32 0.0, %v1037
      %v1039 = vpop.f32.mrb[0].mxu0
      %v1040 = vpop.f32.mrb[0].mxu0
      %v1041 = vadd.f32 0.0, %v1040
      %v1042 = vpop.f32.mrb[0].mxu0
      %1043 = vmatprep.mubr.bf16.mxu0 0
      %1044 = vmatmul.mubr.bf16.gmra.mrb[0].mxu0 %v990
      %v1045 = vpop.f32.mrb[0].mxu0
      %v1046 = vadd.f32 0.0, %v1045
      %v1047 = vpop.f32.mrb[0].mxu0
      %v1048 = vpop.f32.mrb[0].mxu0
      %v1049 = vadd.f32 0.0, %v1048
      %v1050 = vpop.f32.mrb[0].mxu0
      %1051 = vmatprep.mubr.bf16.mxu0 0
      %1052 = vmatmul.mubr.bf16.gmra.mrb[0].mxu0 %v993
      %v1053 = vpop.f32.mrb[0].mxu0
      %v1054 = vadd.f32 0.0, %v1053
      %v1055 = vpop.f32.mrb[0].mxu0
      %v1056 = vpop.f32.mrb[0].mxu0
      %v1057 = vadd.f32 0.0, %v1056
      %v1058 = vpop.f32.mrb[0].mxu0
      %1059 = vdwg.mxu0
      %v1060 = vunpack.c.l.bf16 %v486
      %1062 = vset.pattern.permute.xlu0 0
      %1063 = vperm.xlu0 %1062, %v1030
      %v1064 = vpop.permute.xlu0 %1063
      %1067 = vset.pattern.permute.xlu0 0
      %1068 = vperm.xlu0 %1067, %v1033
      %v1069 = vpop.permute.xlu0 %1068
      %1072 = vset.pattern.permute.xlu0 0
      %1073 = vperm.xlu0 %1072, %v1038
      %v1074 = vpop.permute.xlu0 %1073
      %1077 = vset.pattern.permute.xlu0 0
      %1078 = vperm.xlu0 %1077, %v1041
      %v1079 = vpop.permute.xlu0 %1078
      %1082 = vset.pattern.permute.xlu0 0
      %1083 = vperm.xlu0 %1082, %v1046
      %v1084 = vpop.permute.xlu0 %1083
      %1087 = vset.pattern.permute.xlu0 0
      %1088 = vperm.xlu0 %1087, %v1049
      %v1089 = vpop.permute.xlu0 %1088
      %1092 = vset.pattern.permute.xlu0 0
      %1093 = vperm.xlu0 %1092, %v1054
      %v1094 = vpop.permute.xlu0 %1093
      %1097 = vset.pattern.permute.xlu0 0
      %1098 = vperm.xlu0 %1097, %v1057
      %v1099 = vpop.permute.xlu0 %1098
      %v1101 = vlaneseq
      %v1102 = vshrl.u32 %v1101, 7
      %v1103 = vsub.s32 0, %v1102
      %v1104 = vrot.slane %v1060, %v1103
      %v1105 = vmul.f32 %v1064, %v1104
      %v1106 = vmul.f32 %v1069, %v1104
      %v1107 = vmul.f32 %v1074, %v1104
      %v1108 = vmul.f32 %v1079, %v1104
      %v1109 = vmul.f32 %v1084, %v1104
      %v1110 = vmul.f32 %v1089, %v1104
      %v1111 = vmul.f32 %v1094, %v1104
      %v1112 = vmul.f32 %v1099, %v1104
      %v1113 = vadd.f32 %v1105, 0.0
      %v1114 = vadd.f32 %v1106, 0.0
      %v1115 = vadd.f32 %v1107, 0.0
      %v1116 = vadd.f32 %v1108, 0.0
      %v1117 = vadd.f32 %v1109, 0.0
      %v1118 = vadd.f32 %v1110, 0.0
      %v1119 = vadd.f32 %v1111, 0.0
      %v1120 = vadd.f32 %v1112, 0.0
      %1121 = vset.pattern.permute.xlu0 1
      %1122 = vperm.xlu0 %1121, %v1030
      %v1123 = vpop.permute.xlu0 %1122
      %1125 = vset.pattern.permute.xlu0 1
      %1126 = vperm.xlu0 %1125, %v1033
      %v1127 = vpop.permute.xlu0 %1126
      %1129 = vset.pattern.permute.xlu0 1
      %1130 = vperm.xlu0 %1129, %v1038
      %v1131 = vpop.permute.xlu0 %1130
      %1133 = vset.pattern.permute.xlu0 1
      %1134 = vperm.xlu0 %1133, %v1041
      %v1135 = vpop.permute.xlu0 %1134
      %1137 = vset.pattern.permute.xlu0 1
      %1138 = vperm.xlu0 %1137, %v1046
      %v1139 = vpop.permute.xlu0 %1138
      %1141 = vset.pattern.permute.xlu0 1
      %1142 = vperm.xlu0 %1141, %v1049
      %v1143 = vpop.permute.xlu0 %1142
      %1145 = vset.pattern.permute.xlu0 1
      %1146 = vperm.xlu0 %1145, %v1054
      %v1147 = vpop.permute.xlu0 %1146
      %1149 = vset.pattern.permute.xlu0 1
      %1150 = vperm.xlu0 %1149, %v1057
      %v1151 = vpop.permute.xlu0 %1150
      %v1153 = vlaneseq
      %v1154 = vshrl.u32 %v1153, 7
      %v1155 = vsub.s32 1, %v1154
      %v1156 = vrot.slane %v1060, %v1155
      %v1157 = vmul.f32 %v1123, %v1156
      %v1158 = vmul.f32 %v1127, %v1156
      %v1159 = vmul.f32 %v1131, %v1156
      %v1160 = vmul.f32 %v1135, %v1156
      %v1161 = vmul.f32 %v1139, %v1156
      %v1162 = vmul.f32 %v1143, %v1156
      %v1163 = vmul.f32 %v1147, %v1156
      %v1164 = vmul.f32 %v1151, %v1156
      %v1165 = vadd.f32 %v1113, %v1157
      %v1166 = vadd.f32 %v1114, %v1158
      %v1167 = vadd.f32 %v1115, %v1159
      %v1168 = vadd.f32 %v1116, %v1160
      %v1169 = vadd.f32 %v1117, %v1161
      %v1170 = vadd.f32 %v1118, %v1162
      %v1171 = vadd.f32 %v1119, %v1163
      %v1172 = vadd.f32 %v1120, %v1164
      %v1174 = vsel %vm488, %v460, 0
      %v1177 = vsel %vm488, %v461, 0
      %v1180 = vsel %vm488, %v462, 0
      %v1183 = vsel %vm488, %v463, 0
      %v1186 = vsel %vm488, %v464, 0
      %v1189 = vsel %vm488, %v465, 0
      %v1192 = vsel %vm488, %v466, 0
      %v1195 = vsel %vm488, %v467, 0
      %1197 = vmatprep.subr.mxu0 0.0
      %1198 = vmatpush1.msra.mxu0 %v484
      %1199 = vmatprep.subr.mxu0 0.0
      %1200 = vmatpush1.msra.mxu0 0.0
      %1201 = vmatprep.subr.mxu0 0.0
      %1202 = vmatpush1.msra.mxu0 0.0
      %1203 = vmatprep.subr.mxu0 0.0
      %1204 = vmatpush1.msra.mxu0 0.0
      %1205 = vmatprep.subr.mxu0 0.0
      %1206 = vmatpush1.msra.mxu0 0.0
      %1207 = vmatprep.subr.mxu0 0.0
      %1208 = vmatpush1.msra.mxu0 0.0
      %1209 = vmatprep.subr.mxu0 0.0
      %1210 = vmatpush1.msra.mxu0 0.0
      %1211 = vmatprep.subr.mxu0 0.0
      %1212 = vmatpush1.msra.mxu0 0.0
      %1213 = vmatprep.subr.mxu0 0.0
      %1214 = vmatpush1.msra.mxu0 0.0
      %1215 = vmatprep.subr.mxu0 0.0
      %1216 = vmatpush1.msra.mxu0 0.0
      %1217 = vmatprep.subr.mxu0 0.0
      %1218 = vmatpush1.msra.mxu0 0.0
      %1219 = vmatprep.subr.mxu0 0.0
      %1220 = vmatpush1.msra.mxu0 0.0
      %1221 = vmatprep.subr.mxu0 0.0
      %1222 = vmatpush1.msra.mxu0 0.0
      %1223 = vmatprep.subr.mxu0 0.0
      %1224 = vmatpush1.msra.mxu0 0.0
      %1225 = vmatprep.subr.mxu0 0.0
      %1226 = vmatpush1.msra.mxu0 0.0
      %1227 = vmatprep.subr.mxu0 0.0
      %1228 = vmatpush1.msra.mxu0 0.0
      %1229 = vmatprep.subr.mxu0 0.0
      %1230 = vmatpush1.msra.mxu0 0.0
      %1231 = vmatprep.subr.mxu0 0.0
      %1232 = vmatpush1.msra.mxu0 0.0
      %1233 = vmatprep.subr.mxu0 0.0
      %1234 = vmatpush1.msra.mxu0 0.0
      %1235 = vmatprep.subr.mxu0 0.0
      %1236 = vmatpush1.msra.mxu0 0.0
      %1237 = vmatprep.subr.mxu0 0.0
      %1238 = vmatpush1.msra.mxu0 0.0
      %1239 = vmatprep.subr.mxu0 0.0
      %1240 = vmatpush1.msra.mxu0 0.0
      %1241 = vmatprep.subr.mxu0 0.0
      %1242 = vmatpush1.msra.mxu0 0.0
      %1243 = vmatprep.subr.mxu0 0.0
      %1244 = vmatpush1.msra.mxu0 0.0
      %1245 = vmatprep.subr.mxu0 0.0
      %1246 = vmatpush1.msra.mxu0 0.0
      %1247 = vmatprep.subr.mxu0 0.0
      %1248 = vmatpush1.msra.mxu0 0.0
      %1249 = vmatprep.subr.mxu0 0.0
      %1250 = vmatpush1.msra.mxu0 0.0
      %1251 = vmatprep.subr.mxu0 0.0
      %1252 = vmatpush1.msra.mxu0 0.0
      %1253 = vmatprep.subr.mxu0 0.0
      %1254 = vmatpush1.msra.mxu0 0.0
      %1255 = vmatprep.subr.mxu0 0.0
      %1256 = vmatpush1.msra.mxu0 0.0
      %1257 = vmatprep.subr.mxu0 0.0
      %1258 = vmatpush1.msra.mxu0 0.0
      %1259 = vmatprep.subr.mxu0 0.0
      %1260 = vmatpush1.msra.mxu0 0.0
      %1261 = vmatprep.mubr.f32.mxu0 0.0
      %1262 = vmatmul.mubr.f32.gmra.mrb[0].mxu0 %v1174
      %v1263 = vpop.f32.mrb[0].mxu0
      %v1264 = vadd.f32 0.0, %v1263
      %v1265 = vpop.f32.mrb[0].mxu0
      %1266 = vmatprep.mubr.f32.mxu0 0.0
      %1267 = vmatmul.mubr.f32.gmra.mrb[0].mxu0 %v1177
      %v1268 = vpop.f32.mrb[0].mxu0
      %v1269 = vadd.f32 0.0, %v1268
      %v1270 = vpop.f32.mrb[0].mxu0
      %1271 = vmatprep.mubr.f32.mxu0 0.0
      %1272 = vmatmul.mubr.f32.gmra.mrb[0].mxu0 %v1180
      %v1273 = vpop.f32.mrb[0].mxu0
      %v1274 = vadd.f32 0.0, %v1273
      %v1275 = vpop.f32.mrb[0].mxu0
      %1276 = vmatprep.mubr.f32.mxu0 0.0
      %1277 = vmatmul.mubr.f32.gmra.mrb[0].mxu0 %v1183
      %v1278 = vpop.f32.mrb[0].mxu0
      %v1279 = vadd.f32 0.0, %v1278
      %v1280 = vpop.f32.mrb[0].mxu0
      %1281 = vmatprep.mubr.f32.mxu0 0.0
      %1282 = vmatmul.mubr.f32.gmra.mrb[0].mxu0 %v1186
      %v1283 = vpop.f32.mrb[0].mxu0
      %v1284 = vadd.f32 0.0, %v1283
      %v1285 = vpop.f32.mrb[0].mxu0
      %1286 = vmatprep.mubr.f32.mxu0 0.0
      %1287 = vmatmul.mubr.f32.gmra.mrb[0].mxu0 %v1189
      %v1288 = vpop.f32.mrb[0].mxu0
      %v1289 = vadd.f32 0.0, %v1288
      %v1290 = vpop.f32.mrb[0].mxu0
      %1291 = vmatprep.mubr.f32.mxu0 0.0
      %1292 = vmatmul.mubr.f32.gmra.mrb[0].mxu0 %v1192
      %v1293 = vpop.f32.mrb[0].mxu0
      %v1294 = vadd.f32 0.0, %v1293
      %v1295 = vpop.f32.mrb[0].mxu0
      %1296 = vmatprep.mubr.f32.mxu0 0.0
      %1297 = vmatmul.mubr.f32.gmra.mrb[0].mxu0 %v1195
      %v1298 = vpop.f32.mrb[0].mxu0
      %v1299 = vadd.f32 0.0, %v1298
      %v1300 = vpop.f32.mrb[0].mxu0
      %1301 = vdwg.mxu0
      %v1310 = vunpack.c.l.b16 %v422
      %v1311 = vunpack.c.l.b16 %v423
      %v1312 = vunpack.c.l.b16 %v424
      %v1313 = vunpack.c.l.b16 %v425
      %v1314 = vunpack.c.l.b16 %v426
      %v1315 = vunpack.c.l.b16 %v427
      %v1316 = vunpack.c.l.b16 %v428
      %v1317 = vunpack.c.l.b16 %v429
      %v1318 = vpack.c.b16 %v1311, %v1310
      %v1319 = vpack.c.b16 %v1313, %v1312
      %v1320 = vpack.c.b16 %v1315, %v1314
      %v1321 = vpack.c.b16 %v1317, %v1316
      %v1325 = vunpack.c.l.b16 %v433
      %v1326 = vunpack.c.l.b16 %v434
      %v1327 = vunpack.c.l.b16 %v435
      %v1328 = vpack.c.b16 %v1326, %v1325
      %v1329 = vpack.c.b16 %v1327, %v1327
      %v1332 = vsel %vm647, %v1318, 0
      %v1335 = vsel %vm647, %v1319, 0
      %v1338 = vsel %vm647, %v1320, 0
      %v1341 = vsel %vm647, %v1321, 0
      %v1344 = vsel %vm660, %v1329, 0
      %1346 = vmatprep.subr.bf16.mxu0 0
      %1347 = vmatpush1.bf16.msra.mxu0 %v1328
      %1348 = vmatprep.subr.bf16.mxu0 0
      %1349 = vmatpush1.bf16.msra.mxu0 %v1344
      %1350 = vmatprep.subr.bf16.mxu0 0
      %1351 = vmatpush1.bf16.msra.mxu0 0
      %1352 = vmatprep.subr.bf16.mxu0 0
      %1353 = vmatpush1.bf16.msra.mxu0 0
      %1354 = vmatprep.subr.bf16.mxu0 0
      %1355 = vmatpush1.bf16.msra.mxu0 0
      %1356 = vmatprep.subr.bf16.mxu0 0
      %1357 = vmatpush1.bf16.msra.mxu0 0
      %1358 = vmatprep.subr.bf16.mxu0 0
      %1359 = vmatpush1.bf16.msra.mxu0 0
      %1360 = vmatprep.subr.bf16.mxu0 0
      %1361 = vmatpush1.bf16.msra.mxu0 0
      %1362 = vmatprep.subr.bf16.mxu0 0
      %1363 = vmatpush1.bf16.msra.mxu0 0
      %1364 = vmatprep.subr.bf16.mxu0 0
      %1365 = vmatpush1.bf16.msra.mxu0 0
      %1366 = vmatprep.subr.bf16.mxu0 0
      %1367 = vmatpush1.bf16.msra.mxu0 0
      %1368 = vmatprep.subr.bf16.mxu0 0
      %1369 = vmatpush1.bf16.msra.mxu0 0
      %1370 = vmatprep.subr.bf16.mxu0 0
      %1371 = vmatpush1.bf16.msra.mxu0 0
      %1372 = vmatprep.subr.bf16.mxu0 0
      %1373 = vmatpush1.bf16.msra.mxu0 0
      %1374 = vmatprep.subr.bf16.mxu0 0
      %1375 = vmatpush1.bf16.msra.mxu0 0
      %1376 = vmatprep.subr.bf16.mxu0 0
      %1377 = vmatpush1.bf16.msra.mxu0 0
      %1378 = vmatprep.mubr.bf16.mxu0 0
      %1379 = vmatmul.mubr.bf16.gmra.mrb[0].mxu0 %v1332
      %v1380 = vpop.f32.mrb[0].mxu0
      %v1381 = vadd.f32 %v1264, %v1380
      %v1382 = vpop.f32.mrb[0].mxu0
      %v1383 = vpop.f32.mrb[0].mxu0
      %v1384 = vadd.f32 %v1269, %v1383
      %v1385 = vpop.f32.mrb[0].mxu0
      %1386 = vmatprep.mubr.bf16.mxu0 0
      %1387 = vmatmul.mubr.bf16.gmra.mrb[0].mxu0 %v1335
      %v1388 = vpop.f32.mrb[0].mxu0
      %v1389 = vadd.f32 %v1274, %v1388
      %v1390 = vpop.f32.mrb[0].mxu0
      %v1391 = vpop.f32.mrb[0].mxu0
      %v1392 = vadd.f32 %v1279, %v1391
      %v1393 = vpop.f32.mrb[0].mxu0
      %1394 = vmatprep.mubr.bf16.mxu0 0
      %1395 = vmatmul.mubr.bf16.gmra.mrb[0].mxu0 %v1338
      %v1396 = vpop.f32.mrb[0].mxu0
      %v1397 = vadd.f32 %v1284, %v1396
      %v1398 = vpop.f32.mrb[0].mxu0
      %v1399 = vpop.f32.mrb[0].mxu0
      %v1400 = vadd.f32 %v1289, %v1399
      %v1401 = vpop.f32.mrb[0].mxu0
      %1402 = vmatprep.mubr.bf16.mxu0 0
      %1403 = vmatmul.mubr.bf16.gmra.mrb[0].mxu0 %v1341
      %v1404 = vpop.f32.mrb[0].mxu0
      %v1405 = vadd.f32 %v1294, %v1404
      %v1406 = vpop.f32.mrb[0].mxu0
      %v1407 = vpop.f32.mrb[0].mxu0
      %v1408 = vadd.f32 %v1299, %v1407
      %v1409 = vpop.f32.mrb[0].mxu0
      %1410 = vdwg.mxu0
      %v1412 = vsel %vm488, %v476, 0
      %v1415 = vsel %vm488, %v477, 0
      %v1418 = vsel %vm488, %v478, 0
      %v1421 = vsel %vm488, %v479, 0
      %v1424 = vsel %vm488, %v480, 0
      %v1427 = vsel %vm488, %v481, 0
      %v1430 = vsel %vm488, %v482, 0
      %v1433 = vsel %vm488, %v483, 0
      %1435 = vmatprep.subr.mxu0 0.0
      %1436 = vmatpush1.msra.mxu0 %v485
      %1437 = vmatprep.subr.mxu0 0.0
      %1438 = vmatpush1.msra.mxu0 0.0
      %1439 = vmatprep.subr.mxu0 0.0
      %1440 = vmatpush1.msra.mxu0 0.0
      %1441 = vmatprep.subr.mxu0 0.0
      %1442 = vmatpush1.msra.mxu0 0.0
      %1443 = vmatprep.subr.mxu0 0.0
      %1444 = vmatpush1.msra.mxu0 0.0
      %1445 = vmatprep.subr.mxu0 0.0
      %1446 = vmatpush1.msra.mxu0 0.0
      %1447 = vmatprep.subr.mxu0 0.0
      %1448 = vmatpush1.msra.mxu0 0.0
      %1449 = vmatprep.subr.mxu0 0.0
      %1450 = vmatpush1.msra.mxu0 0.0
      %1451 = vmatprep.subr.mxu0 0.0
      %1452 = vmatpush1.msra.mxu0 0.0
      %1453 = vmatprep.subr.mxu0 0.0
      %1454 = vmatpush1.msra.mxu0 0.0
      %1455 = vmatprep.subr.mxu0 0.0
      %1456 = vmatpush1.msra.mxu0 0.0
      %1457 = vmatprep.subr.mxu0 0.0
      %1458 = vmatpush1.msra.mxu0 0.0
      %1459 = vmatprep.subr.mxu0 0.0
      %1460 = vmatpush1.msra.mxu0 0.0
      %1461 = vmatprep.subr.mxu0 0.0
      %1462 = vmatpush1.msra.mxu0 0.0
      %1463 = vmatprep.subr.mxu0 0.0
      %1464 = vmatpush1.msra.mxu0 0.0
      %1465 = vmatprep.subr.mxu0 0.0
      %1466 = vmatpush1.msra.mxu0 0.0
      %1467 = vmatprep.subr.mxu0 0.0
      %1468 = vmatpush1.msra.mxu0 0.0
      %1469 = vmatprep.subr.mxu0 0.0
      %1470 = vmatpush1.msra.mxu0 0.0
      %1471 = vmatprep.subr.mxu0 0.0
      %1472 = vmatpush1.msra.mxu0 0.0
      %1473 = vmatprep.subr.mxu0 0.0
      %1474 = vmatpush1.msra.mxu0 0.0
      %1475 = vmatprep.subr.mxu0 0.0
      %1476 = vmatpush1.msra.mxu0 0.0
      %1477 = vmatprep.subr.mxu0 0.0
      %1478 = vmatpush1.msra.mxu0 0.0
      %1479 = vmatprep.subr.mxu0 0.0
      %1480 = vmatpush1.msra.mxu0 0.0
      %1481 = vmatprep.subr.mxu0 0.0
      %1482 = vmatpush1.msra.mxu0 0.0
      %1483 = vmatprep.subr.mxu0 0.0
      %1484 = vmatpush1.msra.mxu0 0.0
      %1485 = vmatprep.subr.mxu0 0.0
      %1486 = vmatpush1.msra.mxu0 0.0
      %1487 = vmatprep.subr.mxu0 0.0
      %1488 = vmatpush1.msra.mxu0 0.0
      %1489 = vmatprep.subr.mxu0 0.0
      %1490 = vmatpush1.msra.mxu0 0.0
      %1491 = vmatprep.subr.mxu0 0.0
      %1492 = vmatpush1.msra.mxu0 0.0
      %1493 = vmatprep.subr.mxu0 0.0
      %1494 = vmatpush1.msra.mxu0 0.0
      %1495 = vmatprep.subr.mxu0 0.0
      %1496 = vmatpush1.msra.mxu0 0.0
      %1497 = vmatprep.subr.mxu0 0.0
      %1498 = vmatpush1.msra.mxu0 0.0
      %1499 = vmatprep.mubr.f32.mxu0 0.0
      %1500 = vmatmul.mubr.f32.gmra.mrb[0].mxu0 %v1412
      %v1501 = vpop.f32.mrb[0].mxu0
      %v1502 = vadd.f32 0.0, %v1501
      %v1503 = vpop.f32.mrb[0].mxu0
      %1504 = vmatprep.mubr.f32.mxu0 0.0
      %1505 = vmatmul.mubr.f32.gmra.mrb[0].mxu0 %v1415
      %v1506 = vpop.f32.mrb[0].mxu0
      %v1507 = vadd.f32 0.0, %v1506
      %v1508 = vpop.f32.mrb[0].mxu0
      %1509 = vmatprep.mubr.f32.mxu0 0.0
      %1510 = vmatmul.mubr.f32.gmra.mrb[0].mxu0 %v1418
      %v1511 = vpop.f32.mrb[0].mxu0
      %v1512 = vadd.f32 0.0, %v1511
      %v1513 = vpop.f32.mrb[0].mxu0
      %1514 = vmatprep.mubr.f32.mxu0 0.0
      %1515 = vmatmul.mubr.f32.gmra.mrb[0].mxu0 %v1421
      %v1516 = vpop.f32.mrb[0].mxu0
      %v1517 = vadd.f32 0.0, %v1516
      %v1518 = vpop.f32.mrb[0].mxu0
      %1519 = vmatprep.mubr.f32.mxu0 0.0
      %1520 = vmatmul.mubr.f32.gmra.mrb[0].mxu0 %v1424
      %v1521 = vpop.f32.mrb[0].mxu0
      %v1522 = vadd.f32 0.0, %v1521
      %v1523 = vpop.f32.mrb[0].mxu0
      %1524 = vmatprep.mubr.f32.mxu0 0.0
      %1525 = vmatmul.mubr.f32.gmra.mrb[0].mxu0 %v1427
      %v1526 = vpop.f32.mrb[0].mxu0
      %v1527 = vadd.f32 0.0, %v1526
      %v1528 = vpop.f32.mrb[0].mxu0
      %1529 = vmatprep.mubr.f32.mxu0 0.0
      %1530 = vmatmul.mubr.f32.gmra.mrb[0].mxu0 %v1430
      %v1531 = vpop.f32.mrb[0].mxu0
      %v1532 = vadd.f32 0.0, %v1531
      %v1533 = vpop.f32.mrb[0].mxu0
      %1534 = vmatprep.mubr.f32.mxu0 0.0
      %1535 = vmatmul.mubr.f32.gmra.mrb[0].mxu0 %v1433
      %v1536 = vpop.f32.mrb[0].mxu0
      %v1537 = vadd.f32 0.0, %v1536
      %v1538 = vpop.f32.mrb[0].mxu0
      %1539 = vdwg.mxu0
      %v1540 = vadd.f32 %v1381, %v1502
      %v1541 = vadd.f32 %v1384, %v1507
      %v1542 = vadd.f32 %v1389, %v1512
      %v1543 = vadd.f32 %v1392, %v1517
      %v1544 = vadd.f32 %v1397, %v1522
      %v1545 = vadd.f32 %v1400, %v1527
      %v1546 = vadd.f32 %v1405, %v1532
      %v1547 = vadd.f32 %v1408, %v1537
      %v1548 = vsel %vm866, %v1540, -inf
      %1549 = vmax.xlane.f32.xlu0 %v1548
      %v1550 = vpop.xlane.xlu0 %1549
      %v1551 = vsel %vm866, %v1541, -inf
      %1552 = vmax.xlane.f32.xlu0 %v1551
      %v1553 = vpop.xlane.xlu0 %1552
      %v1554 = vsel %vm866, %v1542, -inf
      %1555 = vmax.xlane.f32.xlu0 %v1554
      %v1556 = vpop.xlane.xlu0 %1555
      %v1557 = vsel %vm866, %v1543, -inf
      %1558 = vmax.xlane.f32.xlu0 %v1557
      %v1559 = vpop.xlane.xlu0 %1558
      %v1560 = vsel %vm866, %v1544, -inf
      %1561 = vmax.xlane.f32.xlu0 %v1560
      %v1562 = vpop.xlane.xlu0 %1561
      %v1563 = vsel %vm866, %v1545, -inf
      %1564 = vmax.xlane.f32.xlu0 %v1563
      %v1565 = vpop.xlane.xlu0 %1564
      %v1566 = vsel %vm866, %v1546, -inf
      %1567 = vmax.xlane.f32.xlu0 %v1566
      %v1568 = vpop.xlane.xlu0 %1567
      %v1569 = vsel %vm866, %v1547, -inf
      %1570 = vmax.xlane.f32.xlu0 %v1569
      %v1571 = vpop.xlane.xlu0 %1570
      %v1572 = vsub.f32 %v1540, %v1550
      %v1573 = vsub.f32 %v1541, %v1553
      %v1574 = vsub.f32 %v1542, %v1556
      %v1575 = vsub.f32 %v1543, %v1559
      %v1576 = vsub.f32 %v1544, %v1562
      %v1577 = vsub.f32 %v1545, %v1565
      %v1578 = vsub.f32 %v1546, %v1568
      %v1579 = vsub.f32 %v1547, %v1571
      %v1580 = vmul.f32 %v1572, 1.442695
      %v1581 = vpow.pop %v1580
      %v1582 = vmul.f32 %v1573, 1.442695
      %v1583 = vpow.pop %v1582
      %v1584 = vmul.f32 %v1574, 1.442695
      %v1585 = vpow.pop %v1584
      %v1586 = vmul.f32 %v1575, 1.442695
      %v1587 = vpow.pop %v1586
      %v1588 = vmul.f32 %v1576, 1.442695
      %v1589 = vpow.pop %v1588
      %v1590 = vmul.f32 %v1577, 1.442695
      %v1591 = vpow.pop %v1590
      %v1592 = vmul.f32 %v1578, 1.442695
      %v1593 = vpow.pop %v1592
      %v1594 = vmul.f32 %v1579, 1.442695
      %v1595 = vpow.pop %v1594
      %v1596 = vsel %vm866, %v1581, 0.0
      %1597 = vadd.xlane.f32.xlu0 %v1596
      %v1598 = vpop.xlane.xlu0 %1597
      %v1599 = vsel %vm866, %v1583, 0.0
      %1600 = vadd.xlane.f32.xlu0 %v1599
      %v1601 = vpop.xlane.xlu0 %1600
      %v1602 = vsel %vm866, %v1585, 0.0
      %1603 = vadd.xlane.f32.xlu0 %v1602
      %v1604 = vpop.xlane.xlu0 %1603
      %v1605 = vsel %vm866, %v1587, 0.0
      %1606 = vadd.xlane.f32.xlu0 %v1605
      %v1607 = vpop.xlane.xlu0 %1606
      %v1608 = vsel %vm866, %v1589, 0.0
      %1609 = vadd.xlane.f32.xlu0 %v1608
      %v1610 = vpop.xlane.xlu0 %1609
      %v1611 = vsel %vm866, %v1591, 0.0
      %1612 = vadd.xlane.f32.xlu0 %v1611
      %v1613 = vpop.xlane.xlu0 %1612
      %v1614 = vsel %vm866, %v1593, 0.0
      %1615 = vadd.xlane.f32.xlu0 %v1614
      %v1616 = vpop.xlane.xlu0 %1615
      %v1617 = vsel %vm866, %v1595, 0.0
      %1618 = vadd.xlane.f32.xlu0 %v1617
      %v1619 = vpop.xlane.xlu0 %1618
      %v1620 = vrcp.pop %v1598
      %v1621 = vrcp.pop %v1601
      %v1622 = vrcp.pop %v1604
      %v1623 = vrcp.pop %v1607
      %v1624 = vrcp.pop %v1610
      %v1625 = vrcp.pop %v1613
      %v1626 = vrcp.pop %v1616
      %v1627 = vrcp.pop %v1619
      %v1628 = vmul.f32 %v1581, %v1620
      %v1629 = vmul.f32 %v1583, %v1621
      %v1630 = vmul.f32 %v1585, %v1622
      %v1631 = vmul.f32 %v1587, %v1623
      %v1632 = vmul.f32 %v1589, %v1624
      %v1633 = vmul.f32 %v1591, %v1625
      %v1634 = vmul.f32 %v1593, %v1626
      %v1635 = vmul.f32 %v1595, %v1627
      %v1636 = vpack.c.bf16 %v1629, %v1628
      %v1637 = vpack.c.bf16 %v1631, %v1630
      %v1638 = vpack.c.bf16 %v1633, %v1632
      %v1639 = vpack.c.bf16 %v1635, %v1634
      %v1648 = vunpack.c.l.b16 %v444
      %v1649 = vunpack.c.l.b16 %v445
      %v1650 = vunpack.c.l.b16 %v446
      %v1651 = vunpack.c.l.b16 %v447
      %v1652 = vunpack.c.l.b16 %v448
      %v1653 = vunpack.c.l.b16 %v449
      %v1654 = vunpack.c.l.b16 %v450
      %v1655 = vunpack.c.l.b16 %v451
      %v1656 = vpack.c.b16 %v1649, %v1648
      %v1657 = vpack.c.b16 %v1651, %v1650
      %v1658 = vpack.c.b16 %v1653, %v1652
      %v1659 = vpack.c.b16 %v1655, %v1654
      %v1665 = vsel %vm866, %v1636, 0
      %v1668 = vsel %vm866, %v1637, 0
      %v1671 = vsel %vm866, %v1638, 0
      %v1674 = vsel %vm866, %v1639, 0
      %1676 = vmatprep.subr.bf16.mxu0 0
      %1677 = vmatpush1.bf16.msra.mxu0 %v1656
      %1678 = vmatprep.subr.bf16.mxu0 0
      %1679 = vmatpush1.bf16.msra.mxu0 %v1657
      %1680 = vmatprep.subr.bf16.mxu0 0
      %1681 = vmatpush1.bf16.msra.mxu0 %v1658
      %1682 = vmatprep.subr.bf16.mxu0 0
      %1683 = vmatpush1.bf16.msra.mxu0 %v1659
      %1684 = vmatprep.subr.bf16.mxu0 0
      %1685 = vmatpush1.bf16.msra.mxu0 0
      %1686 = vmatprep.subr.bf16.mxu0 0
      %1687 = vmatpush1.bf16.msra.mxu0 0
      %1688 = vmatprep.subr.bf16.mxu0 0
      %1689 = vmatpush1.bf16.msra.mxu0 0
      %1690 = vmatprep.subr.bf16.mxu0 0
      %1691 = vmatpush1.bf16.msra.mxu0 0
      %1692 = vmatprep.subr.bf16.mxu0 0
      %1693 = vmatpush1.bf16.msra.mxu0 0
      %1694 = vmatprep.subr.bf16.mxu0 0
      %1695 = vmatpush1.bf16.msra.mxu0 0
      %1696 = vmatprep.subr.bf16.mxu0 0
      %1697 = vmatpush1.bf16.msra.mxu0 0
      %1698 = vmatprep.subr.bf16.mxu0 0
      %1699 = vmatpush1.bf16.msra.mxu0 0
      %1700 = vmatprep.subr.bf16.mxu0 0
      %1701 = vmatpush1.bf16.msra.mxu0 0
      %1702 = vmatprep.subr.bf16.mxu0 0
      %1703 = vmatpush1.bf16.msra.mxu0 0
      %1704 = vmatprep.subr.bf16.mxu0 0
      %1705 = vmatpush1.bf16.msra.mxu0 0
      %1706 = vmatprep.subr.bf16.mxu0 0
      %1707 = vmatpush1.bf16.msra.mxu0 0
      %1708 = vmatprep.mubr.bf16.mxu0 0
      %1709 = vmatmul.mubr.bf16.gmra.mrb[0].mxu0 %v1665
      %v1710 = vpop.f32.mrb[0].mxu0
      %v1711 = vadd.f32 0.0, %v1710
      %v1712 = vpop.f32.mrb[0].mxu0
      %v1713 = vpop.f32.mrb[0].mxu0
      %v1714 = vadd.f32 0.0, %v1713
      %v1715 = vpop.f32.mrb[0].mxu0
      %1716 = vmatprep.mubr.bf16.mxu0 0
      %1717 = vmatmul.mubr.bf16.gmra.mrb[0].mxu0 %v1668
      %v1718 = vpop.f32.mrb[0].mxu0
      %v1719 = vadd.f32 0.0, %v1718
      %v1720 = vpop.f32.mrb[0].mxu0
      %v1721 = vpop.f32.mrb[0].mxu0
      %v1722 = vadd.f32 0.0, %v1721
      %v1723 = vpop.f32.mrb[0].mxu0
      %1724 = vmatprep.mubr.bf16.mxu0 0
      %1725 = vmatmul.mubr.bf16.gmra.mrb[0].mxu0 %v1671
      %v1726 = vpop.f32.mrb[0].mxu0
      %v1727 = vadd.f32 0.0, %v1726
      %v1728 = vpop.f32.mrb[0].mxu0
      %v1729 = vpop.f32.mrb[0].mxu0
      %v1730 = vadd.f32 0.0, %v1729
      %v1731 = vpop.f32.mrb[0].mxu0
      %1732 = vmatprep.mubr.bf16.mxu0 0
      %1733 = vmatmul.mubr.bf16.gmra.mrb[0].mxu0 %v1674
      %v1734 = vpop.f32.mrb[0].mxu0
      %v1735 = vadd.f32 0.0, %v1734
      %v1736 = vpop.f32.mrb[0].mxu0
      %v1737 = vpop.f32.mrb[0].mxu0
      %v1738 = vadd.f32 0.0, %v1737
      %v1739 = vpop.f32.mrb[0].mxu0
      %1740 = vdwg.mxu0
      %v1741 = vunpack.c.l.bf16 %v487
      %1743 = vset.pattern.permute.xlu0 0
      %1744 = vperm.xlu0 %1743, %v1711
      %v1745 = vpop.permute.xlu0 %1744
      %1748 = vset.pattern.permute.xlu0 0
      %1749 = vperm.xlu0 %1748, %v1714
      %v1750 = vpop.permute.xlu0 %1749
      %1753 = vset.pattern.permute.xlu0 0
      %1754 = vperm.xlu0 %1753, %v1719
      %v1755 = vpop.permute.xlu0 %1754
      %1758 = vset.pattern.permute.xlu0 0
      %1759 = vperm.xlu0 %1758, %v1722
      %v1760 = vpop.permute.xlu0 %1759
      %1763 = vset.pattern.permute.xlu0 0
      %1764 = vperm.xlu0 %1763, %v1727
      %v1765 = vpop.permute.xlu0 %1764
      %1768 = vset.pattern.permute.xlu0 0
      %1769 = vperm.xlu0 %1768, %v1730
      %v1770 = vpop.permute.xlu0 %1769
      %1773 = vset.pattern.permute.xlu0 0
      %1774 = vperm.xlu0 %1773, %v1735
      %v1775 = vpop.permute.xlu0 %1774
      %1778 = vset.pattern.permute.xlu0 0
      %1779 = vperm.xlu0 %1778, %v1738
      %v1780 = vpop.permute.xlu0 %1779
      %v1782 = vlaneseq
      %v1783 = vshrl.u32 %v1782, 7
      %v1784 = vsub.s32 0, %v1783
      %v1785 = vrot.slane %v1741, %v1784
      %v1786 = vmul.f32 %v1745, %v1785
      %v1787 = vmul.f32 %v1750, %v1785
      %v1788 = vmul.f32 %v1755, %v1785
      %v1789 = vmul.f32 %v1760, %v1785
      %v1790 = vmul.f32 %v1765, %v1785
      %v1791 = vmul.f32 %v1770, %v1785
      %v1792 = vmul.f32 %v1775, %v1785
      %v1793 = vmul.f32 %v1780, %v1785
      %v1794 = vadd.f32 %v1165, %v1786
      %v1795 = vadd.f32 %v1166, %v1787
      %v1796 = vadd.f32 %v1167, %v1788
      %v1797 = vadd.f32 %v1168, %v1789
      %v1798 = vadd.f32 %v1169, %v1790
      %v1799 = vadd.f32 %v1170, %v1791
      %v1800 = vadd.f32 %v1171, %v1792
      %v1801 = vadd.f32 %v1172, %v1793
      %1802 = vset.pattern.permute.xlu0 1
      %1803 = vperm.xlu0 %1802, %v1711
      %v1804 = vpop.permute.xlu0 %1803
      %1806 = vset.pattern.permute.xlu0 1
      %1807 = vperm.xlu0 %1806, %v1714
      %v1808 = vpop.permute.xlu0 %1807
      %1810 = vset.pattern.permute.xlu0 1
      %1811 = vperm.xlu0 %1810, %v1719
      %v1812 = vpop.permute.xlu0 %1811
      %1814 = vset.pattern.permute.xlu0 1
      %1815 = vperm.xlu0 %1814, %v1722
      %v1816 = vpop.permute.xlu0 %1815
      %1818 = vset.pattern.permute.xlu0 1
      %1819 = vperm.xlu0 %1818, %v1727
      %v1820 = vpop.permute.xlu0 %1819
      %1822 = vset.pattern.permute.xlu0 1
      %1823 = vperm.xlu0 %1822, %v1730
      %v1824 = vpop.permute.xlu0 %1823
      %1826 = vset.pattern.permute.xlu0 1
      %1827 = vperm.xlu0 %1826, %v1735
      %v1828 = vpop.permute.xlu0 %1827
      %1830 = vset.pattern.permute.xlu0 1
      %1831 = vperm.xlu0 %1830, %v1738
      %v1832 = vpop.permute.xlu0 %1831
      %v1834 = vlaneseq
      %v1835 = vshrl.u32 %v1834, 7
      %v1836 = vsub.s32 1, %v1835
      %v1837 = vrot.slane %v1741, %v1836
      %v1838 = vmul.f32 %v1804, %v1837
      %v1839 = vmul.f32 %v1808, %v1837
      %v1840 = vmul.f32 %v1812, %v1837
      %v1841 = vmul.f32 %v1816, %v1837
      %v1842 = vmul.f32 %v1820, %v1837
      %v1843 = vmul.f32 %v1824, %v1837
      %v1844 = vmul.f32 %v1828, %v1837
      %v1845 = vmul.f32 %v1832, %v1837
      %v1846 = vadd.f32 %v1794, %v1838
      %v1847 = vadd.f32 %v1795, %v1839
      %v1848 = vadd.f32 %v1796, %v1840
      %v1849 = vadd.f32 %v1797, %v1841
      %v1850 = vadd.f32 %v1798, %v1842
      %v1851 = vadd.f32 %v1799, %v1843
      %v1852 = vadd.f32 %v1800, %v1844
      %v1853 = vadd.f32 %v1801, %v1845
      %v1854 = vld [vmem:[%s8] sm:$0x1]
      %v1856 = vlaneseq
      %v1857 = vshrl.u32 %v1856, 7
      %v1858 = vsub.s32 0, %v1857
      %v1859 = vrot.slane %v1854, %v1858
      %v1861 = vadd.f32 %v1846, %v1859
      %v1862 = vadd.f32 %v1847, %v1859
      %v1863 = vadd.f32 %v1848, %v1859
      %v1864 = vadd.f32 %v1849, %v1859
      %v1865 = vadd.f32 %v1850, %v1859
      %v1866 = vadd.f32 %v1851, %v1859
      %v1867 = vadd.f32 %v1852, %v1859
      %v1868 = vadd.f32 %v1853, %v1859
      %v1869 = vmax.f32 %v1861, 0.0
      %v1870 = vmax.f32 %v1862, 0.0
      %v1871 = vmax.f32 %v1863, 0.0
      %v1872 = vmax.f32 %v1864, 0.0
      %v1873 = vmax.f32 %v1865, 0.0
      %v1874 = vmax.f32 %v1866, 0.0
      %v1875 = vmax.f32 %v1867, 0.0
      %v1876 = vmax.f32 %v1868, 0.0
      %vm1877 = vcmask 31744
      %1878 = vst.msk [vmem:[%s412] sm:$0xff] %vm1877, %v1869
      %1879 = vst.msk [vmem:[%s412 + $0x8] sm:$0xff] %vm1877, %v1870
      %1880 = vst.msk [vmem:[%s412 + $0x10] sm:$0xff] %vm1877, %v1871
      %1881 = vst.msk [vmem:[%s412 + $0x18] sm:$0xff] %vm1877, %v1872
      %1882 = vst.msk [vmem:[%s412 + $0x20] sm:$0xff] %vm1877, %v1873
      %1883 = vst.msk [vmem:[%s412 + $0x28] sm:$0xff] %vm1877, %v1874
      %1884 = vst.msk [vmem:[%s412 + $0x30] sm:$0xff] %vm1877, %v1875
      %1885 = vst.msk [vmem:[%s412 + $0x38] sm:$0xff] %vm1877, %v1876
      %p1886 = scmp.lt.s32.totalorder %s20, 1
      %s1887 = scalar_select %p1886, %s20, 1
      %s1888 = smul.addr %s1887, 8
      %s1889 = smul.addr %s1888, 8
      %s1890 = scalar_lea.vmem %s9, %s1889
      // Predicated region
      $region57: #{aa_wide_basic_forward.4} parent=55 // pred_check
        %p1891 = pneg %p252
      $region58: #{aa_wide_basic_forward.4} parent=55 // pred_check_branch
        %1893 = sbr.rel (%p1891) target = $region60
      $region59: #{aa_wide_basic_forward.4} parent=55 // pred_region
        _
      $region60: #{aa_wide_basic_forward.4} parent=55 // pred_fallthru
        _
    $region56: #{aa_wide_basic_forward.4} parent=5 // pred_fallthru
      _
    %p1894 = scmp.le.s32.totalorder 2, %s15
    // Predicated region
    $region61: #{aa_wide_basic_forward.4} parent=5 // pred_check
      %p1895 = pneg %p1894
    $region62: #{aa_wide_basic_forward.4} parent=5 // pred_check_branch
      %1897 = sbr.rel (%p1895) target = $region64
    $region63: #{aa_wide_basic_forward.4} parent=5 // pred_region
      %s1898 = ssub.s32 %s15, 2
      // Predicated region
      $region65: #{aa_wide_basic_forward.4} parent=63 // pred_check
        %p1899 = pneg %p258
      $region66: #{aa_wide_basic_forward.4} parent=63 // pred_check_branch
        %1901 = sbr.rel (%p1899) target = $region68
      $region67: #{aa_wide_basic_forward.4} parent=63 // pred_region
        %p1902 = scmp.lt.s32.totalorder %s21, 1
        %s1903 = scalar_select %p1902, %s21, 1
        %s1904 = smul.addr %s1903, 8
        %s1905 = smul.addr %s1904, 8
        %s1906 = scalar_lea.vmem %s9, %s1905
      $region68: #{aa_wide_basic_forward.4} parent=63 // pred_fallthru
        _
    $region64: #{aa_wide_basic_forward.4} parent=5 // pred_fallthru
      _
  $region6: #{aa_wide_basic_forward.4} parent=0 // loop_footer
    %s19 = sadd.s32 1, %s15
  $region7: #{aa_wide_basic_forward.4} parent=0 // loop_footer_branch
    %14 = sbr.rel target = $region3
  $region8: #{aa_wide_basic_forward.4} parent=0 // loop_exit
    _

// kernel: aa_wide_basic_forward.5
$region0: #{aa_wide_basic_forward.5}
  #allocation0 [shape = 'u32[]', space=smem, size = 0x4, offset = 0x4, fixed_abs, tag = 'smem constant byte address 0x4 - core index']
  #allocation1 [shape = 'u32[144,128]{1,0:T(1,128)}', space=vmem, size = 0x12000, scoped, tag = 'internal scratch']
  %s0 = inlined_call_operand.vmem [shape: bf16[128,368], index: 0, kind: input, shape index: {}]
  %s1 = inlined_call_operand.vmem [shape: bf16[368,40], index: 1, kind: input, shape index: {}]
  %s2 = inlined_call_operand.vmem [shape: f32[1,40], index: 2, kind: input, shape index: {}]
  %s3 = inlined_call_operand.vmem [shape: f32[1,40], index: 3, kind: input, shape index: {}]
  %s4 = inlined_call_operand.hbm [shape: f32[128,40], index: 4, kind: output, shape index: {}]
  %s5 = sld [smem:[#allocation0]]
  $region49: #{aa_wide_basic_forward.5} parent=0
    _
  %s7 = ssub.s32 1, %s5
  %s8 = scalar_select 0, %s7, %s5
  $region1: #{aa_wide_basic_forward.5} parent=0
    #allocation2 [shape = 'u8[65536]{0}', space=vmem, size = 0x10000, scoped, tag = 'output window, operand 0']
    #allocation3 [shape = 's32[2]{0}', space=sflag, size = 0x8, scoped, tag = 'scoped memory for aa_wide_basic_forward.5']
    %9 = vsyncpa [#allocation3], 0
    %s10 = scalar_lea.sflag [#allocation3], 1
    %11 = vsyncpa %s10, 0
    loop: start=0, step=1, limit=4
    $region2: #{aa_wide_basic_forward.5} parent=1 // loop_pre_header
      _
    $region3: #{aa_wide_basic_forward.5} parent=1 // loop_header
      %s13 = sphi 0, %s17
      %p14 = scmp.ge.s32.totalorder %s13, 4
      %s23 = sphi 0, %s25
      %s26 = sphi 0, %s23
      %s27 = sphi 0, %s26
      %s43 = sphi 0, %s27
      %s47 = sphi 0, %s47
      %s49 = sphi 0, %s47
      %s50 = sphi 0, %s49
      %s64 = sphi 0, %s50
      %s68 = sphi 0, %s68
      %s70 = sphi 0, %s68
      %s71 = sphi 0, %s70
      %s85 = sphi 0, %s71
      %s89 = sphi 0, %s89
      %s91 = sphi 0, %s89
      %s92 = sphi 0, %s91
      %s106 = sphi 0, %s92
      %s112 = sphi 0, %s114
      %s115 = sphi 0, %s112
      %s116 = sphi 0, %s115
      %s132 = sphi 0, %s116
    $region4: #{aa_wide_basic_forward.5} parent=1 // loop_header_branch
      %16 = sbr.rel (%p14) target = $region8
    $region5: #{aa_wide_basic_forward.5} parent=1 // loop_body
      %s18 = ssub.s32 %s13, 1
      %s19 = ssub.s32 %s13, 2
      %s20 = sadd.s32 %s13, 1
      %s21 = ssub.s32 %s13, %s20
      %p22 = scmp.eq.s32.totalorder %s21, 0
      %s24 = sadd.s32 %s23, 1
      %s25 = scalar_select %p22, %s23, %s24
      %p28 = pneg %p22
      %p29 = scmp.eq.s32.totalorder %s13, 1
      %p30 = por %p28, %p29
      %p31 = scmp.ne.s32.totalorder %s23, %s26
      %p32 = scmp.eq.s32.totalorder %s13, 0
      %p33 = por %p31, %p32
      %p34 = scmp.ne.s32.totalorder %s23, %s26
      %p35 = scmp.eq.s32.totalorder %s18, 1
      %p36 = por %p34, %p35
      %p37 = scmp.ne.s32.totalorder %s26, %s27
      %p38 = scmp.eq.s32.totalorder %s18, 0
      %p39 = por %p37, %p38
      %p40 = scmp.ne.s32.totalorder %s26, %s27
      %p41 = scmp.eq.s32.totalorder %s19, 1
      %p42 = por %p40, %p41
      %p44 = scmp.ne.s32.totalorder %s27, %s43
      %p45 = scmp.eq.s32.totalorder %s19, 0
      %p46 = por %p44, %p45
      %s48 = sadd.s32 %s47, 1
      %p51 = scmp.eq.s32.totalorder %s13, 1
      %p52 = scmp.ne.s32.totalorder %s47, %s49
      %p53 = scmp.eq.s32.totalorder %s13, 0
      %p54 = por %p52, %p53
      %p55 = scmp.ne.s32.totalorder %s47, %s49
      %p56 = scmp.eq.s32.totalorder %s18, 1
      %p57 = por %p55, %p56
      %p58 = scmp.ne.s32.totalorder %s49, %s50
      %p59 = scmp.eq.s32.totalorder %s18, 0
      %p60 = por %p58, %p59
      %p61 = scmp.ne.s32.totalorder %s49, %s50
      %p62 = scmp.eq.s32.totalorder %s19, 1
      %p63 = por %p61, %p62
      %p65 = scmp.ne.s32.totalorder %s50, %s64
      %p66 = scmp.eq.s32.totalorder %s19, 0
      %p67 = por %p65, %p66
      %s69 = sadd.s32 %s68, 1
      %p72 = scmp.eq.s32.totalorder %s13, 1
      %p73 = scmp.ne.s32.totalorder %s68, %s70
      %p74 = scmp.eq.s32.totalorder %s13, 0
      %p75 = por %p73, %p74
      %p76 = scmp.ne.s32.totalorder %s68, %s70
      %p77 = scmp.eq.s32.totalorder %s18, 1
      %p78 = por %p76, %p77
      %p79 = scmp.ne.s32.totalorder %s70, %s71
      %p80 = scmp.eq.s32.totalorder %s18, 0
      %p81 = por %p79, %p80
      %p82 = scmp.ne.s32.totalorder %s70, %s71
      %p83 = scmp.eq.s32.totalorder %s19, 1
      %p84 = por %p82, %p83
      %p86 = scmp.ne.s32.totalorder %s71, %s85
      %p87 = scmp.eq.s32.totalorder %s19, 0
      %p88 = por %p86, %p87
      %s90 = sadd.s32 %s89, 1
      %p93 = scmp.eq.s32.totalorder %s13, 1
      %p94 = scmp.ne.s32.totalorder %s89, %s91
      %p95 = scmp.eq.s32.totalorder %s13, 0
      %p96 = por %p94, %p95
      %p97 = scmp.ne.s32.totalorder %s89, %s91
      %p98 = scmp.eq.s32.totalorder %s18, 1
      %p99 = por %p97, %p98
      %p100 = scmp.ne.s32.totalorder %s91, %s92
      %p101 = scmp.eq.s32.totalorder %s18, 0
      %p102 = por %p100, %p101
      %p103 = scmp.ne.s32.totalorder %s91, %s92
      %p104 = scmp.eq.s32.totalorder %s19, 1
      %p105 = por %p103, %p104
      %p107 = scmp.ne.s32.totalorder %s92, %s106
      %p108 = scmp.eq.s32.totalorder %s19, 0
      %p109 = por %p107, %p108
      %s110 = ssub.s32 %s13, %s20
      %p111 = scmp.eq.s32.totalorder %s110, 0
      %s113 = sadd.s32 %s112, 1
      %s114 = scalar_select %p111, %s112, %s113
      %p117 = pneg %p111
      %p118 = scmp.eq.s32.totalorder %s13, 1
      %p119 = por %p117, %p118
      %p120 = scmp.ne.s32.totalorder %s112, %s115
      %p121 = scmp.eq.s32.totalorder %s13, 0
      %p122 = por %p120, %p121
      %p123 = scmp.ne.s32.totalorder %s112, %s115
      %p124 = scmp.eq.s32.totalorder %s18, 1
      %p125 = por %p123, %p124
      %p126 = scmp.ne.s32.totalorder %s115, %s116
      %p127 = scmp.eq.s32.totalorder %s18, 0
      %p128 = por %p126, %p127
      %p129 = scmp.ne.s32.totalorder %s115, %s116
      %p130 = scmp.eq.s32.totalorder %s19, 1
      %p131 = por %p129, %p130
      %p133 = scmp.ne.s32.totalorder %s116, %s132
      %p134 = scmp.eq.s32.totalorder %s19, 0
      %p135 = por %p133, %p134
      %p136 = scmp.le.s32.totalorder 1, %s13
      %p137 = scmp.lt.s32.totalorder %s13, 3
      %p138 = pnand %p136, %p137
      %p139 = pneg %p138
      // Predicated region
      $region9: #{aa_wide_basic_forward.5} parent=5 // pred_check
        _
      $region10: #{aa_wide_basic_forward.5} parent=5 // pred_check_branch
        %141 = sbr.rel (%p138) target = $region12
      $region11: #{aa_wide_basic_forward.5} parent=5 // pred_region
        %s142 = ssub.s32 %s13, 1
        // Predicated region
        $region13: #{aa_wide_basic_forward.5} parent=11 // pred_check
          %p143 = pneg %p60
        $region14: #{aa_wide_basic_forward.5} parent=11 // pred_check_branch
          %145 = sbr.rel (%p143) target = $region16
        $region15: #{aa_wide_basic_forward.5} parent=11 // pred_region
          _
        $region16: #{aa_wide_basic_forward.5} parent=11 // pred_fallthru
          _
        // Predicated region
        $region17: #{aa_wide_basic_forward.5} parent=11 // pred_check
          %p146 = pneg %p81
        $region18: #{aa_wide_basic_forward.5} parent=11 // pred_check_branch
          %148 = sbr.rel (%p146) target = $region20
        $region19: #{aa_wide_basic_forward.5} parent=11 // pred_region
          _
        $region20: #{aa_wide_basic_forward.5} parent=11 // pred_fallthru
          _
        // Predicated region
        $region21: #{aa_wide_basic_forward.5} parent=11 // pred_check
          %p149 = pneg %p102
        $region22: #{aa_wide_basic_forward.5} parent=11 // pred_check_branch
          %151 = sbr.rel (%p149) target = $region24
        $region23: #{aa_wide_basic_forward.5} parent=11 // pred_region
          _
        $region24: #{aa_wide_basic_forward.5} parent=11 // pred_fallthru
          _
      $region12: #{aa_wide_basic_forward.5} parent=5 // pred_fallthru
        _
      %p152 = scmp.lt.s32.totalorder %s13, 2
      // Predicated region
      $region25: #{aa_wide_basic_forward.5} parent=5 // pred_check
        %p153 = pneg %p152
      $region26: #{aa_wide_basic_forward.5} parent=5 // pred_check_branch
        %155 = sbr.rel (%p153) target = $region28
      $region27: #{aa_wide_basic_forward.5} parent=5 // pred_region
        // Predicated region
        $region29: #{aa_wide_basic_forward.5} parent=27 // pred_check
          %p156 = pneg %p33
        $region30: #{aa_wide_basic_forward.5} parent=27 // pred_check_branch
          %158 = sbr.rel (%p156) target = $region32
        $region31: #{aa_wide_basic_forward.5} parent=27 // pred_region
          %s159 = smul.u32 8, %s13
          %p160 = scmp.lt.s32.totalorder %s159, 15
          %s161 = scalar_select %p160, %s159, 15
          %s162 = smul.addr %s161, 3
          %s163 = smul.addr %s162, 4
          %s164 = scalar_lea.vmem %s0, %s163
          %s165 = smul.u32 8, %s13
        $region32: #{aa_wide_basic_forward.5} parent=27 // pred_fallthru
          _
      $region28: #{aa_wide_basic_forward.5} parent=5 // pred_fallthru
        _
      %p166 = scmp.le.s32.totalorder 1, %s13
      %p167 = scmp.lt.s32.totalorder %s13, 3
      %p168 = pnand %p166, %p167
      %p169 = pneg %p168
      // Predicated region
      $region33: #{aa_wide_basic_forward.5} parent=5 // pred_check
        _
      $region34: #{aa_wide_basic_forward.5} parent=5 // pred_check_branch
        %171 = sbr.rel (%p168) target = $region36
      $region35: #{aa_wide_basic_forward.5} parent=5 // pred_region
        %s172 = ssub.s32 %s13, 1
        %s173 = smul.u32 8, %s18
        %p174 = scmp.lt.s32.totalorder %s173, 15
        %s175 = scalar_select %p174, %s173, 15
        %s176 = smul.addr %s175, 3
        %s177 = smul.addr %s176, 4
        %s178 = scalar_lea.vmem %s0, %s177
        %p179 = pneg %p39
        %p180 = pneg %p36
        %p181 = pneg %p60
        %p182 = pneg %p57
        %p183 = pneg %p81
        %p184 = pneg %p78
        %p185 = pneg %p102
        %p186 = pneg %p99
        %p187 = pneg %p128
        %p188 = pneg %p125
        %s189 = sand.u32 %s115, 1
        %s190 = scalar_lea.sflag [#allocation3], %s189
        %s191 = sand.u32 %s115, 1
        %s192 = smul.addr %s191, 64
        %s193 = scalar_lea.vmem [#allocation2], %s192
        %s194 = smul.u32 8, %s18
        %p195 = scmp.lt.s32.totalorder %s194, 15
        %s196 = scalar_select %p195, %s194, 15
        %s197 = smul.addr %s196, 3
        %s198 = smul.addr %s197, 4
        %s199 = scalar_lea.vmem %s0, %s198
        %s200 = smul.u32 8, %s18
        %s201 = smul.u32 8, %s18
        %v203 = vld [vmem:[%s199] sm:$0xff]
        %v204 = vld [vmem:[%s199 + $0x8] sm:$0xf]
        %v205 = vld [vmem:[%s199 + $0xc] sm:$0xff]
        %v206 = vld [vmem:[%s199 + $0x14] sm:$0xf]
        %v207 = vld [vmem:[%s199 + $0x18] sm:$0xff]
        %v208 = vld [vmem:[%s199 + $0x20] sm:$0xf]
        %v209 = vld [vmem:[%s199 + $0x24] sm:$0xff]
        %v210 = vld [vmem:[%s199 + $0x2c] sm:$0xf]
        %v211 = vld [vmem:[%s199 + $0x30] sm:$0xff]
        %v212 = vld [vmem:[%s199 + $0x38] sm:$0xf]
        %v213 = vld [vmem:[%s199 + $0x3c] sm:$0xff]
        %v214 = vld [vmem:[%s199 + $0x44] sm:$0xf]
        %v215 = vld [vmem:[%s199 + $0x48] sm:$0xff]
        %v216 = vld [vmem:[%s199 + $0x50] sm:$0xf]
        %v217 = vld [vmem:[%s199 + $0x54] sm:$0xff]
        %v218 = vld [vmem:[%s199 + $0x5c] sm:$0xf]
        %v219 = vld [vmem:[%s1] sm:$0xf]
        %v220 = vld [vmem:[%s1 + $0x4] sm:$0xf]
        %v221 = vld [vmem:[%s1 + $0x8] sm:$0xf]
        %v222 = vld [vmem:[%s1 + $0xc] sm:$0xf]
        %v223 = vld [vmem:[%s1 + $0x10] sm:$0xf]
        %v224 = vld [vmem:[%s1 + $0x14] sm:$0xf]
        %v225 = vld [vmem:[%s1 + $0x18] sm:$0xf]
        %v226 = vld [vmem:[%s1 + $0x1c] sm:$0xf]
        %v227 = vld [vmem:[%s1 + $0x20] sm:$0xf]
        %v228 = vld [vmem:[%s1 + $0x24] sm:$0xf]
        %v229 = vld [vmem:[%s1 + $0x28] sm:$0xf]
        %v230 = vld [vmem:[%s1 + $0x2c] sm:$0xf]
        %v231 = vld [vmem:[%s1 + $0x30] sm:$0xf]
        %v232 = vld [vmem:[%s1 + $0x34] sm:$0xf]
        %v233 = vld [vmem:[%s1 + $0x38] sm:$0xf]
        %v234 = vld [vmem:[%s1 + $0x3c] sm:$0xf]
        %v235 = vld [vmem:[%s1 + $0x40] sm:$0xf]
        %v236 = vld [vmem:[%s1 + $0x44] sm:$0xf]
        %v237 = vld [vmem:[%s1 + $0x48] sm:$0xf]
        %v238 = vld [vmem:[%s1 + $0x4c] sm:$0xf]
        %v239 = vld [vmem:[%s1 + $0x50] sm:$0xf]
        %v240 = vld [vmem:[%s1 + $0x54] sm:$0xf]
        %v241 = vld [vmem:[%s1 + $0x58] sm:$0xf]
        %v242 = vld [vmem:[%s1 + $0x5c] sm:$0xf]
        %v243 = vld [vmem:[%s1 + $0x60] sm:$0xf]
        %v244 = vld [vmem:[%s1 + $0x64] sm:$0xf]
        %v245 = vld [vmem:[%s1 + $0x68] sm:$0xf]
        %v246 = vld [vmem:[%s1 + $0x6c] sm:$0xf]
        %v247 = vld [vmem:[%s1 + $0x70] sm:$0xf]
        %v248 = vld [vmem:[%s1 + $0x74] sm:$0xf]
        %v249 = vld [vmem:[%s1 + $0x78] sm:$0xf]
        %v250 = vld [vmem:[%s1 + $0x7c] sm:$0xf]
        %v251 = vld [vmem:[%s1 + $0x80] sm:$0xf]
        %v252 = vld [vmem:[%s1 + $0x84] sm:$0xf]
        %v253 = vld [vmem:[%s1 + $0x88] sm:$0xf]
        %v254 = vld [vmem:[%s1 + $0x8c] sm:$0xf]
        %v255 = vld [vmem:[%s1 + $0x90] sm:$0xf]
        %v256 = vld [vmem:[%s1 + $0x94] sm:$0xf]
        %v257 = vld [vmem:[%s1 + $0x98] sm:$0xf]
        %v258 = vld [vmem:[%s1 + $0x9c] sm:$0xf]
        %v259 = vld [vmem:[%s1 + $0xa0] sm:$0xf]
        %v260 = vld [vmem:[%s1 + $0xa4] sm:$0xf]
        %v261 = vld [vmem:[%s1 + $0xa8] sm:$0xf]
        %v262 = vld [vmem:[%s1 + $0xac] sm:$0xf]
        %v263 = vld [vmem:[%s1 + $0xb0] sm:$0xf]
        %v264 = vld [vmem:[%s1 + $0xb4] sm:$0xf]
        %v265 = vld [vmem:[%s2] sm:$0x1]
        %v267 = vlaneseq
        %v268 = vshrl.u32 %v267, 7
        %v269 = vsub.s32 0, %v268
        %v270 = vrot.slane %v265, %v269
        %v288 = vunpack.c.l.b16 %v203
        %v289 = vunpack.c.h.b16 %v203
        %v290 = vunpack.c.l.b16 %v204
        %v291 = vunpack.c.l.b16 %v205
        %v292 = vunpack.c.h.b16 %v205
        %v293 = vunpack.c.l.b16 %v206
        %v294 = vunpack.c.l.b16 %v207
        %v295 = vunpack.c.h.b16 %v207
        %v296 = vunpack.c.l.b16 %v208
        %v297 = vunpack.c.l.b16 %v209
        %v298 = vunpack.c.h.b16 %v209
        %v299 = vunpack.c.l.b16 %v210
        %v300 = vunpack.c.l.b16 %v211
        %v301 = vunpack.c.h.b16 %v211
        %v302 = vunpack.c.l.b16 %v212
        %v303 = vunpack.c.l.b16 %v213
        %v304 = vunpack.c.h.b16 %v213
        %v305 = vunpack.c.l.b16 %v214
        %v306 = vunpack.c.l.b16 %v215
        %v307 = vunpack.c.h.b16 %v215
        %v308 = vunpack.c.l.b16 %v216
        %v309 = vunpack.c.l.b16 %v217
        %v310 = vunpack.c.h.b16 %v217
        %v311 = vunpack.c.l.b16 %v218
        %v312 = vpack.c.b16 %v291, %v288
        %v313 = vpack.c.b16 %v292, %v289
        %v314 = vpack.c.b16 %v293, %v290
        %v315 = vpack.c.b16 %v297, %v294
        %v316 = vpack.c.b16 %v298, %v295
        %v317 = vpack.c.b16 %v299, %v296
        %v318 = vpack.c.b16 %v303, %v300
        %v319 = vpack.c.b16 %v304, %v301
        %v320 = vpack.c.b16 %v305, %v302
        %v321 = vpack.c.b16 %v309, %v306
        %v322 = vpack.c.b16 %v310, %v307
        %v323 = vpack.c.b16 %v311, %v308
        %v378 = vunpack.c.l.b16 %v219
        %v379 = vunpack.c.l.b16 %v220
        %v380 = vunpack.c.l.b16 %v221
        %v381 = vunpack.c.l.b16 %v222
        %v382 = vunpack.c.l.b16 %v223
        %v383 = vunpack.c.l.b16 %v224
        %v384 = vunpack.c.l.b16 %v225
        %v385 = vunpack.c.l.b16 %v226
        %v386 = vunpack.c.l.b16 %v227
        %v387 = vunpack.c.l.b16 %v228
        %v388 = vunpack.c.l.b16 %v229
        %v389 = vunpack.c.l.b16 %v230
        %v390 = vunpack.c.l.b16 %v231
        %v391 = vunpack.c.l.b16 %v232
        %v392 = vunpack.c.l.b16 %v233
        %v393 = vunpack.c.l.b16 %v234
        %v394 = vunpack.c.l.b16 %v235
        %v395 = vunpack.c.l.b16 %v236
        %v396 = vunpack.c.l.b16 %v237
        %v397 = vunpack.c.l.b16 %v238
        %v398 = vunpack.c.l.b16 %v239
        %v399 = vunpack.c.l.b16 %v240
        %v400 = vunpack.c.l.b16 %v241
        %v401 = vunpack.c.l.b16 %v242
        %v402 = vunpack.c.l.b16 %v243
        %v403 = vunpack.c.l.b16 %v244
        %v404 = vunpack.c.l.b16 %v245
        %v405 = vunpack.c.l.b16 %v246
        %v406 = vunpack.c.l.b16 %v247
        %v407 = vunpack.c.l.b16 %v248
        %v408 = vunpack.c.l.b16 %v249
        %v409 = vunpack.c.l.b16 %v250
        %v410 = vunpack.c.l.b16 %v251
        %v411 = vunpack.c.l.b16 %v252
        %v412 = vunpack.c.l.b16 %v253
        %v413 = vunpack.c.l.b16 %v254
        %v414 = vunpack.c.l.b16 %v255
        %v415 = vunpack.c.l.b16 %v256
        %v416 = vunpack.c.l.b16 %v257
        %v417 = vunpack.c.l.b16 %v258
        %v418 = vunpack.c.l.b16 %v259
        %v419 = vunpack.c.l.b16 %v260
        %v420 = vunpack.c.l.b16 %v261
        %v421 = vunpack.c.l.b16 %v262
        %v422 = vunpack.c.l.b16 %v263
        %v423 = vunpack.c.l.b16 %v264
        %v424 = vpack.c.b16 %v379, %v378
        %v425 = vpack.c.b16 %v381, %v380
        %v426 = vpack.c.b16 %v383, %v382
        %v427 = vpack.c.b16 %v385, %v384
        %v428 = vpack.c.b16 %v387, %v386
        %v429 = vpack.c.b16 %v389, %v388
        %v430 = vpack.c.b16 %v391, %v390
        %v431 = vpack.c.b16 %v393, %v392
        %v432 = vpack.c.b16 %v395, %v394
        %v433 = vpack.c.b16 %v397, %v396
        %v434 = vpack.c.b16 %v399, %v398
        %v435 = vpack.c.b16 %v401, %v400
        %v436 = vpack.c.b16 %v403, %v402
        %v437 = vpack.c.b16 %v405, %v404
        %v438 = vpack.c.b16 %v407, %v406
        %v439 = vpack.c.b16 %v409, %v408
        %v440 = vpack.c.b16 %v411, %v410
        %v441 = vpack.c.b16 %v413, %v412
        %v442 = vpack.c.b16 %v415, %v414
        %v443 = vpack.c.b16 %v417, %v416
        %v444 = vpack.c.b16 %v419, %v418
        %v445 = vpack.c.b16 %v421, %v420
        %v446 = vpack.c.b16 %v423, %v422
        %vm470 = vcmask 916480
        %v472 = vsel %vm470, %v314, 0
        %v475 = vsel %vm470, %v317, 0
        %v478 = vsel %vm470, %v320, 0
        %v481 = vsel %vm470, %v323, 0
        %483 = vmatprep.subr.bf16.mxu0 0
        %484 = vmatpush1.bf16.msra.mxu0 %v424
        %485 = vmatprep.subr.bf16.mxu0 0
        %486 = vmatpush1.bf16.msra.mxu0 %v425
        %487 = vmatprep.subr.bf16.mxu0 0
        %488 = vmatpush1.bf16.msra.mxu0 %v426
        %489 = vmatprep.subr.bf16.mxu0 0
        %490 = vmatpush1.bf16.msra.mxu0 %v427
        %491 = vmatprep.subr.bf16.mxu0 0
        %492 = vmatpush1.bf16.msra.mxu0 %v428
        %493 = vmatprep.subr.bf16.mxu0 0
        %494 = vmatpush1.bf16.msra.mxu0 %v429
        %495 = vmatprep.subr.bf16.mxu0 0
        %496 = vmatpush1.bf16.msra.mxu0 %v430
        %497 = vmatprep.subr.bf16.mxu0 0
        %498 = vmatpush1.bf16.msra.mxu0 %v431
        %499 = vmatprep.subr.bf16.mxu0 0
        %500 = vmatpush1.bf16.msra.mxu0 %v432
        %501 = vmatprep.subr.bf16.mxu0 0
        %502 = vmatpush1.bf16.msra.mxu0 %v433
        %503 = vmatprep.subr.bf16.mxu0 0
        %504 = vmatpush1.bf16.msra.mxu0 %v434
        %505 = vmatprep.subr.bf16.mxu0 0
        %506 = vmatpush1.bf16.msra.mxu0 %v435
        %507 = vmatprep.subr.bf16.mxu0 0
        %508 = vmatpush1.bf16.msra.mxu0 %v436
        %509 = vmatprep.subr.bf16.mxu0 0
        %510 = vmatpush1.bf16.msra.mxu0 %v437
        %511 = vmatprep.subr.bf16.mxu0 0
        %512 = vmatpush1.bf16.msra.mxu0 %v438
        %513 = vmatprep.subr.bf16.mxu0 0
        %514 = vmatpush1.bf16.msra.mxu0 %v439
        %515 = vmatprep.mubr.bf16.mxu0 %v313
        %516 = vmatmul.mubr.bf16.gmra.mrb[0].mxu0 %v312
        %v517 = vpop.f32.mrb[0].mxu0
        %v518 = vadd.f32 %v270, %v517
        %v519 = vpop.f32.mrb[0].mxu0
        %v520 = vpop.f32.mrb[0].mxu0
        %v521 = vadd.f32 %v270, %v520
        %v522 = vpop.f32.mrb[0].mxu0
        %523 = vmatprep.mubr.bf16.mxu0 %v316
        %524 = vmatmul.mubr.bf16.gmra.mrb[0].mxu0 %v315
        %v525 = vpop.f32.mrb[0].mxu0
        %v526 = vadd.f32 %v270, %v525
        %v527 = vpop.f32.mrb[0].mxu0
        %v528 = vpop.f32.mrb[0].mxu0
        %v529 = vadd.f32 %v270, %v528
        %v530 = vpop.f32.mrb[0].mxu0
        %531 = vmatprep.mubr.bf16.mxu0 %v319
        %532 = vmatmul.mubr.bf16.gmra.mrb[0].mxu0 %v318
        %v533 = vpop.f32.mrb[0].mxu0
        %v534 = vadd.f32 %v270, %v533
        %v535 = vpop.f32.mrb[0].mxu0
        %v536 = vpop.f32.mrb[0].mxu0
        %v537 = vadd.f32 %v270, %v536
        %v538 = vpop.f32.mrb[0].mxu0
        %539 = vmatprep.mubr.bf16.mxu0 %v322
        %540 = vmatmul.mubr.bf16.gmra.mrb[0].mxu0 %v321
        %v541 = vpop.f32.mrb[0].mxu0
        %v542 = vadd.f32 %v270, %v541
        %v543 = vpop.f32.mrb[0].mxu0
        %v544 = vpop.f32.mrb[0].mxu0
        %v545 = vadd.f32 %v270, %v544
        %v546 = vpop.f32.mrb[0].mxu0
        %547 = vdwg.mxu0
        %548 = vmatprep.subr.bf16.mxu0 0
        %549 = vmatpush1.bf16.msra.mxu0 %v440
        %550 = vmatprep.subr.bf16.mxu0 0
        %551 = vmatpush1.bf16.msra.mxu0 %v441
        %552 = vmatprep.subr.bf16.mxu0 0
        %553 = vmatpush1.bf16.msra.mxu0 %v442
        %554 = vmatprep.subr.bf16.mxu0 0
        %555 = vmatpush1.bf16.msra.mxu0 %v443
        %556 = vmatprep.subr.bf16.mxu0 0
        %557 = vmatpush1.bf16.msra.mxu0 %v444
        %558 = vmatprep.subr.bf16.mxu0 0
        %559 = vmatpush1.bf16.msra.mxu0 %v445
        %560 = vmatprep.subr.bf16.mxu0 0
        %561 = vmatpush1.bf16.msra.mxu0 %v446
        %562 = vmatprep.subr.bf16.mxu0 0
        %563 = vmatpush1.bf16.msra.mxu0 0
        %564 = vmatprep.subr.bf16.mxu0 0
        %565 = vmatpush1.bf16.msra.mxu0 0
        %566 = vmatprep.subr.bf16.mxu0 0
        %567 = vmatpush1.bf16.msra.mxu0 0
        %568 = vmatprep.subr.bf16.mxu0 0
        %569 = vmatpush1.bf16.msra.mxu0 0
        %570 = vmatprep.subr.bf16.mxu0 0
        %571 = vmatpush1.bf16.msra.mxu0 0
        %572 = vmatprep.subr.bf16.mxu0 0
        %573 = vmatpush1.bf16.msra.mxu0 0
        %574 = vmatprep.subr.bf16.mxu0 0
        %575 = vmatpush1.bf16.msra.mxu0 0
        %576 = vmatprep.subr.bf16.mxu0 0
        %577 = vmatpush1.bf16.msra.mxu0 0
        %578 = vmatprep.subr.bf16.mxu0 0
        %579 = vmatpush1.bf16.msra.mxu0 0
        %580 = vmatprep.mubr.bf16.mxu0 0
        %581 = vmatmul.mubr.bf16.gmra.mrb[0].mxu0 %v472
        %v582 = vpop.f32.mrb[0].mxu0
        %v583 = vadd.f32 %v518, %v582
        %v584 = vpop.f32.mrb[0].mxu0
        %v585 = vpop.f32.mrb[0].mxu0
        %v586 = vadd.f32 %v521, %v585
        %v587 = vpop.f32.mrb[0].mxu0
        %588 = vmatprep.mubr.bf16.mxu0 0
        %589 = vmatmul.mubr.bf16.gmra.mrb[0].mxu0 %v475
        %v590 = vpop.f32.mrb[0].mxu0
        %v591 = vadd.f32 %v526, %v590
        %v592 = vpop.f32.mrb[0].mxu0
        %v593 = vpop.f32.mrb[0].mxu0
        %v594 = vadd.f32 %v529, %v593
        %v595 = vpop.f32.mrb[0].mxu0
        %596 = vmatprep.mubr.bf16.mxu0 0
        %597 = vmatmul.mubr.bf16.gmra.mrb[0].mxu0 %v478
        %v598 = vpop.f32.mrb[0].mxu0
        %v599 = vadd.f32 %v534, %v598
        %v600 = vpop.f32.mrb[0].mxu0
        %v601 = vpop.f32.mrb[0].mxu0
        %v602 = vadd.f32 %v537, %v601
        %v603 = vpop.f32.mrb[0].mxu0
        %604 = vmatprep.mubr.bf16.mxu0 0
        %605 = vmatmul.mubr.bf16.gmra.mrb[0].mxu0 %v481
        %v606 = vpop.f32.mrb[0].mxu0
        %v607 = vadd.f32 %v542, %v606
        %v608 = vpop.f32.mrb[0].mxu0
        %v609 = vpop.f32.mrb[0].mxu0
        %v610 = vadd.f32 %v545, %v609
        %v611 = vpop.f32.mrb[0].mxu0
        %612 = vdwg.mxu0
        %v613 = vld [vmem:[%s3] sm:$0x1]
        %v615 = vlaneseq
        %v616 = vshrl.u32 %v615, 7
        %v617 = vsub.s32 0, %v616
        %v618 = vrot.slane %v613, %v617
        %v620 = vmax.f32 %v583, %v618
        %v621 = vmax.f32 %v586, %v618
        %v622 = vmax.f32 %v591, %v618
        %v623 = vmax.f32 %v594, %v618
        %v624 = vmax.f32 %v599, %v618
        %v625 = vmax.f32 %v602, %v618
        %v626 = vmax.f32 %v607, %v618
        %v627 = vmax.f32 %v610, %v618
        %vm628 = vcmask 326656
        %629 = vst.msk [vmem:[%s193] sm:$0xff] %vm628, %v620
        %630 = vst.msk [vmem:[%s193 + $0x8] sm:$0xff] %vm628, %v621
        %631 = vst.msk [vmem:[%s193 + $0x10] sm:$0xff] %vm628, %v622
        %632 = vst.msk [vmem:[%s193 + $0x18] sm:$0xff] %vm628, %v623
        %633 = vst.msk [vmem:[%s193 + $0x20] sm:$0xff] %vm628, %v624
        %634 = vst.msk [vmem:[%s193 + $0x28] sm:$0xff] %vm628, %v625
        %635 = vst.msk [vmem:[%s193 + $0x30] sm:$0xff] %vm628, %v626
        %636 = vst.msk [vmem:[%s193 + $0x38] sm:$0xff] %vm628, %v627
        %s637 = sand.u32 %s115, 1
        %s638 = scalar_lea.sflag [#allocation3], %s637
        %s639 = sand.u32 %s115, 1
        %s640 = smul.addr %s639, 64
        %s641 = scalar_lea.vmem [#allocation2], %s640
        // Predicated region
        $region37: #{aa_wide_basic_forward.5} parent=35 // pred_check
          %p642 = pneg %p125
        $region38: #{aa_wide_basic_forward.5} parent=35 // pred_check_branch
          %644 = sbr.rel (%p642) target = $region40
        $region39: #{aa_wide_basic_forward.5} parent=35 // pred_region
          %s645 = smul.u32 8, %s18
          %s647 = ssub.s32 1024, 1024
          %648 = vsyncadd %s638, %s647
          %s649 = smul.addr %s645, 128
          %s650 = scalar_lea.hbm %s4, %s649
          %s651 = sshll.u32 %s641, 4
          %s652 = int_to_ptr.vmem [resolvable:$true] %s651
          %657 = dma.vmem_to_hbm [thread:$0]  %s652, 1024, %s650, %s638, 128, 128, 8
        $region40: #{aa_wide_basic_forward.5} parent=35 // pred_fallthru
          _
      $region36: #{aa_wide_basic_forward.5} parent=5 // pred_fallthru
        _
      %p658 = scmp.le.s32.totalorder 2, %s13
      // Predicated region
      $region41: #{aa_wide_basic_forward.5} parent=5 // pred_check
        %p659 = pneg %p658
      $region42: #{aa_wide_basic_forward.5} parent=5 // pred_check_branch
        %661 = sbr.rel (%p659) target = $region44
      $region43: #{aa_wide_basic_forward.5} parent=5 // pred_region
        %s662 = ssub.s32 %s13, 2
        // Predicated region
        $region45: #{aa_wide_basic_forward.5} parent=43 // pred_check
          %p663 = pneg %p131
        $region46: #{aa_wide_basic_forward.5} parent=43 // pred_check_branch
          %665 = sbr.rel (%p663) target = $region48
        $region47: #{aa_wide_basic_forward.5} parent=43 // pred_region
          %s666 = sand.u32 %s116, 1
          %s667 = scalar_lea.sflag [#allocation3], %s666
          %s668 = sand.u32 %s116, 1
          %s669 = smul.addr %s668, 64
          %s670 = scalar_lea.vmem [#allocation2], %s669
          %671 = dma.done %s667, 1024
        $region48: #{aa_wide_basic_forward.5} parent=43 // pred_fallthru
          _
      $region44: #{aa_wide_basic_forward.5} parent=5 // pred_fallthru
        _
    $region6: #{aa_wide_basic_forward.5} parent=1 // loop_footer
      %s17 = sadd.s32 1, %s13
    $region7: #{aa_wide_basic_forward.5} parent=1 // loop_footer_branch
      %12 = sbr.rel target = $region3
    $region8: #{aa_wide_basic_forward.5} parent=1 // loop_exit
      _
    %672 = vsyncpa [#allocation3], 1
    %s673 = scalar_lea.sflag [#allocation3], 1
    %674 = vsyncpa %s673, 1

</llo_original>
